<compile_context>
chip_gen: v7x
topology: tpu7x:2x2x1
jax: 0.10.0
libtpu: 0.0.40
codegen_flags: <defaults>
</compile_context>

<pallas_src>
import functools
import math

import jax
import jax.numpy as jnp
from jax.experimental import pallas as pl
from jax.experimental.pallas import tpu as pltpu

MATMUL_DTYPE = jnp.bfloat16   # MXU operand dtype; accumulation & elementwise math stay fp32.
NEG_BIG = -1e30               # softmax mask fill (exp underflows to exactly 0 after max-sub)


def _vmem_budget_and_tile(n):
    """Per-generation VMEM limit and query-tile size (v7x has 64 MiB/TC, v5e/v6e 128 MiB)."""
    try:
        cap = int(pltpu.get_tpu_info().vmem_capacity_bytes)
    except Exception:
        cap = 128 * 1024 * 1024
    if cap <= 64 * 1024 * 1024:          # v7x-class: leave headroom for double buffers/scratch
        limit, ti_cap = 48 * 1024 * 1024, 32
    else:                                 # v5e / v6e
        limit, ti_cap = 64 * 1024 * 1024, 64
    ti = n if n <= ti_cap else ti_cap
    return limit, ti


# ----------------------------- masked fused linear (node projections) -----------------------------

def _masked_linear_kernel(x_ref, w_ref, b_ref, m_ref, o_ref):
    y = jnp.dot(x_ref[...].astype(w_ref.dtype), w_ref[...],
                preferred_element_type=jnp.float32) + b_ref[...]
    o_ref[...] = (y * m_ref[...]).astype(o_ref.dtype)


def pallas_masked_linear(x, w, b, row_mask, *, tile_rows=512):
    """y = (x @ w + b) * row_mask, tiled over rows.

    Rows are independent and the output is row-tiled, so an uneven last tile is safe:
    out-of-bounds rows read garbage but their writes are dropped by Pallas (stated assumption).
    """
    K = x.shape[-1]
    N = w.shape[1]
    lead = x.shape[:-1]
    x2 = x.reshape(-1, K)
    M = x2.shape[0]
    tm = M if M <= tile_rows else tile_rows
    grid = (pl.cdiv(M, tm),)
    out = pl.pallas_call(
        _masked_linear_kernel,
        out_shape=jax.ShapeDtypeStruct((M, N), jnp.float32),
        grid=grid,
        in_specs=[
            pl.BlockSpec((tm, K), lambda i: (i, 0)),
            pl.BlockSpec((K, N), lambda i: (0, 0)),
            pl.BlockSpec((1, N), lambda i: (0, 0)),
            pl.BlockSpec((tm, 1), lambda i: (i, 0)),
        ],
        out_specs=pl.BlockSpec((tm, N), lambda i: (i, 0)),
        compiler_params=pltpu.CompilerParams(dimension_semantics=("parallel",)),
    )(x2, w, b.reshape(1, N).astype(jnp.float32), row_mask.reshape(-1, 1).astype(jnp.float32))
    return out.reshape(lead + (N,))


# ---------------------- fused dual attention + edge update + Etoy-stats kernel ----------------------

def _dual_attn_edge_kernel(npq_ref, npk_ref, es_ref, et_ref, mq_ref, mk_ref,
                           yea_ref, yem_ref,
                           wes_ref, bes_ref, wet_ref, bet_ref, weo_ref, beo_ref,
                           newe_ref, wv_ref, estat_ref, *, dx, de, scale):
    ti = npq_ref.shape[1]
    n = npk_ref.shape[1]
    cdt = wes_ref.dtype                    # bf16 MXU operands, fp32 accumulation

    es3 = es_ref[0]                        # (TI, n, de) raw E rows (s-path, residual, stats)
    mq = mq_ref[0]                         # (TI, 1) query node mask
    mk = mk_ref[0]                         # (n, 1)  key node mask

    # --- fused Etoy partial statistics over the key axis (raw unmasked E, as in the reference) ---
    estat_ref[0, :, 0 * de:1 * de] = jnp.sum(es3, axis=1)
    estat_ref[0, :, 1 * de:2 * de] = jnp.min(es3, axis=1)
    estat_ref[0, :, 2 * de:3 * de] = jnp.max(es3, axis=1)
    estat_ref[0, :, 3 * de:4 * de] = jnp.sum(es3 * es3, axis=1)

    npq = npq_ref[0]                       # (TI, 6dx) fp32, already x-masked
    npk = npk_ref[0]                       # (n,  6dx)
    qs = npq[:, 0 * dx:1 * dx]
    qt = npq[:, 3 * dx:4 * dx]
    ks = npk[:, 1 * dx:2 * dx]
    vs = npk[:, 2 * dx:3 * dx]
    kt = npk[:, 4 * dx:5 * dx]
    vt = npk[:, 5 * dx:6 * dx]

    em_s = mq[:, None, :] * mk[None, :, :]          # (TI, n, 1)  mask_i * mask_j at (i, j)

    # ---- s-branch: edge FiLM + gate, fully consumed into newE before the t-branch starts ----
    ps = (jnp.dot(es3.reshape(ti * n, de).astype(cdt), wes_ref[...],
                  preferred_element_type=jnp.float32) + bes_ref[...]).reshape(ti, n, 3 * dx)
    f_s = ps[..., :dx] * em_s + 1.0                 # E1_s + 1 (computed once)
    e2_s = ps[..., dx:2 * dx] * em_s
    g_s = jax.nn.sigmoid(ps[..., 2 * dx:])          # edge gate is NOT masked in the reference
    y_st = (qs[:, None, :] * kt[None, :, :]) * scale
    y_st = y_st * f_s + e2_s
    y_st = y_st * (g_s * f_s) + e2_s

    # newE = (E + e_out(ye_add + (ye_mul+1) * Y_st)) * emask  (binary mask -> single multiply)
    ne = yea_ref[...] + (yem_ref[...] + 1.0) * y_st                  # (TI, n, dx)
    ne = (jnp.dot(ne.reshape(ti * n, dx).astype(cdt), weo_ref[...],
                  preferred_element_type=jnp.float32) + beo_ref[...]).reshape(ti, n, de)
    newe_ref[0] = ((es3 + ne) * em_s).astype(newe_ref.dtype)

    # ---- t-branch in (key j, query i, channel) layout: et3[j, i] == E^T[i, j], never copied ----
    et3 = et_ref[0]                                 # (n, TI, de) = E[b, :, i0:i0+TI, :]
    em_t = mk[:, None, :] * mq[None, :, :]          # (n, TI, 1)
    pt = (jnp.dot(et3.reshape(n * ti, de).astype(cdt), wet_ref[...],
                  preferred_element_type=jnp.float32) + bet_ref[...]).reshape(n, ti, 3 * dx)
    f_t = pt[..., :dx] * em_t + 1.0
    e2_t = pt[..., dx:2 * dx] * em_t
    g_t = jax.nn.sigmoid(pt[..., 2 * dx:])
    y_ts = (ks[:, None, :] * qt[None, :, :]) * scale
    y_ts = y_ts * f_t + e2_t
    y_ts = y_ts * (g_t * f_t) + e2_t

    # ---- dual masked softmax over the concatenated key axis [Y_st keys (V_t) | Y_ts keys (V_s)] ----
    st = jnp.where(mk[None, :, :] > 0.0, y_st, NEG_BIG)             # (TI, n, dx)
    ts = jnp.where(mk[:, None, :] > 0.0, y_ts, NEG_BIG)             # (n, TI, dx)
    mx = jnp.maximum(jnp.max(st, axis=1), jnp.max(ts, axis=0))      # (TI, dx)
    e_st = jnp.exp(st - mx[:, None, :])
    e_ts = jnp.exp(ts - mx[None, :, :])
    denom = jnp.sum(e_st, axis=1) + jnp.sum(e_ts, axis=0)           # (TI, dx)
    acc = (jnp.sum(e_st * vt[None, :, :], axis=1)
           + jnp.sum(e_ts * vs[:, None, :], axis=0))                # (TI, dx)
    wv_ref[0] = (acc / denom).astype(wv_ref.dtype)                  # exact division (parity)


def pallas_dual_attn_edge(node_proj, E, node_mask, ye_add, ye_mul,
                          w_es, b_es, w_et, b_et, w_eout, b_eout, *, n_head):
    bs, n, six_dx = node_proj.shape
    dx = six_dx // 6
    de = E.shape[-1]
    scale = 1.0 / math.sqrt(dx // n_head)
    vmem_limit, ti = _vmem_budget_and_tile(n)
    mask3 = node_mask.reshape(bs, n, 1).astype(jnp.float32)
    grid = (bs, pl.cdiv(n, ti))       # bs * n_tiles >= 2 keeps both v7x TensorCores busy

    newE, wV, estat = pl.pallas_call(
        functools.partial(_dual_attn_edge_kernel, dx=dx, de=de, scale=scale),
        out_shape=(jax.ShapeDtypeStruct((bs, n, n, de), jnp.float32),
                   jax.ShapeDtypeStruct((bs, n, dx), jnp.float32),
                   jax.ShapeDtypeStruct((bs, n, 4 * de), jnp.float32)),
        grid=grid,
        in_specs=[
            pl.BlockSpec((1, ti, 6 * dx), lambda b, i: (b, i, 0)),    # Q-side node projections
            pl.BlockSpec((1, n, 6 * dx), lambda b, i: (b, 0, 0)),     # K/V-side node projections
            pl.BlockSpec((1, ti, n, de), lambda b, i: (b, i, 0, 0)),  # E rows (s-path/residual/stats)
            pl.BlockSpec((1, n, ti, de), lambda b, i: (b, 0, i, 0)),  # E cols (t-path, no E^T copy)
            pl.BlockSpec((1, ti, 1), lambda b, i: (b, i, 0)),         # query node mask
            pl.BlockSpec((1, n, 1), lambda b, i: (b, 0, 0)),          # key node mask
            pl.BlockSpec((1, 1, dx), lambda b, i: (b, 0, 0)),         # y_e_add(y)
            pl.BlockSpec((1, 1, dx), lambda b, i: (b, 0, 0)),         # y_e_mul(y)
            pl.BlockSpec((de, 3 * dx), lambda b, i: (0, 0)),          # [e_mul_s|e_add_s|gate_s]
            pl.BlockSpec((1, 3 * dx), lambda b, i: (0, 0)),
            pl.BlockSpec((de, 3 * dx), lambda b, i: (0, 0)),          # [e_mul_t|e_add_t|gate_t]
            pl.BlockSpec((1, 3 * dx), lambda b, i: (0, 0)),
            pl.BlockSpec((dx, de), lambda b, i: (0, 0)),              # e_out
            pl.BlockSpec((1, de), lambda b, i: (0, 0)),
        ],
        out_specs=(
            pl.BlockSpec((1, ti, n, de), lambda b, i: (b, i, 0, 0)),
            pl.BlockSpec((1, ti, dx), lambda b, i: (b, i, 0)),
            pl.BlockSpec((1, ti, 4 * de), lambda b, i: (b, i, 0)),
        ),
        compiler_params=pltpu.CompilerParams(
            dimension_semantics=("parallel", "parallel"),
            vmem_limit_bytes=vmem_limit),
    )(node_proj, node_proj, E, E, mask3, mask3, ye_add, ye_mul,
      w_es, b_es, w_et, b_et, w_eout, b_eout)
    return newE, wV, estat


# ---------------------- fused node-update kernel (gate_x + FiLM + x_out + mask) ----------------------

def _node_update_kernel(x_ref, wv_ref, m_ref, yxa_ref, yxm_ref,
                        wgx_ref, wgv_ref, bg_ref, wxo_ref, bxo_ref, o_ref):
    x = x_ref[0]                                     # (tm, dx) raw X (residual & gate input)
    wv = wv_ref[0]                                   # (tm, dx) weighted_V
    cdt = wgx_ref.dtype
    gate = jax.nn.sigmoid(
        jnp.dot(x.astype(cdt), wgx_ref[...], preferred_element_type=jnp.float32)
        + jnp.dot(wv.astype(cdt), wgv_ref[...], preferred_element_type=jnp.float32)
        + bg_ref[...])
    mod = yxa_ref[0] + (yxm_ref[0] + 1.0) * wv       # FiLM-modulated weighted_V
    nx = gate * x + (1.0 - gate) * mod
    out = (jnp.dot(nx.astype(cdt), wxo_ref[...], preferred_element_type=jnp.float32)
           + bxo_ref[...]) * m_ref[0]
    o_ref[0] = out.astype(o_ref.dtype)


def pallas_node_update(X, wV, x_mask3, yx_add, yx_mul, w_gx, w_gv, b_g, w_xo, b_xo):
    bs, n, dx = X.shape
    tm = n if n <= 256 else 256
    grid = (bs, pl.cdiv(n, tm))
    return pl.pallas_call(
        _node_update_kernel,
        out_shape=jax.ShapeDtypeStruct((bs, n, dx), jnp.float32),
        grid=grid,
        in_specs=[
            pl.BlockSpec((1, tm, dx), lambda b, r: (b, r, 0)),
            pl.BlockSpec((1, tm, dx), lambda b, r: (b, r, 0)),
            pl.BlockSpec((1, tm, 1), lambda b, r: (b, r, 0)),
            pl.BlockSpec((1, 1, dx), lambda b, r: (b, 0, 0)),
            pl.BlockSpec((1, 1, dx), lambda b, r: (b, 0, 0)),
            pl.BlockSpec((dx, dx), lambda b, r: (0, 0)),
            pl.BlockSpec((dx, dx), lambda b, r: (0, 0)),
            pl.BlockSpec((1, dx), lambda b, r: (0, 0)),
            pl.BlockSpec((dx, dx), lambda b, r: (0, 0)),
            pl.BlockSpec((1, dx), lambda b, r: (0, 0)),
        ],
        out_specs=pl.BlockSpec((1, tm, dx), lambda b, r: (b, r, 0)),
        compiler_params=pltpu.CompilerParams(dimension_semantics=("parallel", "parallel")),
    )(X, wV, x_mask3, yx_add, yx_mul, w_gx, w_gv, b_g, w_xo, b_xo)


# ----------------------------- block forward -----------------------------

def dual_node_edge_block(X, E, y, node_mask, fp, *, n_head):
    bs, n, dx = X.shape
    de = E.shape[-1]
    x_mask = node_mask[..., None].astype(jnp.float32)                         # (bs, n, 1)

    # 1) six node projections (q_s,k_s,v_s,q_t,k_t,v_t) in one lane-dense matmul, x_mask fused
    node_proj = pallas_masked_linear(X, fp['node_w'], fp['node_b'], x_mask)   # (bs, n, 6dx)

    # 2) four y-FiLM heads: tiny (bs, dy) matmul -> leave to XLA (no pallas dispatch overhead)
    y_film = y @ fp['y_film_w'] + fp['y_film_b']                              # (bs, 4dx)
    ye_add = y_film[:, 0 * dx:1 * dx].reshape(bs, 1, dx)
    ye_mul = y_film[:, 1 * dx:2 * dx].reshape(bs, 1, dx)
    yx_add = y_film[:, 2 * dx:3 * dx].reshape(bs, 1, dx)
    yx_mul = y_film[:, 3 * dx:4 * dx].reshape(bs, 1, dx)

    # 3) fused dual attention + edge update + Etoy partial stats (single pass over E rows)
    newE, weighted_V, estat = pallas_dual_attn_edge(
        node_proj, E, node_mask, ye_add, ye_mul,
        fp['e_s_w'], fp['e_s_b'], fp['e_t_w'], fp['e_t_b'],
        fp['e_out_w'], fp['e_out_b'], n_head=n_head)

    # 4) fused node update: gate_x([X|wV]) + sigmoid + FiLM + x_out + x_mask in ONE kernel
    newX = pallas_node_update(X, weighted_V, x_mask, yx_add, yx_mul,
                              fp['gate_xx_w'], fp['gate_xv_w'], fp['gate_x_b'],
                              fp['x_out_w'], fp['x_out_b'])

    # 5) global y update (tiny, XLA):  y_y(y) + Xtoy(X) + Etoy(E) fused into one affine map.
    #    Etoy stats are reduced from the kernel's per-row partials (E is not re-read from HBM).
    xs = jnp.concatenate([jnp.mean(X, axis=1), jnp.min(X, axis=1),
                          jnp.max(X, axis=1), jnp.std(X, axis=1, ddof=1)], axis=-1)
    n_tot = float(n * n)
    e_sum = jnp.sum(estat[:, :, 0 * de:1 * de], axis=1)
    e_min = jnp.min(estat[:, :, 1 * de:2 * de], axis=1)
    e_max = jnp.max(estat[:, :, 2 * de:3 * de], axis=1)
    e_sq = jnp.sum(estat[:, :, 3 * de:4 * de], axis=1)
    e_mean = e_sum / n_tot
    e_var = jnp.maximum(e_sq - n_tot * e_mean * e_mean, 0.0) / (n_tot - 1.0)  # torch.std (ddof=1)
    est = jnp.concatenate([e_mean, e_min, e_max, jnp.sqrt(e_var)], axis=-1)

    h = jnp.concatenate([y, xs, est], axis=-1) @ fp['y_agg_w'] + fp['y_agg_b']
    h2 = jnp.maximum(h @ fp['y_out1_w'] + fp['y_out1_b'], 0.0)
    new_y = y + (h2 @ fp['y_out2_w'] + fp['y_out2_b'])
    return newX, newE, new_y


# ----------------------------- parameters -----------------------------

def init_linear(key, fan_in, fan_out):
    k1, k2 = jax.random.split(key)
    bound = 1.0 / math.sqrt(fan_in)
    w = jax.random.uniform(k1, (fan_in, fan_out), jnp.float32, -bound, bound)
    b = jax.random.uniform(k2, (fan_out,), jnp.float32, -bound, bound)
    return {'w': w, 'b': b}


def build_params(key, dx, de, dy, n_head):
    shapes = dict(
        q_s=(dx, dx), k_s=(dx, dx), v_s=(dx, dx),
        q_t=(dx, dx), k_t=(dx, dx), v_t=(dx, dx),
        y_e_mul=(dy, dx), y_e_add=(dy, dx), y_x_mul=(dy, dx), y_x_add=(dy, dx),
        e_mul_s=(de, dx), e_add_s=(de, dx), e_mul_t=(de, dx), e_add_t=(de, dx),
        y_y=(dy, dy), x_y=(4 * dx, dy), e_y=(4 * de, dy),
        x_out=(dx, dx), e_out=(dx, de),
        y_out1=(dy, dy), y_out2=(dy, dy),
        gate_x=(2 * dx, dx),
        edge_gate_linear=(de, n_head), edge_gate_linear_t=(de, n_head),
    )
    p = {}
    for name, (fi, fo) in shapes.items():
        key, sub = jax.random.split(key)
        p[name] = init_linear(sub, fi, fo)
    return p


def prepare_params(p, dx, de, dy, n_head):
    """Fuse Linear weights into lane-dense bundles; cast MXU operands to bf16 at build time."""
    df = dx // n_head
    c = lambda a: a.astype(MATMUL_DTYPE)

    def cat_w(names):
        return jnp.concatenate([p[k]['w'] for k in names], axis=1)

    def cat_b(names):
        return jnp.concatenate([p[k]['b'] for k in names], axis=0)

    fp = {}
    node = ['q_s', 'k_s', 'v_s', 'q_t', 'k_t', 'v_t']
    fp['node_w'], fp['node_b'] = c(cat_w(node)), cat_b(node)

    film = ['y_e_add', 'y_e_mul', 'y_x_add', 'y_x_mul']               # y-path stays fp32 in XLA
    fp['y_film_w'], fp['y_film_b'] = cat_w(film), cat_b(film)

    # Edge bundles [e_mul | e_add | edge_gate]. The per-head gate is expanded to per-channel by
    # repeating its weight columns df times (channel c -> head c // df), reproducing the
    # edge_gate.unsqueeze(-1) broadcast over df in the head-major flatten.
    g_s_w = jnp.repeat(p['edge_gate_linear']['w'], df, axis=1)
    g_s_b = jnp.repeat(p['edge_gate_linear']['b'], df, axis=0)
    g_t_w = jnp.repeat(p['edge_gate_linear_t']['w'], df, axis=1)
    g_t_b = jnp.repeat(p['edge_gate_linear_t']['b'], df, axis=0)
    fp['e_s_w'] = c(jnp.concatenate([p['e_mul_s']['w'], p['e_add_s']['w'], g_s_w], axis=1))
    fp['e_s_b'] = jnp.concatenate([p['e_mul_s']['b'], p['e_add_s']['b'], g_s_b]).reshape(1, -1)
    fp['e_t_w'] = c(jnp.concatenate([p['e_mul_t']['w'], p['e_add_t']['w'], g_t_w], axis=1))
    fp['e_t_b'] = jnp.concatenate([p['e_mul_t']['b'], p['e_add_t']['b'], g_t_b]).reshape(1, -1)
    fp['e_out_w'] = c(p['e_out']['w'])
    fp['e_out_b'] = p['e_out']['b'].reshape(1, -1)

    # gate_x split into its X- and weighted_V- input halves (cat([X, wV]) order)
    fp['gate_xx_w'] = c(p['gate_x']['w'][:dx])
    fp['gate_xv_w'] = c(p['gate_x']['w'][dx:])
    fp['gate_x_b'] = p['gate_x']['b'].reshape(1, -1)
    fp['x_out_w'] = c(p['x_out']['w'])
    fp['x_out_b'] = p['x_out']['b'].reshape(1, -1)

    # y_y(y) + x_y(stats(X)) + e_y(stats(E)) == one affine map on [y | statsX | statsE]  (XLA)
    fp['y_agg_w'] = jnp.concatenate([p['y_y']['w'], p['x_y']['w'], p['e_y']['w']], axis=0)
    fp['y_agg_b'] = p['y_y']['b'] + p['x_y']['b'] + p['e_y']['b']
    fp['y_out1_w'], fp['y_out1_b'] = p['y_out1']['w'], p['y_out1']['b']
    fp['y_out2_w'], fp['y_out2_b'] = p['y_out2']['w'], p['y_out2']['b']
    return fp


# ----------------------------- main -----------------------------

if __name__ == "__main__":
    dx, de, dy, n_head = 32, 16, 16, 4
    bs, n = 2, 8

    key = jax.random.PRNGKey(0)
    kp, kx, ke, ky = jax.random.split(key, 4)
    raw_params = build_params(kp, dx, de, dy, n_head)
    fp = prepare_params(raw_params, dx, de, dy, n_head)

    X = jax.random.normal(kx, (bs, n, dx), jnp.float32)
    E = jax.random.normal(ke, (bs, n, n, de), jnp.float32)
    y = jax.random.normal(ky, (bs, dy), jnp.float32)
    node_mask = jnp.array([[1.0] * n,
                           [1.0] * (n - 2) + [0.0] * 2], dtype=jnp.float32)   # (bs, n)

    fwd = jax.jit(functools.partial(dual_node_edge_block, n_head=n_head))
    newX, newE, new_y = fwd(X, E, y, node_mask, fp)
    jax.block_until_ready((newX, newE, new_y))

    assert newX.shape == (bs, n, dx)
    assert newE.shape == (bs, n, n, de)
    assert new_y.shape == (bs, dy)
    assert bool(jnp.isfinite(newX).all() & jnp.isfinite(newE).all() & jnp.isfinite(new_y).all())
    print("KERNEL_OK")
</pallas_src>

<mosaic_0001>
module attributes {stable_mosaic.version = 11 : i64} {
  func.func @_masked_linear_kernel(%arg0: i32, %arg1: memref<16x32xf32, #tpu.memory_space<vmem>>, %arg2: memref<32x192xbf16, #tpu.memory_space<vmem>>, %arg3: memref<1x192xf32, #tpu.memory_space<vmem>>, %arg4: memref<16x1xf32, #tpu.memory_space<vmem>>, %arg5: memref<16x192xf32, #tpu.memory_space<vmem>>) attributes {dimension_semantics = [#tpu.dimension_semantics<parallel>], iteration_bounds = array<i64: 1>, scalar_prefetch = 0 : i64, scratch_operands = 0 : i64, tpu.core_type = #tpu.core_type<tc>, window_params = [{transform_indices = @transform_0, window_bounds = array<i64: 16, 32>}, {pipeline_mode = #tpu.pipeline_mode<synchronous>, transform_indices = @transform_1, window_bounds = array<i64: 32, 192>}, {pipeline_mode = #tpu.pipeline_mode<synchronous>, transform_indices = @transform_2, window_bounds = array<i64: 1, 192>}, {transform_indices = @transform_3, window_bounds = array<i64: 16, 1>}, {transform_indices = @transform_4, window_bounds = array<i64: 16, 192>}]} {
    %c0 = arith.constant 0 : index
    %c0_0 = arith.constant 0 : index
    %0 = vector.load %arg1[%c0, %c0_0] : memref<16x32xf32, #tpu.memory_space<vmem>>, vector<16x32xf32>
    %1 = arith.truncf %0 : vector<16x32xf32> to vector<16x32xbf16>
    %c0_1 = arith.constant 0 : index
    %c0_2 = arith.constant 0 : index
    %2 = vector.load %arg2[%c0_1, %c0_2] : memref<32x192xbf16, #tpu.memory_space<vmem>>, vector<32x192xbf16>
    %cst = arith.constant dense<0.000000e+00> : vector<16x192xf32>
    %3 = tpu.matmul %1, %2, %cst {dimension_numbers = #tpu.dot_dimension_numbers<[1], [0], [0], [1], [0, 0, 1, 1], [], []>} : vector<16x32xbf16>, vector<32x192xbf16>, vector<16x192xf32> -> vector<16x192xf32>
    %c0_3 = arith.constant 0 : index
    %c0_4 = arith.constant 0 : index
    %4 = vector.load %arg3[%c0_3, %c0_4] : memref<1x192xf32, #tpu.memory_space<vmem>>, vector<1x192xf32>
    %5 = vector.broadcast %4 : vector<1x192xf32> to vector<16x192xf32>
    %6 = arith.addf %3, %5 : vector<16x192xf32>
    %c0_5 = arith.constant 0 : index
    %c0_6 = arith.constant 0 : index
    %7 = vector.load %arg4[%c0_5, %c0_6] : memref<16x1xf32, #tpu.memory_space<vmem>>, vector<16x1xf32>
    %8 = vector.broadcast %7 : vector<16x1xf32> to vector<16x192xf32>
    %9 = arith.mulf %6, %8 : vector<16x192xf32>
    %c0_7 = arith.constant 0 : index
    %c0_8 = arith.constant 0 : index
    %10 = vector.load %arg5[%c0_7, %c0_8] : memref<16x192xf32, #tpu.memory_space<vmem>>, vector<16x192xf32>
    tpu.vector_store %arg5[%c0_7, %c0_8], %9 {strides = array<i32>} : memref<16x192xf32, #tpu.memory_space<vmem>>, vector<16x192xf32>,
    return
  }
  func.func @transform_0(%arg0: i32) -> (i32, i32) {
    %c0_i32 = arith.constant 0 : i32
    %c0_i32_0 = arith.constant 0 : i32
    return %arg0, %c0_i32 : i32, i32
  }
  func.func @transform_1(%arg0: i32) -> (i32, i32) {
    %c0_i32 = arith.constant 0 : i32
    %c0_i32_0 = arith.constant 0 : i32
    %c0_i32_1 = arith.constant 0 : i32
    return %c0_i32, %c0_i32_0 : i32, i32
  }
  func.func @transform_2(%arg0: i32) -> (i32, i32) {
    %c0_i32 = arith.constant 0 : i32
    %c0_i32_0 = arith.constant 0 : i32
    %c0_i32_1 = arith.constant 0 : i32
    return %c0_i32, %c0_i32_0 : i32, i32
  }
  func.func @transform_3(%arg0: i32) -> (i32, i32) {
    %c0_i32 = arith.constant 0 : i32
    %c0_i32_0 = arith.constant 0 : i32
    return %arg0, %c0_i32 : i32, i32
  }
  func.func @transform_4(%arg0: i32) -> (i32, i32) {
    %c0_i32 = arith.constant 0 : i32
    %c0_i32_0 = arith.constant 0 : i32
    return %arg0, %c0_i32 : i32, i32
  }
}

module attributes {stable_mosaic.version = 11 : i64} {
  func.func @_dual_attn_edge_kernel(%arg0: i32, %arg1: i32, %arg2: memref<1x8x192xf32, #tpu.memory_space<vmem>>, %arg3: memref<1x8x192xf32, #tpu.memory_space<vmem>>, %arg4: memref<1x8x8x16xf32, #tpu.memory_space<vmem>>, %arg5: memref<1x8x8x16xf32, #tpu.memory_space<vmem>>, %arg6: memref<1x8x1xf32, #tpu.memory_space<vmem>>, %arg7: memref<1x8x1xf32, #tpu.memory_space<vmem>>, %arg8: memref<1x1x32xf32, #tpu.memory_space<vmem>>, %arg9: memref<1x1x32xf32, #tpu.memory_space<vmem>>, %arg10: memref<16x96xbf16, #tpu.memory_space<vmem>>, %arg11: memref<1x96xf32, #tpu.memory_space<vmem>>, %arg12: memref<16x96xbf16, #tpu.memory_space<vmem>>, %arg13: memref<1x96xf32, #tpu.memory_space<vmem>>, %arg14: memref<32x16xbf16, #tpu.memory_space<vmem>>, %arg15: memref<1x16xf32, #tpu.memory_space<vmem>>, %arg16: memref<1x8x8x16xf32, #tpu.memory_space<vmem>>, %arg17: memref<1x8x32xf32, #tpu.memory_space<vmem>>, %arg18: memref<1x8x64xf32, #tpu.memory_space<vmem>>) attributes {dimension_semantics = [#tpu.dimension_semantics<parallel>, #tpu.dimension_semantics<parallel>], iteration_bounds = array<i64: 2, 1>, scalar_prefetch = 0 : i64, scratch_operands = 0 : i64, tpu.core_type = #tpu.core_type<tc>, window_params = [{transform_indices = @transform_0, window_bounds = array<i64: 1, 8, 192>}, {transform_indices = @transform_1, window_bounds = array<i64: 1, 8, 192>}, {transform_indices = @transform_2, window_bounds = array<i64: 1, 8, 8, 16>}, {transform_indices = @transform_3, window_bounds = array<i64: 1, 8, 8, 16>}, {transform_indices = @transform_4, window_bounds = array<i64: 1, 8, 1>}, {transform_indices = @transform_5, window_bounds = array<i64: 1, 8, 1>}, {transform_indices = @transform_6, window_bounds = array<i64: 1, 1, 32>}, {transform_indices = @transform_7, window_bounds = array<i64: 1, 1, 32>}, {pipeline_mode = #tpu.pipeline_mode<synchronous>, transform_indices = @transform_8, window_bounds = array<i64: 16, 96>}, {pipeline_mode = #tpu.pipeline_mode<synchronous>, transform_indices = @transform_9, window_bounds = array<i64: 1, 96>}, {pipeline_mode = #tpu.pipeline_mode<synchronous>, transform_indices = @transform_10, window_bounds = array<i64: 16, 96>}, {pipeline_mode = #tpu.pipeline_mode<synchronous>, transform_indices = @transform_11, window_bounds = array<i64: 1, 96>}, {pipeline_mode = #tpu.pipeline_mode<synchronous>, transform_indices = @transform_12, window_bounds = array<i64: 32, 16>}, {pipeline_mode = #tpu.pipeline_mode<synchronous>, transform_indices = @transform_13, window_bounds = array<i64: 1, 16>}, {transform_indices = @transform_14, window_bounds = array<i64: 1, 8, 8, 16>}, {transform_indices = @transform_15, window_bounds = array<i64: 1, 8, 32>}, {transform_indices = @transform_16, window_bounds = array<i64: 1, 8, 64>}]} {
    %c0 = arith.constant 0 : index
    %c0_0 = arith.constant 0 : index
    %c0_1 = arith.constant 0 : index
    %c0_2 = arith.constant 0 : index
    %0 = vector.load %arg4[%c0, %c0_0, %c0_1, %c0_2] : memref<1x8x8x16xf32, #tpu.memory_space<vmem>>, vector<1x8x8x16xf32>
    %1 = vector.shape_cast %0 : vector<1x8x8x16xf32> to vector<8x8x16xf32>
    %c0_3 = arith.constant 0 : index
    %c0_4 = arith.constant 0 : index
    %c0_5 = arith.constant 0 : index
    %2 = vector.load %arg6[%c0_3, %c0_4, %c0_5] : memref<1x8x1xf32, #tpu.memory_space<vmem>>, vector<1x8x1xf32>
    %3 = vector.shape_cast %2 : vector<1x8x1xf32> to vector<8x1xf32>
    %c0_6 = arith.constant 0 : index
    %c0_7 = arith.constant 0 : index
    %c0_8 = arith.constant 0 : index
    %4 = vector.load %arg7[%c0_6, %c0_7, %c0_8] : memref<1x8x1xf32, #tpu.memory_space<vmem>>, vector<1x8x1xf32>
    %5 = vector.shape_cast %4 : vector<1x8x1xf32> to vector<8x1xf32>
    %cst = arith.constant dense<0.000000e+00> : vector<8x16xf32>
    %6 = vector.multi_reduction <add>, %1, %cst [1] : vector<8x8x16xf32> to vector<8x16xf32>
    %c0_9 = arith.constant 0 : index
    %c0_10 = arith.constant 0 : index
    %c0_11 = arith.constant 0 : index
    %7 = vector.load %arg18[%c0_9, %c0_10, %c0_11] : memref<1x8x64xf32, #tpu.memory_space<vmem>>, vector<1x8x16xf32>
    %8 = vector.shape_cast %7 : vector<1x8x16xf32> to vector<8x16xf32>
    %9 = vector.shape_cast %6 : vector<8x16xf32> to vector<1x8x16xf32>
    tpu.vector_store %arg18[%c0_9, %c0_10, %c0_11], %9 {strides = array<i32>} : memref<1x8x64xf32, #tpu.memory_space<vmem>>, vector<1x8x16xf32>,
    %cst_12 = arith.constant dense<0x7F800000> : vector<8x16xf32>
    %10 = vector.multi_reduction <minimumf>, %1, %cst_12 [1] : vector<8x8x16xf32> to vector<8x16xf32>
    %c0_13 = arith.constant 0 : index
    %c0_14 = arith.constant 0 : index
    %c16 = arith.constant 16 : index
    %11 = vector.load %arg18[%c0_13, %c0_14, %c16] : memref<1x8x64xf32, #tpu.memory_space<vmem>>, vector<1x8x16xf32>
    %12 = vector.shape_cast %11 : vector<1x8x16xf32> to vector<8x16xf32>
    %13 = vector.shape_cast %10 : vector<8x16xf32> to vector<1x8x16xf32>
    tpu.vector_store %arg18[%c0_13, %c0_14, %c16], %13 {strides = array<i32>} : memref<1x8x64xf32, #tpu.memory_space<vmem>>, vector<1x8x16xf32>,
    %cst_15 = arith.constant dense<0xFF800000> : vector<8x16xf32>
    %14 = vector.multi_reduction <maximumf>, %1, %cst_15 [1] : vector<8x8x16xf32> to vector<8x16xf32>
    %c0_16 = arith.constant 0 : index
    %c0_17 = arith.constant 0 : index
    %c32 = arith.constant 32 : index
    %15 = vector.load %arg18[%c0_16, %c0_17, %c32] : memref<1x8x64xf32, #tpu.memory_space<vmem>>, vector<1x8x16xf32>
    %16 = vector.shape_cast %15 : vector<1x8x16xf32> to vector<8x16xf32>
    %17 = vector.shape_cast %14 : vector<8x16xf32> to vector<1x8x16xf32>
    tpu.vector_store %arg18[%c0_16, %c0_17, %c32], %17 {strides = array<i32>} : memref<1x8x64xf32, #tpu.memory_space<vmem>>, vector<1x8x16xf32>,
    %18 = arith.mulf %1, %1 : vector<8x8x16xf32>
    %cst_18 = arith.constant dense<0.000000e+00> : vector<8x16xf32>
    %19 = vector.multi_reduction <add>, %18, %cst_18 [1] : vector<8x8x16xf32> to vector<8x16xf32>
    %c0_19 = arith.constant 0 : index
    %c0_20 = arith.constant 0 : index
    %c48 = arith.constant 48 : index
    %20 = vector.load %arg18[%c0_19, %c0_20, %c48] : memref<1x8x64xf32, #tpu.memory_space<vmem>>, vector<1x8x16xf32>
    %21 = vector.shape_cast %20 : vector<1x8x16xf32> to vector<8x16xf32>
    %22 = vector.shape_cast %19 : vector<8x16xf32> to vector<1x8x16xf32>
    tpu.vector_store %arg18[%c0_19, %c0_20, %c48], %22 {strides = array<i32>} : memref<1x8x64xf32, #tpu.memory_space<vmem>>, vector<1x8x16xf32>,
    %c0_21 = arith.constant 0 : index
    %c0_22 = arith.constant 0 : index
    %c0_23 = arith.constant 0 : index
    %23 = vector.load %arg2[%c0_21, %c0_22, %c0_23] : memref<1x8x192xf32, #tpu.memory_space<vmem>>, vector<1x8x192xf32>
    %24 = vector.shape_cast %23 : vector<1x8x192xf32> to vector<8x192xf32>
    %c0_24 = arith.constant 0 : index
    %c0_25 = arith.constant 0 : index
    %c0_26 = arith.constant 0 : index
    %25 = vector.load %arg3[%c0_24, %c0_25, %c0_26] : memref<1x8x192xf32, #tpu.memory_space<vmem>>, vector<1x8x192xf32>
    %26 = vector.shape_cast %25 : vector<1x8x192xf32> to vector<8x192xf32>
    %27 = vector.extract_strided_slice %24 {offsets = [0, 0], sizes = [8, 32], strides = [1, 1]} : vector<8x192xf32> to vector<8x32xf32>
    %28 = vector.extract_strided_slice %24 {offsets = [0, 96], sizes = [8, 32], strides = [1, 1]} : vector<8x192xf32> to vector<8x32xf32>
    %29 = vector.extract_strided_slice %26 {offsets = [0, 32], sizes = [8, 32], strides = [1, 1]} : vector<8x192xf32> to vector<8x32xf32>
    %30 = vector.extract_strided_slice %26 {offsets = [0, 64], sizes = [8, 32], strides = [1, 1]} : vector<8x192xf32> to vector<8x32xf32>
    %31 = vector.extract_strided_slice %26 {offsets = [0, 128], sizes = [8, 32], strides = [1, 1]} : vector<8x192xf32> to vector<8x32xf32>
    %32 = vector.extract_strided_slice %26 {offsets = [0, 160], sizes = [8, 32], strides = [1, 1]} : vector<8x192xf32> to vector<8x32xf32>
    %33 = vector.shape_cast %3 : vector<8x1xf32> to vector<8x1x1xf32>
    %34 = vector.shape_cast %5 : vector<8x1xf32> to vector<1x8x1xf32>
    %35 = vector.broadcast %33 : vector<8x1x1xf32> to vector<8x8x1xf32>
    %36 = vector.broadcast %34 : vector<1x8x1xf32> to vector<8x8x1xf32>
    %37 = arith.mulf %35, %36 : vector<8x8x1xf32>
    %38 = vector.shape_cast %1 : vector<8x8x16xf32> to vector<64x16xf32>
    %39 = arith.truncf %38 : vector<64x16xf32> to vector<64x16xbf16>
    %c0_27 = arith.constant 0 : index
    %c0_28 = arith.constant 0 : index
    %40 = vector.load %arg10[%c0_27, %c0_28] : memref<16x96xbf16, #tpu.memory_space<vmem>>, vector<16x96xbf16>
    %cst_29 = arith.constant dense<0.000000e+00> : vector<64x96xf32>
    %41 = tpu.matmul %39, %40, %cst_29 {dimension_numbers = #tpu.dot_dimension_numbers<[1], [0], [0], [1], [0, 0, 1, 1], [], []>} : vector<64x16xbf16>, vector<16x96xbf16>, vector<64x96xf32> -> vector<64x96xf32>
    %c0_30 = arith.constant 0 : index
    %c0_31 = arith.constant 0 : index
    %42 = vector.load %arg11[%c0_30, %c0_31] : memref<1x96xf32, #tpu.memory_space<vmem>>, vector<1x96xf32>
    %43 = vector.broadcast %42 : vector<1x96xf32> to vector<64x96xf32>
    %44 = arith.addf %41, %43 : vector<64x96xf32>
    %45 = vector.shape_cast %44 : vector<64x96xf32> to vector<8x8x96xf32>
    %46 = vector.extract_strided_slice %45 {offsets = [0, 0, 0], sizes = [8, 8, 32], strides = [1, 1, 1]} : vector<8x8x96xf32> to vector<8x8x32xf32>
    %47 = vector.broadcast %37 : vector<8x8x1xf32> to vector<8x8x32xf32>
    %48 = arith.mulf %46, %47 : vector<8x8x32xf32>
    %cst_32 = arith.constant 1.000000e+00 : f32
    %49 = vector.broadcast %cst_32 : f32 to vector<8x8x32xf32>
    %50 = arith.addf %48, %49 : vector<8x8x32xf32>
    %51 = vector.extract_strided_slice %45 {offsets = [0, 0, 32], sizes = [8, 8, 32], strides = [1, 1, 1]} : vector<8x8x96xf32> to vector<8x8x32xf32>
    %52 = vector.broadcast %37 : vector<8x8x1xf32> to vector<8x8x32xf32>
    %53 = arith.mulf %51, %52 : vector<8x8x32xf32>
    %54 = vector.extract_strided_slice %45 {offsets = [0, 0, 64], sizes = [8, 8, 32], strides = [1, 1, 1]} : vector<8x8x96xf32> to vector<8x8x32xf32>
    %55 = arith.negf %54 : vector<8x8x32xf32>
    %56 = math.exp %55 : vector<8x8x32xf32>
    %cst_33 = arith.constant 1.000000e+00 : f32
    %57 = vector.broadcast %cst_33 : f32 to vector<8x8x32xf32>
    %58 = arith.addf %57, %56 : vector<8x8x32xf32>
    %59 = arith.divf %57, %58 : vector<8x8x32xf32>
    %60 = vector.shape_cast %27 : vector<8x32xf32> to vector<8x1x32xf32>
    %61 = vector.shape_cast %31 : vector<8x32xf32> to vector<1x8x32xf32>
    %62 = vector.broadcast %60 : vector<8x1x32xf32> to vector<8x8x32xf32>
    %63 = vector.broadcast %61 : vector<1x8x32xf32> to vector<8x8x32xf32>
    %64 = arith.mulf %62, %63 : vector<8x8x32xf32>
    %cst_34 = arith.constant 0.353553385 : f32
    %65 = vector.broadcast %cst_34 : f32 to vector<8x8x32xf32>
    %66 = arith.mulf %64, %65 : vector<8x8x32xf32>
    %67 = arith.mulf %66, %50 : vector<8x8x32xf32>
    %68 = arith.addf %67, %53 : vector<8x8x32xf32>
    %69 = arith.mulf %59, %50 : vector<8x8x32xf32>
    %70 = arith.mulf %68, %69 : vector<8x8x32xf32>
    %71 = arith.addf %70, %53 : vector<8x8x32xf32>
    %c0_35 = arith.constant 0 : index
    %c0_36 = arith.constant 0 : index
    %c0_37 = arith.constant 0 : index
    %72 = vector.load %arg8[%c0_35, %c0_36, %c0_37] : memref<1x1x32xf32, #tpu.memory_space<vmem>>, vector<1x1x32xf32>
    %c0_38 = arith.constant 0 : index
    %c0_39 = arith.constant 0 : index
    %c0_40 = arith.constant 0 : index
    %73 = vector.load %arg9[%c0_38, %c0_39, %c0_40] : memref<1x1x32xf32, #tpu.memory_space<vmem>>, vector<1x1x32xf32>
    %cst_41 = arith.constant 1.000000e+00 : f32
    %74 = vector.broadcast %cst_41 : f32 to vector<1x1x32xf32>
    %75 = arith.addf %73, %74 : vector<1x1x32xf32>
    %76 = vector.broadcast %75 : vector<1x1x32xf32> to vector<8x8x32xf32>
    %77 = arith.mulf %76, %71 : vector<8x8x32xf32>
    %78 = vector.broadcast %72 : vector<1x1x32xf32> to vector<8x8x32xf32>
    %79 = arith.addf %78, %77 : vector<8x8x32xf32>
    %80 = vector.shape_cast %79 : vector<8x8x32xf32> to vector<64x32xf32>
    %81 = arith.truncf %80 : vector<64x32xf32> to vector<64x32xbf16>
    %c0_42 = arith.constant 0 : index
    %c0_43 = arith.constant 0 : index
    %82 = vector.load %arg14[%c0_42, %c0_43] : memref<32x16xbf16, #tpu.memory_space<vmem>>, vector<32x16xbf16>
    %cst_44 = arith.constant dense<0.000000e+00> : vector<64x16xf32>
    %83 = tpu.matmul %81, %82, %cst_44 {dimension_numbers = #tpu.dot_dimension_numbers<[1], [0], [0], [1], [0, 0, 1, 1], [], []>} : vector<64x32xbf16>, vector<32x16xbf16>, vector<64x16xf32> -> vector<64x16xf32>
    %c0_45 = arith.constant 0 : index
    %c0_46 = arith.constant 0 : index
    %84 = vector.load %arg15[%c0_45, %c0_46] : memref<1x16xf32, #tpu.memory_space<vmem>>, vector<1x16xf32>
    %85 = vector.broadcast %84 : vector<1x16xf32> to vector<64x16xf32>
    %86 = arith.addf %83, %85 : vector<64x16xf32>
    %87 = vector.shape_cast %86 : vector<64x16xf32> to vector<8x8x16xf32>
    %88 = arith.addf %1, %87 : vector<8x8x16xf32>
    %89 = vector.broadcast %37 : vector<8x8x1xf32> to vector<8x8x16xf32>
    %90 = arith.mulf %88, %89 : vector<8x8x16xf32>
    %c0_47 = arith.constant 0 : index
    %c0_48 = arith.constant 0 : index
    %c0_49 = arith.constant 0 : index
    %c0_50 = arith.constant 0 : index
    %91 = vector.load %arg16[%c0_47, %c0_48, %c0_49, %c0_50] : memref<1x8x8x16xf32, #tpu.memory_space<vmem>>, vector<1x8x8x16xf32>
    %92 = vector.shape_cast %91 : vector<1x8x8x16xf32> to vector<8x8x16xf32>
    %93 = vector.shape_cast %90 : vector<8x8x16xf32> to vector<1x8x8x16xf32>
    tpu.vector_store %arg16[%c0_47, %c0_48, %c0_49, %c0_50], %93 {strides = array<i32>} : memref<1x8x8x16xf32, #tpu.memory_space<vmem>>, vector<1x8x8x16xf32>,
    %c0_51 = arith.constant 0 : index
    %c0_52 = arith.constant 0 : index
    %c0_53 = arith.constant 0 : index
    %c0_54 = arith.constant 0 : index
    %94 = vector.load %arg5[%c0_51, %c0_52, %c0_53, %c0_54] : memref<1x8x8x16xf32, #tpu.memory_space<vmem>>, vector<1x8x8x16xf32>
    %95 = vector.shape_cast %94 : vector<1x8x8x16xf32> to vector<8x8x16xf32>
    %96 = vector.shape_cast %5 : vector<8x1xf32> to vector<8x1x1xf32>
    %97 = vector.shape_cast %3 : vector<8x1xf32> to vector<1x8x1xf32>
    %98 = vector.broadcast %96 : vector<8x1x1xf32> to vector<8x8x1xf32>
    %99 = vector.broadcast %97 : vector<1x8x1xf32> to vector<8x8x1xf32>
    %100 = arith.mulf %98, %99 : vector<8x8x1xf32>
    %101 = vector.shape_cast %95 : vector<8x8x16xf32> to vector<64x16xf32>
    %102 = arith.truncf %101 : vector<64x16xf32> to vector<64x16xbf16>
    %c0_55 = arith.constant 0 : index
    %c0_56 = arith.constant 0 : index
    %103 = vector.load %arg12[%c0_55, %c0_56] : memref<16x96xbf16, #tpu.memory_space<vmem>>, vector<16x96xbf16>
    %cst_57 = arith.constant dense<0.000000e+00> : vector<64x96xf32>
    %104 = tpu.matmul %102, %103, %cst_57 {dimension_numbers = #tpu.dot_dimension_numbers<[1], [0], [0], [1], [0, 0, 1, 1], [], []>} : vector<64x16xbf16>, vector<16x96xbf16>, vector<64x96xf32> -> vector<64x96xf32>
    %c0_58 = arith.constant 0 : index
    %c0_59 = arith.constant 0 : index
    %105 = vector.load %arg13[%c0_58, %c0_59] : memref<1x96xf32, #tpu.memory_space<vmem>>, vector<1x96xf32>
    %106 = vector.broadcast %105 : vector<1x96xf32> to vector<64x96xf32>
    %107 = arith.addf %104, %106 : vector<64x96xf32>
    %108 = vector.shape_cast %107 : vector<64x96xf32> to vector<8x8x96xf32>
    %109 = vector.extract_strided_slice %108 {offsets = [0, 0, 0], sizes = [8, 8, 32], strides = [1, 1, 1]} : vector<8x8x96xf32> to vector<8x8x32xf32>
    %110 = vector.broadcast %100 : vector<8x8x1xf32> to vector<8x8x32xf32>
    %111 = arith.mulf %109, %110 : vector<8x8x32xf32>
    %cst_60 = arith.constant 1.000000e+00 : f32
    %112 = vector.broadcast %cst_60 : f32 to vector<8x8x32xf32>
    %113 = arith.addf %111, %112 : vector<8x8x32xf32>
    %114 = vector.extract_strided_slice %108 {offsets = [0, 0, 32], sizes = [8, 8, 32], strides = [1, 1, 1]} : vector<8x8x96xf32> to vector<8x8x32xf32>
    %115 = vector.broadcast %100 : vector<8x8x1xf32> to vector<8x8x32xf32>
    %116 = arith.mulf %114, %115 : vector<8x8x32xf32>
    %117 = vector.extract_strided_slice %108 {offsets = [0, 0, 64], sizes = [8, 8, 32], strides = [1, 1, 1]} : vector<8x8x96xf32> to vector<8x8x32xf32>
    %118 = arith.negf %117 : vector<8x8x32xf32>
    %119 = math.exp %118 : vector<8x8x32xf32>
    %cst_61 = arith.constant 1.000000e+00 : f32
    %120 = vector.broadcast %cst_61 : f32 to vector<8x8x32xf32>
    %121 = arith.addf %120, %119 : vector<8x8x32xf32>
    %122 = arith.divf %120, %121 : vector<8x8x32xf32>
    %123 = vector.shape_cast %29 : vector<8x32xf32> to vector<8x1x32xf32>
    %124 = vector.shape_cast %28 : vector<8x32xf32> to vector<1x8x32xf32>
    %125 = vector.broadcast %123 : vector<8x1x32xf32> to vector<8x8x32xf32>
    %126 = vector.broadcast %124 : vector<1x8x32xf32> to vector<8x8x32xf32>
    %127 = arith.mulf %125, %126 : vector<8x8x32xf32>
    %cst_62 = arith.constant 0.353553385 : f32
    %128 = vector.broadcast %cst_62 : f32 to vector<8x8x32xf32>
    %129 = arith.mulf %127, %128 : vector<8x8x32xf32>
    %130 = arith.mulf %129, %113 : vector<8x8x32xf32>
    %131 = arith.addf %130, %116 : vector<8x8x32xf32>
    %132 = arith.mulf %122, %113 : vector<8x8x32xf32>
    %133 = arith.mulf %131, %132 : vector<8x8x32xf32>
    %134 = arith.addf %133, %116 : vector<8x8x32xf32>
    %135 = vector.shape_cast %5 : vector<8x1xf32> to vector<1x8x1xf32>
    %cst_63 = arith.constant 0.000000e+00 : f32
    %136 = vector.broadcast %cst_63 : f32 to vector<1x8x1xf32>
    %137 = arith.cmpf ogt, %135, %136 : vector<1x8x1xf32>
    %cst_64 = arith.constant -1.000000e+30 : f32
    %138 = vector.shape_cast %137 : vector<1x8x1xi1> to vector<1x8x1xi1>
    %139 = vector.broadcast %138 : vector<1x8x1xi1> to vector<8x8x32xi1>
    %140 = vector.broadcast %cst_64 : f32 to vector<8x8x32xf32>
    %141 = arith.select %139, %71, %140 : vector<8x8x32xi1>, vector<8x8x32xf32>
    %142 = vector.shape_cast %5 : vector<8x1xf32> to vector<8x1x1xf32>
    %cst_65 = arith.constant 0.000000e+00 : f32
    %143 = vector.broadcast %cst_65 : f32 to vector<8x1x1xf32>
    %144 = arith.cmpf ogt, %142, %143 : vector<8x1x1xf32>
    %cst_66 = arith.constant -1.000000e+30 : f32
    %145 = vector.shape_cast %144 : vector<8x1x1xi1> to vector<8x1x1xi1>
    %146 = vector.broadcast %145 : vector<8x1x1xi1> to vector<8x8x32xi1>
    %147 = vector.broadcast %cst_66 : f32 to vector<8x8x32xf32>
    %148 = arith.select %146, %134, %147 : vector<8x8x32xi1>, vector<8x8x32xf32>
    %cst_67 = arith.constant dense<0xFF800000> : vector<8x32xf32>
    %149 = vector.multi_reduction <maximumf>, %141, %cst_67 [1] : vector<8x8x32xf32> to vector<8x32xf32>
    %cst_68 = arith.constant dense<0xFF800000> : vector<8x32xf32>
    %150 = vector.multi_reduction <maximumf>, %148, %cst_68 [0] : vector<8x8x32xf32> to vector<8x32xf32>
    %151 = arith.maximumf %149, %150 : vector<8x32xf32>
    %152 = vector.shape_cast %151 : vector<8x32xf32> to vector<8x1x32xf32>
    %153 = vector.broadcast %152 : vector<8x1x32xf32> to vector<8x8x32xf32>
    %154 = arith.subf %141, %153 : vector<8x8x32xf32>
    %155 = math.exp %154 : vector<8x8x32xf32>
    %156 = vector.shape_cast %151 : vector<8x32xf32> to vector<1x8x32xf32>
    %157 = vector.broadcast %156 : vector<1x8x32xf32> to vector<8x8x32xf32>
    %158 = arith.subf %148, %157 : vector<8x8x32xf32>
    %159 = math.exp %158 : vector<8x8x32xf32>
    %cst_69 = arith.constant dense<0.000000e+00> : vector<8x32xf32>
    %160 = vector.multi_reduction <add>, %155, %cst_69 [1] : vector<8x8x32xf32> to vector<8x32xf32>
    %cst_70 = arith.constant dense<0.000000e+00> : vector<8x32xf32>
    %161 = vector.multi_reduction <add>, %159, %cst_70 [0] : vector<8x8x32xf32> to vector<8x32xf32>
    %162 = arith.addf %160, %161 : vector<8x32xf32>
    %163 = vector.shape_cast %32 : vector<8x32xf32> to vector<1x8x32xf32>
    %164 = vector.broadcast %163 : vector<1x8x32xf32> to vector<8x8x32xf32>
    %165 = arith.mulf %155, %164 : vector<8x8x32xf32>
    %cst_71 = arith.constant dense<0.000000e+00> : vector<8x32xf32>
    %166 = vector.multi_reduction <add>, %165, %cst_71 [1] : vector<8x8x32xf32> to vector<8x32xf32>
    %167 = vector.shape_cast %30 : vector<8x32xf32> to vector<8x1x32xf32>
    %168 = vector.broadcast %167 : vector<8x1x32xf32> to vector<8x8x32xf32>
    %169 = arith.mulf %159, %168 : vector<8x8x32xf32>
    %cst_72 = arith.constant dense<0.000000e+00> : vector<8x32xf32>
    %170 = vector.multi_reduction <add>, %169, %cst_72 [0] : vector<8x8x32xf32> to vector<8x32xf32>
    %171 = arith.addf %166, %170 : vector<8x32xf32>
    %172 = arith.divf %171, %162 : vector<8x32xf32>
    %c0_73 = arith.constant 0 : index
    %c0_74 = arith.constant 0 : index
    %c0_75 = arith.constant 0 : index
    %173 = vector.load %arg17[%c0_73, %c0_74, %c0_75] : memref<1x8x32xf32, #tpu.memory_space<vmem>>, vector<1x8x32xf32>
    %174 = vector.shape_cast %173 : vector<1x8x32xf32> to vector<8x32xf32>
    %175 = vector.shape_cast %172 : vector<8x32xf32> to vector<1x8x32xf32>
    tpu.vector_store %arg17[%c0_73, %c0_74, %c0_75], %175 {strides = array<i32>} : memref<1x8x32xf32, #tpu.memory_space<vmem>>, vector<1x8x32xf32>,
    return
  }
  func.func @transform_0(%arg0: i32, %arg1: i32) -> (i32, i32, i32) {
    %c0_i32 = arith.constant 0 : i32
    %c0_i32_0 = arith.constant 0 : i32
    return %arg0, %arg1, %c0_i32 : i32, i32, i32
  }
  func.func @transform_1(%arg0: i32, %arg1: i32) -> (i32, i32, i32) {
    %c0_i32 = arith.constant 0 : i32
    %c0_i32_0 = arith.constant 0 : i32
    %c0_i32_1 = arith.constant 0 : i32
    return %arg0, %c0_i32, %c0_i32_0 : i32, i32, i32
  }
  func.func @transform_2(%arg0: i32, %arg1: i32) -> (i32, i32, i32, i32) {
    %c0_i32 = arith.constant 0 : i32
    %c0_i32_0 = arith.constant 0 : i32
    %c0_i32_1 = arith.constant 0 : i32
    return %arg0, %arg1, %c0_i32, %c0_i32_0 : i32, i32, i32, i32
  }
  func.func @transform_3(%arg0: i32, %arg1: i32) -> (i32, i32, i32, i32) {
    %c0_i32 = arith.constant 0 : i32
    %c0_i32_0 = arith.constant 0 : i32
    %c0_i32_1 = arith.constant 0 : i32
    return %arg0, %c0_i32, %arg1, %c0_i32_0 : i32, i32, i32, i32
  }
  func.func @transform_4(%arg0: i32, %arg1: i32) -> (i32, i32, i32) {
    %c0_i32 = arith.constant 0 : i32
    %c0_i32_0 = arith.constant 0 : i32
    return %arg0, %arg1, %c0_i32 : i32, i32, i32
  }
  func.func @transform_5(%arg0: i32, %arg1: i32) -> (i32, i32, i32) {
    %c0_i32 = arith.constant 0 : i32
    %c0_i32_0 = arith.constant 0 : i32
    %c0_i32_1 = arith.constant 0 : i32
    return %arg0, %c0_i32, %c0_i32_0 : i32, i32, i32
  }
  func.func @transform_6(%arg0: i32, %arg1: i32) -> (i32, i32, i32) {
    %c0_i32 = arith.constant 0 : i32
    %c0_i32_0 = arith.constant 0 : i32
    %c0_i32_1 = arith.constant 0 : i32
    return %arg0, %c0_i32, %c0_i32_0 : i32, i32, i32
  }
  func.func @transform_7(%arg0: i32, %arg1: i32) -> (i32, i32, i32) {
    %c0_i32 = arith.constant 0 : i32
    %c0_i32_0 = arith.constant 0 : i32
    %c0_i32_1 = arith.constant 0 : i32
    return %arg0, %c0_i32, %c0_i32_0 : i32, i32, i32
  }
  func.func @transform_8(%arg0: i32, %arg1: i32) -> (i32, i32) {
    %c0_i32 = arith.constant 0 : i32
    %c0_i32_0 = arith.constant 0 : i32
    %c0_i32_1 = arith.constant 0 : i32
    return %c0_i32, %c0_i32_0 : i32, i32
  }
  func.func @transform_9(%arg0: i32, %arg1: i32) -> (i32, i32) {
    %c0_i32 = arith.constant 0 : i32
    %c0_i32_0 = arith.constant 0 : i32
    %c0_i32_1 = arith.constant 0 : i32
    return %c0_i32, %c0_i32_0 : i32, i32
  }
  func.func @transform_10(%arg0: i32, %arg1: i32) -> (i32, i32) {
    %c0_i32 = arith.constant 0 : i32
    %c0_i32_0 = arith.constant 0 : i32
    %c0_i32_1 = arith.constant 0 : i32
    return %c0_i32, %c0_i32_0 : i32, i32
  }
  func.func @transform_11(%arg0: i32, %arg1: i32) -> (i32, i32) {
    %c0_i32 = arith.constant 0 : i32
    %c0_i32_0 = arith.constant 0 : i32
    %c0_i32_1 = arith.constant 0 : i32
    return %c0_i32, %c0_i32_0 : i32, i32
  }
  func.func @transform_12(%arg0: i32, %arg1: i32) -> (i32, i32) {
    %c0_i32 = arith.constant 0 : i32
    %c0_i32_0 = arith.constant 0 : i32
    %c0_i32_1 = arith.constant 0 : i32
    return %c0_i32, %c0_i32_0 : i32, i32
  }
  func.func @transform_13(%arg0: i32, %arg1: i32) -> (i32, i32) {
    %c0_i32 = arith.constant 0 : i32
    %c0_i32_0 = arith.constant 0 : i32
    %c0_i32_1 = arith.constant 0 : i32
    return %c0_i32, %c0_i32_0 : i32, i32
  }
  func.func @transform_14(%arg0: i32, %arg1: i32) -> (i32, i32, i32, i32) {
    %c0_i32 = arith.constant 0 : i32
    %c0_i32_0 = arith.constant 0 : i32
    %c0_i32_1 = arith.constant 0 : i32
    return %arg0, %arg1, %c0_i32, %c0_i32_0 : i32, i32, i32, i32
  }
  func.func @transform_15(%arg0: i32, %arg1: i32) -> (i32, i32, i32) {
    %c0_i32 = arith.constant 0 : i32
    %c0_i32_0 = arith.constant 0 : i32
    return %arg0, %arg1, %c0_i32 : i32, i32, i32
  }
  func.func @transform_16(%arg0: i32, %arg1: i32) -> (i32, i32, i32) {
    %c0_i32 = arith.constant 0 : i32
    %c0_i32_0 = arith.constant 0 : i32
    return %arg0, %arg1, %c0_i32 : i32, i32, i32
  }
}

module attributes {stable_mosaic.version = 11 : i64} {
  func.func @_node_update_kernel(%arg0: i32, %arg1: i32, %arg2: memref<1x8x32xf32, #tpu.memory_space<vmem>>, %arg3: memref<1x8x32xf32, #tpu.memory_space<vmem>>, %arg4: memref<1x8x1xf32, #tpu.memory_space<vmem>>, %arg5: memref<1x1x32xf32, #tpu.memory_space<vmem>>, %arg6: memref<1x1x32xf32, #tpu.memory_space<vmem>>, %arg7: memref<32x32xbf16, #tpu.memory_space<vmem>>, %arg8: memref<32x32xbf16, #tpu.memory_space<vmem>>, %arg9: memref<1x32xf32, #tpu.memory_space<vmem>>, %arg10: memref<32x32xbf16, #tpu.memory_space<vmem>>, %arg11: memref<1x32xf32, #tpu.memory_space<vmem>>, %arg12: memref<1x8x32xf32, #tpu.memory_space<vmem>>) attributes {dimension_semantics = [#tpu.dimension_semantics<parallel>, #tpu.dimension_semantics<parallel>], iteration_bounds = array<i64: 2, 1>, scalar_prefetch = 0 : i64, scratch_operands = 0 : i64, tpu.core_type = #tpu.core_type<tc>, window_params = [{transform_indices = @transform_0, window_bounds = array<i64: 1, 8, 32>}, {transform_indices = @transform_1, window_bounds = array<i64: 1, 8, 32>}, {transform_indices = @transform_2, window_bounds = array<i64: 1, 8, 1>}, {transform_indices = @transform_3, window_bounds = array<i64: 1, 1, 32>}, {transform_indices = @transform_4, window_bounds = array<i64: 1, 1, 32>}, {pipeline_mode = #tpu.pipeline_mode<synchronous>, transform_indices = @transform_5, window_bounds = array<i64: 32, 32>}, {pipeline_mode = #tpu.pipeline_mode<synchronous>, transform_indices = @transform_6, window_bounds = array<i64: 32, 32>}, {pipeline_mode = #tpu.pipeline_mode<synchronous>, transform_indices = @transform_7, window_bounds = array<i64: 1, 32>}, {pipeline_mode = #tpu.pipeline_mode<synchronous>, transform_indices = @transform_8, window_bounds = array<i64: 32, 32>}, {pipeline_mode = #tpu.pipeline_mode<synchronous>, transform_indices = @transform_9, window_bounds = array<i64: 1, 32>}, {transform_indices = @transform_10, window_bounds = array<i64: 1, 8, 32>}]} {
    %c0 = arith.constant 0 : index
    %c0_0 = arith.constant 0 : index
    %c0_1 = arith.constant 0 : index
    %0 = vector.load %arg2[%c0, %c0_0, %c0_1] : memref<1x8x32xf32, #tpu.memory_space<vmem>>, vector<1x8x32xf32>
    %1 = vector.shape_cast %0 : vector<1x8x32xf32> to vector<8x32xf32>
    %c0_2 = arith.constant 0 : index
    %c0_3 = arith.constant 0 : index
    %c0_4 = arith.constant 0 : index
    %2 = vector.load %arg3[%c0_2, %c0_3, %c0_4] : memref<1x8x32xf32, #tpu.memory_space<vmem>>, vector<1x8x32xf32>
    %3 = vector.shape_cast %2 : vector<1x8x32xf32> to vector<8x32xf32>
    %4 = arith.truncf %1 : vector<8x32xf32> to vector<8x32xbf16>
    %c0_5 = arith.constant 0 : index
    %c0_6 = arith.constant 0 : index
    %5 = vector.load %arg7[%c0_5, %c0_6] : memref<32x32xbf16, #tpu.memory_space<vmem>>, vector<32x32xbf16>
    %cst = arith.constant dense<0.000000e+00> : vector<8x32xf32>
    %6 = tpu.matmul %4, %5, %cst {dimension_numbers = #tpu.dot_dimension_numbers<[1], [0], [0], [1], [0, 0, 1, 1], [], []>} : vector<8x32xbf16>, vector<32x32xbf16>, vector<8x32xf32> -> vector<8x32xf32>
    %7 = arith.truncf %3 : vector<8x32xf32> to vector<8x32xbf16>
    %c0_7 = arith.constant 0 : index
    %c0_8 = arith.constant 0 : index
    %8 = vector.load %arg8[%c0_7, %c0_8] : memref<32x32xbf16, #tpu.memory_space<vmem>>, vector<32x32xbf16>
    %cst_9 = arith.constant dense<0.000000e+00> : vector<8x32xf32>
    %9 = tpu.matmul %7, %8, %cst_9 {dimension_numbers = #tpu.dot_dimension_numbers<[1], [0], [0], [1], [0, 0, 1, 1], [], []>} : vector<8x32xbf16>, vector<32x32xbf16>, vector<8x32xf32> -> vector<8x32xf32>
    %10 = arith.addf %6, %9 : vector<8x32xf32>
    %c0_10 = arith.constant 0 : index
    %c0_11 = arith.constant 0 : index
    %11 = vector.load %arg9[%c0_10, %c0_11] : memref<1x32xf32, #tpu.memory_space<vmem>>, vector<1x32xf32>
    %12 = vector.broadcast %11 : vector<1x32xf32> to vector<8x32xf32>
    %13 = arith.addf %10, %12 : vector<8x32xf32>
    %14 = arith.negf %13 : vector<8x32xf32>
    %15 = math.exp %14 : vector<8x32xf32>
    %cst_12 = arith.constant 1.000000e+00 : f32
    %16 = vector.broadcast %cst_12 : f32 to vector<8x32xf32>
    %17 = arith.addf %16, %15 : vector<8x32xf32>
    %18 = arith.divf %16, %17 : vector<8x32xf32>
    %c0_13 = arith.constant 0 : index
    %c0_14 = arith.constant 0 : index
    %c0_15 = arith.constant 0 : index
    %19 = vector.load %arg5[%c0_13, %c0_14, %c0_15] : memref<1x1x32xf32, #tpu.memory_space<vmem>>, vector<1x1x32xf32>
    %20 = vector.shape_cast %19 : vector<1x1x32xf32> to vector<1x32xf32>
    %c0_16 = arith.constant 0 : index
    %c0_17 = arith.constant 0 : index
    %c0_18 = arith.constant 0 : index
    %21 = vector.load %arg6[%c0_16, %c0_17, %c0_18] : memref<1x1x32xf32, #tpu.memory_space<vmem>>, vector<1x1x32xf32>
    %22 = vector.shape_cast %21 : vector<1x1x32xf32> to vector<1x32xf32>
    %cst_19 = arith.constant 1.000000e+00 : f32
    %23 = vector.broadcast %cst_19 : f32 to vector<1x32xf32>
    %24 = arith.addf %22, %23 : vector<1x32xf32>
    %25 = vector.broadcast %24 : vector<1x32xf32> to vector<8x32xf32>
    %26 = arith.mulf %25, %3 : vector<8x32xf32>
    %27 = vector.broadcast %20 : vector<1x32xf32> to vector<8x32xf32>
    %28 = arith.addf %27, %26 : vector<8x32xf32>
    %29 = arith.mulf %18, %1 : vector<8x32xf32>
    %cst_20 = arith.constant 1.000000e+00 : f32
    %30 = vector.broadcast %cst_20 : f32 to vector<8x32xf32>
    %31 = arith.subf %30, %18 : vector<8x32xf32>
    %32 = arith.mulf %31, %28 : vector<8x32xf32>
    %33 = arith.addf %29, %32 : vector<8x32xf32>
    %34 = arith.truncf %33 : vector<8x32xf32> to vector<8x32xbf16>
    %c0_21 = arith.constant 0 : index
    %c0_22 = arith.constant 0 : index
    %35 = vector.load %arg10[%c0_21, %c0_22] : memref<32x32xbf16, #tpu.memory_space<vmem>>, vector<32x32xbf16>
    %cst_23 = arith.constant dense<0.000000e+00> : vector<8x32xf32>
    %36 = tpu.matmul %34, %35, %cst_23 {dimension_numbers = #tpu.dot_dimension_numbers<[1], [0], [0], [1], [0, 0, 1, 1], [], []>} : vector<8x32xbf16>, vector<32x32xbf16>, vector<8x32xf32> -> vector<8x32xf32>
    %c0_24 = arith.constant 0 : index
    %c0_25 = arith.constant 0 : index
    %37 = vector.load %arg11[%c0_24, %c0_25] : memref<1x32xf32, #tpu.memory_space<vmem>>, vector<1x32xf32>
    %38 = vector.broadcast %37 : vector<1x32xf32> to vector<8x32xf32>
    %39 = arith.addf %36, %38 : vector<8x32xf32>
    %c0_26 = arith.constant 0 : index
    %c0_27 = arith.constant 0 : index
    %c0_28 = arith.constant 0 : index
    %40 = vector.load %arg4[%c0_26, %c0_27, %c0_28] : memref<1x8x1xf32, #tpu.memory_space<vmem>>, vector<1x8x1xf32>
    %41 = vector.shape_cast %40 : vector<1x8x1xf32> to vector<8x1xf32>
    %42 = vector.broadcast %41 : vector<8x1xf32> to vector<8x32xf32>
    %43 = arith.mulf %39, %42 : vector<8x32xf32>
    %c0_29 = arith.constant 0 : index
    %c0_30 = arith.constant 0 : index
    %c0_31 = arith.constant 0 : index
    %44 = vector.load %arg12[%c0_29, %c0_30, %c0_31] : memref<1x8x32xf32, #tpu.memory_space<vmem>>, vector<1x8x32xf32>
    %45 = vector.shape_cast %44 : vector<1x8x32xf32> to vector<8x32xf32>
    %46 = vector.shape_cast %43 : vector<8x32xf32> to vector<1x8x32xf32>
    tpu.vector_store %arg12[%c0_29, %c0_30, %c0_31], %46 {strides = array<i32>} : memref<1x8x32xf32, #tpu.memory_space<vmem>>, vector<1x8x32xf32>,
    return
  }
  func.func @transform_0(%arg0: i32, %arg1: i32) -> (i32, i32, i32) {
    %c0_i32 = arith.constant 0 : i32
    %c0_i32_0 = arith.constant 0 : i32
    return %arg0, %arg1, %c0_i32 : i32, i32, i32
  }
  func.func @transform_1(%arg0: i32, %arg1: i32) -> (i32, i32, i32) {
    %c0_i32 = arith.constant 0 : i32
    %c0_i32_0 = arith.constant 0 : i32
    return %arg0, %arg1, %c0_i32 : i32, i32, i32
  }
  func.func @transform_2(%arg0: i32, %arg1: i32) -> (i32, i32, i32) {
    %c0_i32 = arith.constant 0 : i32
    %c0_i32_0 = arith.constant 0 : i32
    return %arg0, %arg1, %c0_i32 : i32, i32, i32
  }
  func.func @transform_3(%arg0: i32, %arg1: i32) -> (i32, i32, i32) {
    %c0_i32 = arith.constant 0 : i32
    %c0_i32_0 = arith.constant 0 : i32
    %c0_i32_1 = arith.constant 0 : i32
    return %arg0, %c0_i32, %c0_i32_0 : i32, i32, i32
  }
  func.func @transform_4(%arg0: i32, %arg1: i32) -> (i32, i32, i32) {
    %c0_i32 = arith.constant 0 : i32
    %c0_i32_0 = arith.constant 0 : i32
    %c0_i32_1 = arith.constant 0 : i32
    return %arg0, %c0_i32, %c0_i32_0 : i32, i32, i32
  }
  func.func @transform_5(%arg0: i32, %arg1: i32) -> (i32, i32) {
    %c0_i32 = arith.constant 0 : i32
    %c0_i32_0 = arith.constant 0 : i32
    %c0_i32_1 = arith.constant 0 : i32
    return %c0_i32, %c0_i32_0 : i32, i32
  }
  func.func @transform_6(%arg0: i32, %arg1: i32) -> (i32, i32) {
    %c0_i32 = arith.constant 0 : i32
    %c0_i32_0 = arith.constant 0 : i32
    %c0_i32_1 = arith.constant 0 : i32
    return %c0_i32, %c0_i32_0 : i32, i32
  }
  func.func @transform_7(%arg0: i32, %arg1: i32) -> (i32, i32) {
    %c0_i32 = arith.constant 0 : i32
    %c0_i32_0 = arith.constant 0 : i32
    %c0_i32_1 = arith.constant 0 : i32
    return %c0_i32, %c0_i32_0 : i32, i32
  }
  func.func @transform_8(%arg0: i32, %arg1: i32) -> (i32, i32) {
    %c0_i32 = arith.constant 0 : i32
    %c0_i32_0 = arith.constant 0 : i32
    %c0_i32_1 = arith.constant 0 : i32
    return %c0_i32, %c0_i32_0 : i32, i32
  }
  func.func @transform_9(%arg0: i32, %arg1: i32) -> (i32, i32) {
    %c0_i32 = arith.constant 0 : i32
    %c0_i32_0 = arith.constant 0 : i32
    %c0_i32_1 = arith.constant 0 : i32
    return %c0_i32, %c0_i32_0 : i32, i32
  }
  func.func @transform_10(%arg0: i32, %arg1: i32) -> (i32, i32, i32) {
    %c0_i32 = arith.constant 0 : i32
    %c0_i32_0 = arith.constant 0 : i32
    return %arg0, %arg1, %c0_i32 : i32, i32, i32
  }
}

</mosaic_0001>

<llo_original>
// kernel: dual_node_edge_block.3
$region0: #{dual_node_edge_block.3}
  #allocation0 [shape = 'u32[]', space=smem, size = 0x4, offset = 0x4, fixed_abs, tag = 'smem constant byte address 0x4 - core index']
  #allocation1 [shape = 'u32[144,128]{1,0:T(1,128)}', space=vmem, size = 0x12000, scoped, tag = 'internal scratch']
  %s0 = inlined_call_operand.vmem [shape: f32[16,32], index: 0, kind: input, shape index: {}]
  %s1 = inlined_call_operand.vmem [shape: bf16[32,192], index: 1, kind: input, shape index: {}]
  %s2 = inlined_call_operand.vmem [shape: f32[1,192], index: 2, kind: input, shape index: {}]
  %s3 = inlined_call_operand.vmem [shape: f32[16,1], index: 3, kind: input, shape index: {}]
  %s4 = inlined_call_operand.hbm [shape: f32[16,192], index: 4, kind: output, shape index: {}]
  %s5 = sld [smem:[#allocation0]]
  $region26: #{dual_node_edge_block.3} parent=0
    _
  %s7 = ssub.s32 1, %s5
  %s8 = scalar_select 0, %s7, %s5
  $region1: #{dual_node_edge_block.3} parent=0
    #allocation2 [shape = 'u8[16384]{0}', space=vmem, size = 0x4000, scoped, tag = 'output window, operand 0, single buffered']
    #allocation3 [shape = 's32[1]{0}', space=sflag, size = 0x4, scoped, tag = 'scoped memory for dual_node_edge_block.3']
    %9 = vsyncpa [#allocation3], 0
    // Predicated region
    $region2: #{dual_node_edge_block.3} parent=1 // pred_check
      _
    $region3: #{dual_node_edge_block.3} parent=1 // pred_check_branch
      %11 = sbr.rel (0) target = $region5
    $region4: #{dual_node_edge_block.3} parent=1 // pred_region
      _
    $region5: #{dual_node_edge_block.3} parent=1 // pred_fallthru
      _
    // Predicated region
    $region6: #{dual_node_edge_block.3} parent=1 // pred_check
      _
    $region7: #{dual_node_edge_block.3} parent=1 // pred_check_branch
      %13 = sbr.rel (0) target = $region9
    $region8: #{dual_node_edge_block.3} parent=1 // pred_region
      _
    $region9: #{dual_node_edge_block.3} parent=1 // pred_fallthru
      _
    // Predicated region
    $region10: #{dual_node_edge_block.3} parent=1 // pred_check
      _
    $region11: #{dual_node_edge_block.3} parent=1 // pred_check_branch
      %15 = sbr.rel (0) target = $region13
    $region12: #{dual_node_edge_block.3} parent=1 // pred_region
      _
    $region13: #{dual_node_edge_block.3} parent=1 // pred_fallthru
      _
    // Predicated region
    $region14: #{dual_node_edge_block.3} parent=1 // pred_check
      _
    $region15: #{dual_node_edge_block.3} parent=1 // pred_check_branch
      %17 = sbr.rel (0) target = $region17
    $region16: #{dual_node_edge_block.3} parent=1 // pred_region
      _
    $region17: #{dual_node_edge_block.3} parent=1 // pred_fallthru
      _
    %v19 = vld [vmem:[%s0] sm:$0xff]
    %v20 = vld [vmem:[%s0 + $0x8] sm:$0xff]
    %v21 = vpack.c.bf16 %v20, %v19
    %v22 = vld [vmem:[%s1] sm:$0xff]
    %v23 = vld [vmem:[%s1 + $0x8] sm:$0xff]
    %v24 = vld [vmem:[%s1 + $0x10] sm:$0xff]
    %v25 = vld [vmem:[%s1 + $0x18] sm:$0xff]
    %v26 = vld [vmem:[%s2] sm:$0x3]
    %v28 = vlaneseq
    %v29 = vshrl.u32 %v28, 7
    %v30 = vsub.s32 0, %v29
    %v31 = vrot.slane %v26, %v30
    %v32 = vlaneseq
    %v33 = vshrl.u32 %v32, 7
    %v34 = vsub.s32 1, %v33
    %v35 = vrot.slane %v26, %v34
    %v42 = vunpack.c.l.b16 %v22
    %v43 = vunpack.c.h.b16 %v22
    %v44 = vunpack.c.l.b16 %v23
    %v45 = vunpack.c.h.b16 %v23
    %v46 = vunpack.c.l.b16 %v24
    %v47 = vunpack.c.h.b16 %v24
    %v48 = vunpack.c.l.b16 %v25
    %v49 = vunpack.c.h.b16 %v25
    %v50 = vpack.c.b16 %v44, %v42
    %v51 = vpack.c.b16 %v45, %v43
    %v52 = vpack.c.b16 %v48, %v46
    %v53 = vpack.c.b16 %v49, %v47
    %vm58 = vcmask 261120
    %v60 = vsel %vm58, %v21, 0
    %62 = vmatprep.subr.bf16.mxu0 %v51
    %63 = vmatpush1.bf16.msra.mxu0 %v50
    %64 = vmatprep.subr.bf16.mxu0 %v53
    %65 = vmatpush1.bf16.msra.mxu0 %v52
    %66 = vmatprep.subr.bf16.mxu0 0
    %67 = vmatpush1.bf16.msra.mxu0 0
    %68 = vmatprep.subr.bf16.mxu0 0
    %69 = vmatpush1.bf16.msra.mxu0 0
    %70 = vmatprep.subr.bf16.mxu0 0
    %71 = vmatpush1.bf16.msra.mxu0 0
    %72 = vmatprep.subr.bf16.mxu0 0
    %73 = vmatpush1.bf16.msra.mxu0 0
    %74 = vmatprep.subr.bf16.mxu0 0
    %75 = vmatpush1.bf16.msra.mxu0 0
    %76 = vmatprep.subr.bf16.mxu0 0
    %77 = vmatpush1.bf16.msra.mxu0 0
    %78 = vmatprep.subr.bf16.mxu0 0
    %79 = vmatpush1.bf16.msra.mxu0 0
    %80 = vmatprep.subr.bf16.mxu0 0
    %81 = vmatpush1.bf16.msra.mxu0 0
    %82 = vmatprep.subr.bf16.mxu0 0
    %83 = vmatpush1.bf16.msra.mxu0 0
    %84 = vmatprep.subr.bf16.mxu0 0
    %85 = vmatpush1.bf16.msra.mxu0 0
    %86 = vmatprep.subr.bf16.mxu0 0
    %87 = vmatpush1.bf16.msra.mxu0 0
    %88 = vmatprep.subr.bf16.mxu0 0
    %89 = vmatpush1.bf16.msra.mxu0 0
    %90 = vmatprep.subr.bf16.mxu0 0
    %91 = vmatpush1.bf16.msra.mxu0 0
    %92 = vmatprep.subr.bf16.mxu0 0
    %93 = vmatpush1.bf16.msra.mxu0 0
    %94 = vmatprep.mubr.bf16.mxu0 0
    %95 = vmatmul.mubr.bf16.gmra.mrb[0].mxu0 %v60
    %v96 = vpop.f32.mrb[0].mxu0
    %v97 = vadd.f32 %v31, %v96
    %v98 = vpop.f32.mrb[0].mxu0
    %v99 = vadd.f32 %v35, %v98
    %v100 = vpop.f32.mrb[0].mxu0
    %v101 = vadd.f32 %v31, %v100
    %v102 = vpop.f32.mrb[0].mxu0
    %v103 = vadd.f32 %v35, %v102
    %104 = vdwg.mxu0
    %v105 = vld [vmem:[%s3] sm:$0xff]
    %v106 = vld [vmem:[%s3 + $0x8] sm:$0xff]
    %108 = vset.pattern.permute.xlu0 0
    %109 = vperm.xlu0 %108, %v105
    %v110 = vpop.permute.xlu0 %109
    %113 = vset.pattern.permute.xlu0 0
    %114 = vperm.xlu0 %113, %v106
    %v115 = vpop.permute.xlu0 %114
    %v117 = vmul.f32 %v97, %v110
    %v118 = vmul.f32 %v99, %v110
    %v119 = vmul.f32 %v101, %v115
    %v120 = vmul.f32 %v103, %v115
    %121 = vst [vmem:[#allocation2] sm:$0xff] %v117
    %vm122 = vcmask 523264
    %123 = vst.msk [vmem:[#allocation2 + $0x8] sm:$0xff] %vm122, %v118
    %124 = vst [vmem:[#allocation2 + $0x10] sm:$0xff] %v119
    %125 = vst.msk [vmem:[#allocation2 + $0x18] sm:$0xff] %vm122, %v120
    // Predicated region
    $region18: #{dual_node_edge_block.3} parent=1 // pred_check
      _
    $region19: #{dual_node_edge_block.3} parent=1 // pred_check_branch
      %127 = sbr.rel (0) target = $region21
    $region20: #{dual_node_edge_block.3} parent=1 // pred_region
      %s129 = ssub.s32 512, 512
      %130 = vsyncadd [#allocation3], %s129
      %s131 = sshll.u32 [#allocation2], 4
      %s132 = int_to_ptr.vmem [resolvable:$true] %s131
      %137 = dma.vmem_to_hbm [thread:$0]  %s132, 512, %s4, [#allocation3], 256, 256, 16
    $region21: #{dual_node_edge_block.3} parent=1 // pred_fallthru
      _
    // Predicated region
    $region22: #{dual_node_edge_block.3} parent=1 // pred_check
      _
    $region23: #{dual_node_edge_block.3} parent=1 // pred_check_branch
      %139 = sbr.rel (0) target = $region25
    $region24: #{dual_node_edge_block.3} parent=1 // pred_region
      %140 = dma.done [#allocation3], 512
    $region25: #{dual_node_edge_block.3} parent=1 // pred_fallthru
      _
    %141 = vsyncpa [#allocation3], 1

// kernel: dual_node_edge_block.5
$region0: #{dual_node_edge_block.5}
  #allocation0 [shape = 'u32[]', space=smem, size = 0x4, offset = 0x4, fixed_abs, tag = 'smem constant byte address 0x4 - core index']
  #allocation1 [shape = 'u32[144,128]{1,0:T(1,128)}', space=vmem, size = 0x12000, scoped, tag = 'internal scratch']
  %s0 = inlined_call_operand.vmem [shape: f32[2,8,32], index: 0, kind: input, shape index: {}]
  %s1 = inlined_call_operand.vmem [shape: f32[2,8,32], index: 1, kind: input, shape index: {}]
  %s2 = inlined_call_operand.vmem [shape: f32[2,8,1], index: 2, kind: input, shape index: {}]
  %s3 = inlined_call_operand.vmem [shape: f32[2,1,32], index: 3, kind: input, shape index: {}]
  %s4 = inlined_call_operand.vmem [shape: f32[2,1,32], index: 4, kind: input, shape index: {}]
  %s5 = inlined_call_operand.vmem [shape: bf16[32,32], index: 5, kind: input, shape index: {}]
  %s6 = inlined_call_operand.vmem [shape: bf16[32,32], index: 6, kind: input, shape index: {}]
  %s7 = inlined_call_operand.vmem [shape: f32[1,32], index: 7, kind: input, shape index: {}]
  %s8 = inlined_call_operand.vmem [shape: bf16[32,32], index: 8, kind: input, shape index: {}]
  %s9 = inlined_call_operand.vmem [shape: f32[1,32], index: 9, kind: input, shape index: {}]
  %s10 = inlined_call_operand.hbm [shape: f32[2,8,32], index: 10, kind: output, shape index: {}]
  %s11 = sld [smem:[#allocation0]]
  $region73: #{dual_node_edge_block.5} parent=0
    _
  %s13 = ssub.s32 1, %s11
  %s14 = scalar_select 0, %s13, %s11
  $region1: #{dual_node_edge_block.5} parent=0
    #allocation2 [shape = 'u8[8192]{0}', space=vmem, size = 0x2000, scoped, tag = 'output window, operand 0']
    #allocation3 [shape = 's32[2]{0}', space=sflag, size = 0x8, scoped, tag = 'scoped memory for dual_node_edge_block.5']
    %15 = vsyncpa [#allocation3], 0
    %s16 = scalar_lea.sflag [#allocation3], 1
    %17 = vsyncpa %s16, 0
    loop: start=0, step=1, limit=4
    $region2: #{dual_node_edge_block.5} parent=1 // loop_pre_header
      _
    $region3: #{dual_node_edge_block.5} parent=1 // loop_header
      %s19 = sphi 0, %s23
      %p20 = scmp.ge.s32.totalorder %s19, 4
      %s26 = sphi 0, %s38
      %s27 = sphi 0, %s34
      %s28 = sphi 0, %s26
      %s29 = sphi 0, %s27
      %s30 = sphi 0, %s28
      %s31 = sphi 0, %s29
      %s43 = sphi 0, %s45
      %s46 = sphi 0, %s43
      %s47 = sphi 0, %s46
      %s63 = sphi 0, %s47
      %s71 = sphi 0, %s73
      %s74 = sphi 0, %s71
      %s75 = sphi 0, %s74
      %s91 = sphi 0, %s75
      %s99 = sphi 0, %s101
      %s102 = sphi 0, %s99
      %s103 = sphi 0, %s102
      %s119 = sphi 0, %s103
      %s125 = sphi 0, %s127
      %s128 = sphi 0, %s125
      %s129 = sphi 0, %s128
      %s145 = sphi 0, %s129
      %s151 = sphi 0, %s153
      %s154 = sphi 0, %s151
      %s155 = sphi 0, %s154
      %s171 = sphi 0, %s155
      %s175 = sphi 0, %s175
      %s177 = sphi 0, %s175
      %s178 = sphi 0, %s177
      %s192 = sphi 0, %s178
      %s196 = sphi 0, %s196
      %s198 = sphi 0, %s196
      %s199 = sphi 0, %s198
      %s213 = sphi 0, %s199
      %s217 = sphi 0, %s217
      %s219 = sphi 0, %s217
      %s220 = sphi 0, %s219
      %s234 = sphi 0, %s220
      %s238 = sphi 0, %s238
      %s240 = sphi 0, %s238
      %s241 = sphi 0, %s240
      %s255 = sphi 0, %s241
      %s259 = sphi 0, %s259
      %s261 = sphi 0, %s259
      %s262 = sphi 0, %s261
      %s276 = sphi 0, %s262
      %s284 = sphi 0, %s286
      %s287 = sphi 0, %s284
      %s288 = sphi 0, %s287
      %s304 = sphi 0, %s288
    $region4: #{dual_node_edge_block.5} parent=1 // loop_header_branch
      %22 = sbr.rel (%p20) target = $region8
    $region5: #{dual_node_edge_block.5} parent=1 // loop_body
      %s24 = ssub.s32 %s19, 1
      %s25 = ssub.s32 %s19, 2
      %s32 = sadd.s32 1, %s27
      %p33 = scmp.ge.s32.totalorder %s32, 1
      %s34 = scalar_select %p33, 0, %s32
      %s35 = sadd.s32 1, %s26
      %s36 = scalar_select %p33, %s35, %s26
      %p37 = scmp.ge.s32.totalorder %s36, 2
      %s38 = scalar_select %p37, 0, %s36
      %s39 = ssub.s32 %s26, %s38
      %s40 = ssub.s32 %s27, %s34
      %s41 = sor.u32 %s39, %s40
      %p42 = scmp.eq.s32.totalorder %s41, 0
      %s44 = sadd.s32 %s43, 1
      %s45 = scalar_select %p42, %s43, %s44
      %p48 = pneg %p42
      %p49 = scmp.eq.s32.totalorder %s19, 1
      %p50 = por %p48, %p49
      %p51 = scmp.ne.s32.totalorder %s43, %s46
      %p52 = scmp.eq.s32.totalorder %s19, 0
      %p53 = por %p51, %p52
      %p54 = scmp.ne.s32.totalorder %s43, %s46
      %p55 = scmp.eq.s32.totalorder %s24, 1
      %p56 = por %p54, %p55
      %p57 = scmp.ne.s32.totalorder %s46, %s47
      %p58 = scmp.eq.s32.totalorder %s24, 0
      %p59 = por %p57, %p58
      %p60 = scmp.ne.s32.totalorder %s46, %s47
      %p61 = scmp.eq.s32.totalorder %s25, 1
      %p62 = por %p60, %p61
      %p64 = scmp.ne.s32.totalorder %s47, %s63
      %p65 = scmp.eq.s32.totalorder %s25, 0
      %p66 = por %p64, %p65
      %s67 = ssub.s32 %s26, %s38
      %s68 = ssub.s32 %s27, %s34
      %s69 = sor.u32 %s67, %s68
      %p70 = scmp.eq.s32.totalorder %s69, 0
      %s72 = sadd.s32 %s71, 1
      %s73 = scalar_select %p70, %s71, %s72
      %p76 = pneg %p70
      %p77 = scmp.eq.s32.totalorder %s19, 1
      %p78 = por %p76, %p77
      %p79 = scmp.ne.s32.totalorder %s71, %s74
      %p80 = scmp.eq.s32.totalorder %s19, 0
      %p81 = por %p79, %p80
      %p82 = scmp.ne.s32.totalorder %s71, %s74
      %p83 = scmp.eq.s32.totalorder %s24, 1
      %p84 = por %p82, %p83
      %p85 = scmp.ne.s32.totalorder %s74, %s75
      %p86 = scmp.eq.s32.totalorder %s24, 0
      %p87 = por %p85, %p86
      %p88 = scmp.ne.s32.totalorder %s74, %s75
      %p89 = scmp.eq.s32.totalorder %s25, 1
      %p90 = por %p88, %p89
      %p92 = scmp.ne.s32.totalorder %s75, %s91
      %p93 = scmp.eq.s32.totalorder %s25, 0
      %p94 = por %p92, %p93
      %s95 = ssub.s32 %s26, %s38
      %s96 = ssub.s32 %s27, %s34
      %s97 = sor.u32 %s95, %s96
      %p98 = scmp.eq.s32.totalorder %s97, 0
      %s100 = sadd.s32 %s99, 1
      %s101 = scalar_select %p98, %s99, %s100
      %p104 = pneg %p98
      %p105 = scmp.eq.s32.totalorder %s19, 1
      %p106 = por %p104, %p105
      %p107 = scmp.ne.s32.totalorder %s99, %s102
      %p108 = scmp.eq.s32.totalorder %s19, 0
      %p109 = por %p107, %p108
      %p110 = scmp.ne.s32.totalorder %s99, %s102
      %p111 = scmp.eq.s32.totalorder %s24, 1
      %p112 = por %p110, %p111
      %p113 = scmp.ne.s32.totalorder %s102, %s103
      %p114 = scmp.eq.s32.totalorder %s24, 0
      %p115 = por %p113, %p114
      %p116 = scmp.ne.s32.totalorder %s102, %s103
      %p117 = scmp.eq.s32.totalorder %s25, 1
      %p118 = por %p116, %p117
      %p120 = scmp.ne.s32.totalorder %s103, %s119
      %p121 = scmp.eq.s32.totalorder %s25, 0
      %p122 = por %p120, %p121
      %s123 = ssub.s32 %s26, %s38
      %p124 = scmp.eq.s32.totalorder %s123, 0
      %s126 = sadd.s32 %s125, 1
      %s127 = scalar_select %p124, %s125, %s126
      %p130 = pneg %p124
      %p131 = scmp.eq.s32.totalorder %s19, 1
      %p132 = por %p130, %p131
      %p133 = scmp.ne.s32.totalorder %s125, %s128
      %p134 = scmp.eq.s32.totalorder %s19, 0
      %p135 = por %p133, %p134
      %p136 = scmp.ne.s32.totalorder %s125, %s128
      %p137 = scmp.eq.s32.totalorder %s24, 1
      %p138 = por %p136, %p137
      %p139 = scmp.ne.s32.totalorder %s128, %s129
      %p140 = scmp.eq.s32.totalorder %s24, 0
      %p141 = por %p139, %p140
      %p142 = scmp.ne.s32.totalorder %s128, %s129
      %p143 = scmp.eq.s32.totalorder %s25, 1
      %p144 = por %p142, %p143
      %p146 = scmp.ne.s32.totalorder %s129, %s145
      %p147 = scmp.eq.s32.totalorder %s25, 0
      %p148 = por %p146, %p147
      %s149 = ssub.s32 %s26, %s38
      %p150 = scmp.eq.s32.totalorder %s149, 0
      %s152 = sadd.s32 %s151, 1
      %s153 = scalar_select %p150, %s151, %s152
      %p156 = pneg %p150
      %p157 = scmp.eq.s32.totalorder %s19, 1
      %p158 = por %p156, %p157
      %p159 = scmp.ne.s32.totalorder %s151, %s154
      %p160 = scmp.eq.s32.totalorder %s19, 0
      %p161 = por %p159, %p160
      %p162 = scmp.ne.s32.totalorder %s151, %s154
      %p163 = scmp.eq.s32.totalorder %s24, 1
      %p164 = por %p162, %p163
      %p165 = scmp.ne.s32.totalorder %s154, %s155
      %p166 = scmp.eq.s32.totalorder %s24, 0
      %p167 = por %p165, %p166
      %p168 = scmp.ne.s32.totalorder %s154, %s155
      %p169 = scmp.eq.s32.totalorder %s25, 1
      %p170 = por %p168, %p169
      %p172 = scmp.ne.s32.totalorder %s155, %s171
      %p173 = scmp.eq.s32.totalorder %s25, 0
      %p174 = por %p172, %p173
      %s176 = sadd.s32 %s175, 1
      %p179 = scmp.eq.s32.totalorder %s19, 1
      %p180 = scmp.ne.s32.totalorder %s175, %s177
      %p181 = scmp.eq.s32.totalorder %s19, 0
      %p182 = por %p180, %p181
      %p183 = scmp.ne.s32.totalorder %s175, %s177
      %p184 = scmp.eq.s32.totalorder %s24, 1
      %p185 = por %p183, %p184
      %p186 = scmp.ne.s32.totalorder %s177, %s178
      %p187 = scmp.eq.s32.totalorder %s24, 0
      %p188 = por %p186, %p187
      %p189 = scmp.ne.s32.totalorder %s177, %s178
      %p190 = scmp.eq.s32.totalorder %s25, 1
      %p191 = por %p189, %p190
      %p193 = scmp.ne.s32.totalorder %s178, %s192
      %p194 = scmp.eq.s32.totalorder %s25, 0
      %p195 = por %p193, %p194
      %s197 = sadd.s32 %s196, 1
      %p200 = scmp.eq.s32.totalorder %s19, 1
      %p201 = scmp.ne.s32.totalorder %s196, %s198
      %p202 = scmp.eq.s32.totalorder %s19, 0
      %p203 = por %p201, %p202
      %p204 = scmp.ne.s32.totalorder %s196, %s198
      %p205 = scmp.eq.s32.totalorder %s24, 1
      %p206 = por %p204, %p205
      %p207 = scmp.ne.s32.totalorder %s198, %s199
      %p208 = scmp.eq.s32.totalorder %s24, 0
      %p209 = por %p207, %p208
      %p210 = scmp.ne.s32.totalorder %s198, %s199
      %p211 = scmp.eq.s32.totalorder %s25, 1
      %p212 = por %p210, %p211
      %p214 = scmp.ne.s32.totalorder %s199, %s213
      %p215 = scmp.eq.s32.totalorder %s25, 0
      %p216 = por %p214, %p215
      %s218 = sadd.s32 %s217, 1
      %p221 = scmp.eq.s32.totalorder %s19, 1
      %p222 = scmp.ne.s32.totalorder %s217, %s219
      %p223 = scmp.eq.s32.totalorder %s19, 0
      %p224 = por %p222, %p223
      %p225 = scmp.ne.s32.totalorder %s217, %s219
      %p226 = scmp.eq.s32.totalorder %s24, 1
      %p227 = por %p225, %p226
      %p228 = scmp.ne.s32.totalorder %s219, %s220
      %p229 = scmp.eq.s32.totalorder %s24, 0
      %p230 = por %p228, %p229
      %p231 = scmp.ne.s32.totalorder %s219, %s220
      %p232 = scmp.eq.s32.totalorder %s25, 1
      %p233 = por %p231, %p232
      %p235 = scmp.ne.s32.totalorder %s220, %s234
      %p236 = scmp.eq.s32.totalorder %s25, 0
      %p237 = por %p235, %p236
      %s239 = sadd.s32 %s238, 1
      %p242 = scmp.eq.s32.totalorder %s19, 1
      %p243 = scmp.ne.s32.totalorder %s238, %s240
      %p244 = scmp.eq.s32.totalorder %s19, 0
      %p245 = por %p243, %p244
      %p246 = scmp.ne.s32.totalorder %s238, %s240
      %p247 = scmp.eq.s32.totalorder %s24, 1
      %p248 = por %p246, %p247
      %p249 = scmp.ne.s32.totalorder %s240, %s241
      %p250 = scmp.eq.s32.totalorder %s24, 0
      %p251 = por %p249, %p250
      %p252 = scmp.ne.s32.totalorder %s240, %s241
      %p253 = scmp.eq.s32.totalorder %s25, 1
      %p254 = por %p252, %p253
      %p256 = scmp.ne.s32.totalorder %s241, %s255
      %p257 = scmp.eq.s32.totalorder %s25, 0
      %p258 = por %p256, %p257
      %s260 = sadd.s32 %s259, 1
      %p263 = scmp.eq.s32.totalorder %s19, 1
      %p264 = scmp.ne.s32.totalorder %s259, %s261
      %p265 = scmp.eq.s32.totalorder %s19, 0
      %p266 = por %p264, %p265
      %p267 = scmp.ne.s32.totalorder %s259, %s261
      %p268 = scmp.eq.s32.totalorder %s24, 1
      %p269 = por %p267, %p268
      %p270 = scmp.ne.s32.totalorder %s261, %s262
      %p271 = scmp.eq.s32.totalorder %s24, 0
      %p272 = por %p270, %p271
      %p273 = scmp.ne.s32.totalorder %s261, %s262
      %p274 = scmp.eq.s32.totalorder %s25, 1
      %p275 = por %p273, %p274
      %p277 = scmp.ne.s32.totalorder %s262, %s276
      %p278 = scmp.eq.s32.totalorder %s25, 0
      %p279 = por %p277, %p278
      %s280 = ssub.s32 %s26, %s38
      %s281 = ssub.s32 %s27, %s34
      %s282 = sor.u32 %s280, %s281
      %p283 = scmp.eq.s32.totalorder %s282, 0
      %s285 = sadd.s32 %s284, 1
      %s286 = scalar_select %p283, %s284, %s285
      %p289 = pneg %p283
      %p290 = scmp.eq.s32.totalorder %s19, 1
      %p291 = por %p289, %p290
      %p292 = scmp.ne.s32.totalorder %s284, %s287
      %p293 = scmp.eq.s32.totalorder %s19, 0
      %p294 = por %p292, %p293
      %p295 = scmp.ne.s32.totalorder %s284, %s287
      %p296 = scmp.eq.s32.totalorder %s24, 1
      %p297 = por %p295, %p296
      %p298 = scmp.ne.s32.totalorder %s287, %s288
      %p299 = scmp.eq.s32.totalorder %s24, 0
      %p300 = por %p298, %p299
      %p301 = scmp.ne.s32.totalorder %s287, %s288
      %p302 = scmp.eq.s32.totalorder %s25, 1
      %p303 = por %p301, %p302
      %p305 = scmp.ne.s32.totalorder %s288, %s304
      %p306 = scmp.eq.s32.totalorder %s25, 0
      %p307 = por %p305, %p306
      %p308 = scmp.le.s32.totalorder 1, %s19
      %p309 = scmp.lt.s32.totalorder %s19, 3
      %p310 = pnand %p308, %p309
      %p311 = pneg %p310
      // Predicated region
      $region9: #{dual_node_edge_block.5} parent=5 // pred_check
        _
      $region10: #{dual_node_edge_block.5} parent=5 // pred_check_branch
        %313 = sbr.rel (%p310) target = $region12
      $region11: #{dual_node_edge_block.5} parent=5 // pred_region
        %s314 = ssub.s32 %s19, 1
        // Predicated region
        $region13: #{dual_node_edge_block.5} parent=11 // pred_check
          %p315 = pneg %p188
        $region14: #{dual_node_edge_block.5} parent=11 // pred_check_branch
          %317 = sbr.rel (%p315) target = $region16
        $region15: #{dual_node_edge_block.5} parent=11 // pred_region
          _
        $region16: #{dual_node_edge_block.5} parent=11 // pred_fallthru
          _
        // Predicated region
        $region17: #{dual_node_edge_block.5} parent=11 // pred_check
          %p318 = pneg %p209
        $region18: #{dual_node_edge_block.5} parent=11 // pred_check_branch
          %320 = sbr.rel (%p318) target = $region20
        $region19: #{dual_node_edge_block.5} parent=11 // pred_region
          _
        $region20: #{dual_node_edge_block.5} parent=11 // pred_fallthru
          _
        // Predicated region
        $region21: #{dual_node_edge_block.5} parent=11 // pred_check
          %p321 = pneg %p230
        $region22: #{dual_node_edge_block.5} parent=11 // pred_check_branch
          %323 = sbr.rel (%p321) target = $region24
        $region23: #{dual_node_edge_block.5} parent=11 // pred_region
          _
        $region24: #{dual_node_edge_block.5} parent=11 // pred_fallthru
          _
        // Predicated region
        $region25: #{dual_node_edge_block.5} parent=11 // pred_check
          %p324 = pneg %p251
        $region26: #{dual_node_edge_block.5} parent=11 // pred_check_branch
          %326 = sbr.rel (%p324) target = $region28
        $region27: #{dual_node_edge_block.5} parent=11 // pred_region
          _
        $region28: #{dual_node_edge_block.5} parent=11 // pred_fallthru
          _
        // Predicated region
        $region29: #{dual_node_edge_block.5} parent=11 // pred_check
          %p327 = pneg %p272
        $region30: #{dual_node_edge_block.5} parent=11 // pred_check_branch
          %329 = sbr.rel (%p327) target = $region32
        $region31: #{dual_node_edge_block.5} parent=11 // pred_region
          _
        $region32: #{dual_node_edge_block.5} parent=11 // pred_fallthru
          _
      $region12: #{dual_node_edge_block.5} parent=5 // pred_fallthru
        _
      %p330 = scmp.lt.s32.totalorder %s19, 2
      // Predicated region
      $region33: #{dual_node_edge_block.5} parent=5 // pred_check
        %p331 = pneg %p330
      $region34: #{dual_node_edge_block.5} parent=5 // pred_check_branch
        %333 = sbr.rel (%p331) target = $region36
      $region35: #{dual_node_edge_block.5} parent=5 // pred_region
        // Predicated region
        $region37: #{dual_node_edge_block.5} parent=35 // pred_check
          %p334 = pneg %p53
        $region38: #{dual_node_edge_block.5} parent=35 // pred_check_branch
          %336 = sbr.rel (%p334) target = $region40
        $region39: #{dual_node_edge_block.5} parent=35 // pred_region
          %p337 = scmp.lt.s32.totalorder %s26, 1
          %s338 = scalar_select %p337, %s26, 1
          %p339 = scmp.lt.s32.totalorder %s27, 0
          %s340 = scalar_select %p339, %s27, 0
          %s341 = sadd.s32 %s340, %s338
          %s342 = smul.addr %s341, 8
          %s343 = scalar_lea.vmem %s0, %s342
        $region40: #{dual_node_edge_block.5} parent=35 // pred_fallthru
          _
        // Predicated region
        $region41: #{dual_node_edge_block.5} parent=35 // pred_check
          %p344 = pneg %p81
        $region42: #{dual_node_edge_block.5} parent=35 // pred_check_branch
          %346 = sbr.rel (%p344) target = $region44
        $region43: #{dual_node_edge_block.5} parent=35 // pred_region
          %p347 = scmp.lt.s32.totalorder %s26, 1
          %s348 = scalar_select %p347, %s26, 1
          %p349 = scmp.lt.s32.totalorder %s27, 0
          %s350 = scalar_select %p349, %s27, 0
          %s351 = sadd.s32 %s350, %s348
          %s352 = smul.addr %s351, 8
          %s353 = scalar_lea.vmem %s1, %s352
        $region44: #{dual_node_edge_block.5} parent=35 // pred_fallthru
          _
        // Predicated region
        $region45: #{dual_node_edge_block.5} parent=35 // pred_check
          %p354 = pneg %p109
        $region46: #{dual_node_edge_block.5} parent=35 // pred_check_branch
          %356 = sbr.rel (%p354) target = $region48
        $region47: #{dual_node_edge_block.5} parent=35 // pred_region
          %p357 = scmp.lt.s32.totalorder %s26, 1
          %s358 = scalar_select %p357, %s26, 1
          %p359 = scmp.lt.s32.totalorder %s27, 0
          %s360 = scalar_select %p359, %s27, 0
          %s361 = sadd.s32 %s360, %s358
          %s362 = smul.addr %s361, 8
          %s363 = scalar_lea.vmem %s2, %s362
        $region48: #{dual_node_edge_block.5} parent=35 // pred_fallthru
          _
        // Predicated region
        $region49: #{dual_node_edge_block.5} parent=35 // pred_check
          %p364 = pneg %p135
        $region50: #{dual_node_edge_block.5} parent=35 // pred_check_branch
          %366 = sbr.rel (%p364) target = $region52
        $region51: #{dual_node_edge_block.5} parent=35 // pred_region
          %p367 = scmp.lt.s32.totalorder %s26, 1
          %s368 = scalar_select %p367, %s26, 1
          %s369 = scalar_lea.vmem %s3, %s368
        $region52: #{dual_node_edge_block.5} parent=35 // pred_fallthru
          _
        // Predicated region
        $region53: #{dual_node_edge_block.5} parent=35 // pred_check
          %p370 = pneg %p161
        $region54: #{dual_node_edge_block.5} parent=35 // pred_check_branch
          %372 = sbr.rel (%p370) target = $region56
        $region55: #{dual_node_edge_block.5} parent=35 // pred_region
          %p373 = scmp.lt.s32.totalorder %s26, 1
          %s374 = scalar_select %p373, %s26, 1
          %s375 = scalar_lea.vmem %s4, %s374
        $region56: #{dual_node_edge_block.5} parent=35 // pred_fallthru
          _
      $region36: #{dual_node_edge_block.5} parent=5 // pred_fallthru
        _
      %p376 = scmp.le.s32.totalorder 1, %s19
      %p377 = scmp.lt.s32.totalorder %s19, 3
      %p378 = pnand %p376, %p377
      %p379 = pneg %p378
      // Predicated region
      $region57: #{dual_node_edge_block.5} parent=5 // pred_check
        _
      $region58: #{dual_node_edge_block.5} parent=5 // pred_check_branch
        %381 = sbr.rel (%p378) target = $region60
      $region59: #{dual_node_edge_block.5} parent=5 // pred_region
        %s382 = ssub.s32 %s19, 1
        %p383 = scmp.lt.s32.totalorder %s28, 1
        %s384 = scalar_select %p383, %s28, 1
        %p385 = scmp.lt.s32.totalorder %s29, 0
        %s386 = scalar_select %p385, %s29, 0
        %s387 = sadd.s32 %s386, %s384
        %s388 = smul.addr %s387, 8
        %s389 = scalar_lea.vmem %s0, %s388
        %p390 = pneg %p59
        %p391 = pneg %p56
        %p392 = scmp.lt.s32.totalorder %s28, 1
        %s393 = scalar_select %p392, %s28, 1
        %p394 = scmp.lt.s32.totalorder %s29, 0
        %s395 = scalar_select %p394, %s29, 0
        %s396 = sadd.s32 %s395, %s393
        %s397 = smul.addr %s396, 8
        %s398 = scalar_lea.vmem %s1, %s397
        %p399 = pneg %p87
        %p400 = pneg %p84
        %p401 = scmp.lt.s32.totalorder %s28, 1
        %s402 = scalar_select %p401, %s28, 1
        %p403 = scmp.lt.s32.totalorder %s29, 0
        %s404 = scalar_select %p403, %s29, 0
        %s405 = sadd.s32 %s404, %s402
        %s406 = smul.addr %s405, 8
        %s407 = scalar_lea.vmem %s2, %s406
        %p408 = pneg %p115
        %p409 = pneg %p112
        %p410 = scmp.lt.s32.totalorder %s28, 1
        %s411 = scalar_select %p410, %s28, 1
        %s412 = scalar_lea.vmem %s3, %s411
        %p413 = pneg %p141
        %p414 = pneg %p138
        %p415 = scmp.lt.s32.totalorder %s28, 1
        %s416 = scalar_select %p415, %s28, 1
        %s417 = scalar_lea.vmem %s4, %s416
        %p418 = pneg %p167
        %p419 = pneg %p164
        %p420 = pneg %p188
        %p421 = pneg %p185
        %p422 = pneg %p209
        %p423 = pneg %p206
        %p424 = pneg %p230
        %p425 = pneg %p227
        %p426 = pneg %p251
        %p427 = pneg %p248
        %p428 = pneg %p272
        %p429 = pneg %p269
        %p430 = pneg %p300
        %p431 = pneg %p297
        %s432 = sand.u32 %s287, 1
        %s433 = scalar_lea.sflag [#allocation3], %s432
        %s434 = sand.u32 %s287, 1
        %s435 = smul.addr %s434, 8
        %s436 = scalar_lea.vmem [#allocation2], %s435
        %p437 = scmp.lt.s32.totalorder %s28, 1
        %s438 = scalar_select %p437, %s28, 1
        %p439 = scmp.lt.s32.totalorder %s29, 0
        %s440 = scalar_select %p439, %s29, 0
        %s441 = sadd.s32 %s440, %s438
        %s442 = smul.addr %s441, 8
        %s443 = scalar_lea.vmem %s0, %s442
        %p444 = scmp.lt.s32.totalorder %s28, 1
        %s445 = scalar_select %p444, %s28, 1
        %p446 = scmp.lt.s32.totalorder %s29, 0
        %s447 = scalar_select %p446, %s29, 0
        %s448 = sadd.s32 %s447, %s445
        %s449 = smul.addr %s448, 8
        %s450 = scalar_lea.vmem %s1, %s449
        %p451 = scmp.lt.s32.totalorder %s28, 1
        %s452 = scalar_select %p451, %s28, 1
        %p453 = scmp.lt.s32.totalorder %s29, 0
        %s454 = scalar_select %p453, %s29, 0
        %s455 = sadd.s32 %s454, %s452
        %s456 = smul.addr %s455, 8
        %s457 = scalar_lea.vmem %s2, %s456
        %p458 = scmp.lt.s32.totalorder %s28, 1
        %s459 = scalar_select %p458, %s28, 1
        %s460 = scalar_lea.vmem %s3, %s459
        %p461 = scmp.lt.s32.totalorder %s28, 1
        %s462 = scalar_select %p461, %s28, 1
        %s463 = scalar_lea.vmem %s4, %s462
        %v465 = vld [vmem:[%s443] sm:$0xff]
        %v466 = vld [vmem:[%s450] sm:$0xff]
        %v467 = vpack.c.bf16 %v465, %v465
        %v468 = vld [vmem:[%s5] sm:$0xf]
        %v469 = vld [vmem:[%s5 + $0x4] sm:$0xf]
        %v470 = vld [vmem:[%s5 + $0x8] sm:$0xf]
        %v471 = vld [vmem:[%s5 + $0xc] sm:$0xf]
        %v472 = vpack.c.bf16 %v466, %v466
        %v473 = vld [vmem:[%s6] sm:$0xf]
        %v474 = vld [vmem:[%s6 + $0x4] sm:$0xf]
        %v475 = vld [vmem:[%s6 + $0x8] sm:$0xf]
        %v476 = vld [vmem:[%s6 + $0xc] sm:$0xf]
        %v481 = vunpack.c.l.b16 %v473
        %v482 = vunpack.c.l.b16 %v474
        %v483 = vunpack.c.l.b16 %v475
        %v484 = vunpack.c.l.b16 %v476
        %v485 = vpack.c.b16 %v482, %v481
        %v486 = vpack.c.b16 %v484, %v483
        %vm489 = vcmask 261120
        %v491 = vsel %vm489, %v472, 0
        %493 = vmatprep.subr.bf16.mxu0 0
        %494 = vmatpush1.bf16.msra.mxu0 %v485
        %495 = vmatprep.subr.bf16.mxu0 0
        %496 = vmatpush1.bf16.msra.mxu0 %v486
        %497 = vmatprep.subr.bf16.mxu0 0
        %498 = vmatpush1.bf16.msra.mxu0 0
        %499 = vmatprep.subr.bf16.mxu0 0
        %500 = vmatpush1.bf16.msra.mxu0 0
        %501 = vmatprep.subr.bf16.mxu0 0
        %502 = vmatpush1.bf16.msra.mxu0 0
        %503 = vmatprep.subr.bf16.mxu0 0
        %504 = vmatpush1.bf16.msra.mxu0 0
        %505 = vmatprep.subr.bf16.mxu0 0
        %506 = vmatpush1.bf16.msra.mxu0 0
        %507 = vmatprep.subr.bf16.mxu0 0
        %508 = vmatpush1.bf16.msra.mxu0 0
        %509 = vmatprep.subr.bf16.mxu0 0
        %510 = vmatpush1.bf16.msra.mxu0 0
        %511 = vmatprep.subr.bf16.mxu0 0
        %512 = vmatpush1.bf16.msra.mxu0 0
        %513 = vmatprep.subr.bf16.mxu0 0
        %514 = vmatpush1.bf16.msra.mxu0 0
        %515 = vmatprep.subr.bf16.mxu0 0
        %516 = vmatpush1.bf16.msra.mxu0 0
        %517 = vmatprep.subr.bf16.mxu0 0
        %518 = vmatpush1.bf16.msra.mxu0 0
        %519 = vmatprep.subr.bf16.mxu0 0
        %520 = vmatpush1.bf16.msra.mxu0 0
        %521 = vmatprep.subr.bf16.mxu0 0
        %522 = vmatpush1.bf16.msra.mxu0 0
        %523 = vmatprep.subr.bf16.mxu0 0
        %524 = vmatpush1.bf16.msra.mxu0 0
        %525 = vmatprep.mubr.bf16.mxu0 0
        %526 = vmatmul.mubr.bf16.gmra.mrb[0].mxu0 %v491
        %v527 = vpop.f32.mrb[0].mxu0
        %v528 = vadd.f32 0.0, %v527
        %v529 = vpop.f32.mrb[0].mxu0
        %v530 = vpop.f32.mrb[0].mxu0
        %v531 = vpop.f32.mrb[0].mxu0
        %532 = vdwg.mxu0
        %v537 = vunpack.c.l.b16 %v468
        %v538 = vunpack.c.l.b16 %v469
        %v539 = vunpack.c.l.b16 %v470
        %v540 = vunpack.c.l.b16 %v471
        %v541 = vpack.c.b16 %v538, %v537
        %v542 = vpack.c.b16 %v540, %v539
        %v546 = vsel %vm489, %v467, 0
        %548 = vmatprep.subr.bf16.mxu0 0
        %549 = vmatpush1.bf16.msra.mxu0 %v541
        %550 = vmatprep.subr.bf16.mxu0 0
        %551 = vmatpush1.bf16.msra.mxu0 %v542
        %552 = vmatprep.subr.bf16.mxu0 0
        %553 = vmatpush1.bf16.msra.mxu0 0
        %554 = vmatprep.subr.bf16.mxu0 0
        %555 = vmatpush1.bf16.msra.mxu0 0
        %556 = vmatprep.subr.bf16.mxu0 0
        %557 = vmatpush1.bf16.msra.mxu0 0
        %558 = vmatprep.subr.bf16.mxu0 0
        %559 = vmatpush1.bf16.msra.mxu0 0
        %560 = vmatprep.subr.bf16.mxu0 0
        %561 = vmatpush1.bf16.msra.mxu0 0
        %562 = vmatprep.subr.bf16.mxu0 0
        %563 = vmatpush1.bf16.msra.mxu0 0
        %564 = vmatprep.subr.bf16.mxu0 0
        %565 = vmatpush1.bf16.msra.mxu0 0
        %566 = vmatprep.subr.bf16.mxu0 0
        %567 = vmatpush1.bf16.msra.mxu0 0
        %568 = vmatprep.subr.bf16.mxu0 0
        %569 = vmatpush1.bf16.msra.mxu0 0
        %570 = vmatprep.subr.bf16.mxu0 0
        %571 = vmatpush1.bf16.msra.mxu0 0
        %572 = vmatprep.subr.bf16.mxu0 0
        %573 = vmatpush1.bf16.msra.mxu0 0
        %574 = vmatprep.subr.bf16.mxu0 0
        %575 = vmatpush1.bf16.msra.mxu0 0
        %576 = vmatprep.subr.bf16.mxu0 0
        %577 = vmatpush1.bf16.msra.mxu0 0
        %578 = vmatprep.subr.bf16.mxu0 0
        %579 = vmatpush1.bf16.msra.mxu0 0
        %580 = vmatprep.mubr.bf16.mxu0 0
        %581 = vmatmul.mubr.bf16.gmra.mrb[0].mxu0 %v546
        %v582 = vpop.f32.mrb[0].mxu0
        %v583 = vadd.f32 %v528, %v582
        %v584 = vpop.f32.mrb[0].mxu0
        %v585 = vpop.f32.mrb[0].mxu0
        %v586 = vpop.f32.mrb[0].mxu0
        %587 = vdwg.mxu0
        %v588 = vld [vmem:[%s7] sm:$0x1]
        %v590 = vlaneseq
        %v591 = vshrl.u32 %v590, 7
        %v592 = vsub.s32 0, %v591
        %v593 = vrot.slane %v588, %v592
        %v595 = vadd.f32 %v583, %v593
        %v596 = vxor.u32 %v595, 2147483648
        %v597 = vmul.f32 %v596, 1.442695
        %v598 = vpow.pop %v597
        %v599 = vadd.f32 %v598, 1.0
        %v600 = vrcp.pop %v599
        %v601 = vmul.f32 1.0, %v600
        %v602 = vld [vmem:[%s460] sm:$0x1]
        %v603 = vld [vmem:[%s463] sm:$0x1]
        %v604 = vadd.f32 %v603, 1.0
        %v606 = vlaneseq
        %v607 = vshrl.u32 %v606, 7
        %v608 = vsub.s32 0, %v607
        %v609 = vrot.slane %v604, %v608
        %v611 = vmul.f32 %v609, %v466
        %v613 = vlaneseq
        %v614 = vshrl.u32 %v613, 7
        %v615 = vsub.s32 0, %v614
        %v616 = vrot.slane %v602, %v615
        %v618 = vadd.f32 %v616, %v611
        %v619 = vmul.f32 %v601, %v465
        %v620 = vsub.f32 1.0, %v601
        %v621 = vmul.f32 %v620, %v618
        %v622 = vadd.f32 %v619, %v621
        %v623 = vpack.c.bf16 %v622, %v622
        %v624 = vld [vmem:[%s8] sm:$0xf]
        %v625 = vld [vmem:[%s8 + $0x4] sm:$0xf]
        %v626 = vld [vmem:[%s8 + $0x8] sm:$0xf]
        %v627 = vld [vmem:[%s8 + $0xc] sm:$0xf]
        %v628 = vld [vmem:[%s9] sm:$0x1]
        %v630 = vlaneseq
        %v631 = vshrl.u32 %v630, 7
        %v632 = vsub.s32 0, %v631
        %v633 = vrot.slane %v628, %v632
        %v639 = vunpack.c.l.b16 %v624
        %v640 = vunpack.c.l.b16 %v625
        %v641 = vunpack.c.l.b16 %v626
        %v642 = vunpack.c.l.b16 %v627
        %v643 = vpack.c.b16 %v640, %v639
        %v644 = vpack.c.b16 %v642, %v641
        %v648 = vsel %vm489, %v623, 0
        %650 = vmatprep.subr.bf16.mxu0 0
        %651 = vmatpush1.bf16.msra.mxu0 %v643
        %652 = vmatprep.subr.bf16.mxu0 0
        %653 = vmatpush1.bf16.msra.mxu0 %v644
        %654 = vmatprep.subr.bf16.mxu0 0
        %655 = vmatpush1.bf16.msra.mxu0 0
        %656 = vmatprep.subr.bf16.mxu0 0
        %657 = vmatpush1.bf16.msra.mxu0 0
        %658 = vmatprep.subr.bf16.mxu0 0
        %659 = vmatpush1.bf16.msra.mxu0 0
        %660 = vmatprep.subr.bf16.mxu0 0
        %661 = vmatpush1.bf16.msra.mxu0 0
        %662 = vmatprep.subr.bf16.mxu0 0
        %663 = vmatpush1.bf16.msra.mxu0 0
        %664 = vmatprep.subr.bf16.mxu0 0
        %665 = vmatpush1.bf16.msra.mxu0 0
        %666 = vmatprep.subr.bf16.mxu0 0
        %667 = vmatpush1.bf16.msra.mxu0 0
        %668 = vmatprep.subr.bf16.mxu0 0
        %669 = vmatpush1.bf16.msra.mxu0 0
        %670 = vmatprep.subr.bf16.mxu0 0
        %671 = vmatpush1.bf16.msra.mxu0 0
        %672 = vmatprep.subr.bf16.mxu0 0
        %673 = vmatpush1.bf16.msra.mxu0 0
        %674 = vmatprep.subr.bf16.mxu0 0
        %675 = vmatpush1.bf16.msra.mxu0 0
        %676 = vmatprep.subr.bf16.mxu0 0
        %677 = vmatpush1.bf16.msra.mxu0 0
        %678 = vmatprep.subr.bf16.mxu0 0
        %679 = vmatpush1.bf16.msra.mxu0 0
        %680 = vmatprep.subr.bf16.mxu0 0
        %681 = vmatpush1.bf16.msra.mxu0 0
        %682 = vmatprep.mubr.bf16.mxu0 0
        %683 = vmatmul.mubr.bf16.gmra.mrb[0].mxu0 %v648
        %v684 = vpop.f32.mrb[0].mxu0
        %v685 = vadd.f32 %v633, %v684
        %v686 = vpop.f32.mrb[0].mxu0
        %v687 = vpop.f32.mrb[0].mxu0
        %v688 = vpop.f32.mrb[0].mxu0
        %689 = vdwg.mxu0
        %v690 = vld [vmem:[%s457] sm:$0xff]
        %692 = vset.pattern.permute.xlu0 0
        %693 = vperm.xlu0 %692, %v690
        %v694 = vpop.permute.xlu0 %693
        %v696 = vmul.f32 %v685, %v694
        %697 = vst.msk [vmem:[%s436] sm:$0xff] %vm489, %v696
        %s698 = sand.u32 %s287, 1
        %s699 = scalar_lea.sflag [#allocation3], %s698
        %s700 = sand.u32 %s287, 1
        %s701 = smul.addr %s700, 8
        %s702 = scalar_lea.vmem [#allocation2], %s701
        // Predicated region
        $region61: #{dual_node_edge_block.5} parent=59 // pred_check
          %p703 = pneg %p297
        $region62: #{dual_node_edge_block.5} parent=59 // pred_check_branch
          %705 = sbr.rel (%p703) target = $region64
        $region63: #{dual_node_edge_block.5} parent=59 // pred_region
          %s707 = ssub.s32 128, 128
          %708 = vsyncadd %s699, %s707
          %s709 = sadd.s32 %s29, %s28
          %s710 = smul.addr %s709, 128
          %s711 = scalar_lea.hbm %s10, %s710
          %s713 = sshll.u32 %s702, 4
          %s714 = int_to_ptr.vmem [resolvable:$true] %s713
          %716 = dma.vmem_to_hbm [thread:$0]  %s714, 128, %s711, %s699
        $region64: #{dual_node_edge_block.5} parent=59 // pred_fallthru
          _
      $region60: #{dual_node_edge_block.5} parent=5 // pred_fallthru
        _
      %p717 = scmp.le.s32.totalorder 2, %s19
      // Predicated region
      $region65: #{dual_node_edge_block.5} parent=5 // pred_check
        %p718 = pneg %p717
      $region66: #{dual_node_edge_block.5} parent=5 // pred_check_branch
        %720 = sbr.rel (%p718) target = $region68
      $region67: #{dual_node_edge_block.5} parent=5 // pred_region
        %s721 = ssub.s32 %s19, 2
        // Predicated region
        $region69: #{dual_node_edge_block.5} parent=67 // pred_check
          %p722 = pneg %p303
        $region70: #{dual_node_edge_block.5} parent=67 // pred_check_branch
          %724 = sbr.rel (%p722) target = $region72
        $region71: #{dual_node_edge_block.5} parent=67 // pred_region
          %s725 = sand.u32 %s288, 1
          %s726 = scalar_lea.sflag [#allocation3], %s725
          %s727 = sand.u32 %s288, 1
          %s728 = smul.addr %s727, 8
          %s729 = scalar_lea.vmem [#allocation2], %s728
          %730 = dma.done %s726, 128
        $region72: #{dual_node_edge_block.5} parent=67 // pred_fallthru
          _
      $region68: #{dual_node_edge_block.5} parent=5 // pred_fallthru
        _
    $region6: #{dual_node_edge_block.5} parent=1 // loop_footer
      %s23 = sadd.s32 1, %s19
    $region7: #{dual_node_edge_block.5} parent=1 // loop_footer_branch
      %18 = sbr.rel target = $region3
    $region8: #{dual_node_edge_block.5} parent=1 // loop_exit
      _
    %731 = vsyncpa [#allocation3], 1
    %s732 = scalar_lea.sflag [#allocation3], 1
    %733 = vsyncpa %s732, 1

// kernel: dual_node_edge_block.4
$region0: #{dual_node_edge_block.4}
  #allocation0 [shape = 'u32[]', space=smem, size = 0x4, offset = 0x4, fixed_abs, tag = 'smem constant byte address 0x4 - core index']
  #allocation1 [shape = 'u32[144,128]{1,0:T(1,128)}', space=vmem, size = 0x12000, scoped, tag = 'internal scratch']
  %s0 = inlined_call_operand.hbm [shape: f32[2,8,192], index: 0, kind: input, shape index: {}, may-alias: {0,1}]
  %s1 = inlined_call_operand.hbm [shape: f32[2,8,192], index: 1, kind: input, shape index: {}, may-alias: {0,1}]
  %s2 = inlined_call_operand.hbm [shape: f32[2,8,8,16], index: 2, kind: input, shape index: {}, may-alias: {2,3}]
  %s3 = inlined_call_operand.hbm [shape: f32[2,8,8,16], index: 3, kind: input, shape index: {}, may-alias: {2,3}]
  %s4 = inlined_call_operand.hbm [shape: f32[2,8,1], index: 4, kind: input, shape index: {}, may-alias: {4,5}]
  %s5 = inlined_call_operand.hbm [shape: f32[2,8,1], index: 5, kind: input, shape index: {}, may-alias: {4,5}]
  %s6 = inlined_call_operand.hbm [shape: f32[2,1,32], index: 6, kind: input, shape index: {}]
  %s7 = inlined_call_operand.hbm [shape: f32[2,1,32], index: 7, kind: input, shape index: {}]
  %s8 = inlined_call_operand.hbm [shape: bf16[16,96], index: 8, kind: input, shape index: {}]
  %s9 = inlined_call_operand.hbm [shape: f32[1,96], index: 9, kind: input, shape index: {}]
  %s10 = inlined_call_operand.hbm [shape: bf16[16,96], index: 10, kind: input, shape index: {}]
  %s11 = inlined_call_operand.hbm [shape: f32[1,96], index: 11, kind: input, shape index: {}]
  %s12 = inlined_call_operand.hbm [shape: bf16[32,16], index: 12, kind: input, shape index: {}]
  %s13 = inlined_call_operand.hbm [shape: f32[1,16], index: 13, kind: input, shape index: {}]
  %s14 = inlined_call_operand.hbm [shape: f32[2,8,8,16], index: 14, kind: output, shape index: {0}]
  %s15 = inlined_call_operand.hbm [shape: f32[2,8,32], index: 15, kind: output, shape index: {1}]
  %s16 = inlined_call_operand.hbm [shape: f32[2,8,64], index: 16, kind: output, shape index: {2}]
  %17 = xla_tuple %s14, %s15, %s16
  %s18 = sld [smem:[#allocation0]]
  $region161: #{dual_node_edge_block.4} parent=0
    _
  %s20 = ssub.s32 1, %s18
  %s21 = scalar_select 0, %s20, %s18
  $region1: #{dual_node_edge_block.4} parent=0
    #allocation2 [shape = 'u8[16384]{0}', space=vmem, size = 0x4000, scoped, tag = 'input window, operand 0']
    #allocation3 [shape = 's32[2]{0}', space=sflag, size = 0x8, scoped, tag = 'scoped memory for dual_node_edge_block.4']
    #allocation4 [shape = 's32[2]{0}', space=sflag, size = 0x8, scoped, tag = 'scoped memory for dual_node_edge_block.4']
    #allocation5 [shape = 'u8[16384]{0}', space=vmem, size = 0x4000, scoped, tag = 'input window, operand 1']
    #allocation6 [shape = 's32[2]{0}', space=sflag, size = 0x8, scoped, tag = 'scoped memory for dual_node_edge_block.4']
    #allocation7 [shape = 'u8[65536]{0}', space=vmem, size = 0x10000, scoped, tag = 'input window, operand 2']
    #allocation8 [shape = 'u8[65536]{0}', space=vmem, size = 0x10000, scoped, tag = 'input window, operand 3']
    #allocation9 [shape = 's32[2]{0}', space=sflag, size = 0x8, scoped, tag = 'scoped memory for dual_node_edge_block.4']
    #allocation10 [shape = 'u8[8192]{0}', space=vmem, size = 0x2000, scoped, tag = 'input window, operand 4']
    #allocation11 [shape = 'u8[8192]{0}', space=vmem, size = 0x2000, scoped, tag = 'input window, operand 5']
    #allocation12 [shape = 's32[2]{0}', space=sflag, size = 0x8, scoped, tag = 'scoped memory for dual_node_edge_block.4']
    #allocation13 [shape = 'u8[1024]{0}', space=vmem, size = 0x400, scoped, tag = 'input window, operand 6']
    #allocation14 [shape = 'u8[1024]{0}', space=vmem, size = 0x400, scoped, tag = 'input window, operand 7']
    #allocation15 [shape = 's32[2]{0}', space=sflag, size = 0x8, scoped, tag = 'scoped memory for dual_node_edge_block.4']
    #allocation16 [shape = 'u8[4096]{0}', space=vmem, size = 0x1000, scoped, tag = 'input window, operand 8, single buffered']
    #allocation17 [shape = 'u8[512]{0}', space=vmem, size = 0x400, scoped, tag = 'input window, operand 9, single buffered']
    #allocation18 [shape = 's32[1]{0}', space=sflag, size = 0x4, scoped, tag = 'scoped memory for dual_node_edge_block.4']
    #allocation19 [shape = 'u8[4096]{0}', space=vmem, size = 0x1000, scoped, tag = 'input window, operand 10, single buffered']
    #allocation20 [shape = 'u8[512]{0}', space=vmem, size = 0x400, scoped, tag = 'input window, operand 11, single buffered']
    #allocation21 [shape = 's32[1]{0}', space=sflag, size = 0x4, scoped, tag = 'scoped memory for dual_node_edge_block.4']
    #allocation22 [shape = 'u8[8192]{0}', space=vmem, size = 0x2000, scoped, tag = 'input window, operand 12, single buffered']
    #allocation23 [shape = 'u8[512]{0}', space=vmem, size = 0x400, scoped, tag = 'input window, operand 13, single buffered']
    #allocation24 [shape = 's32[1]{0}', space=sflag, size = 0x4, scoped, tag = 'scoped memory for dual_node_edge_block.4']
    #allocation25 [shape = 'u8[65536]{0}', space=vmem, size = 0x10000, scoped, tag = 'output window, operand 0']
    #allocation26 [shape = 'u8[8192]{0}', space=vmem, size = 0x2000, scoped, tag = 'output window, operand 1']
    #allocation27 [shape = 's32[2]{0}', space=sflag, size = 0x8, scoped, tag = 'scoped memory for dual_node_edge_block.4']
    #allocation28 [shape = 'u8[8192]{0}', space=vmem, size = 0x2000, scoped, tag = 'output window, operand 2']
    %22 = vsyncpa [#allocation3], 0
    %s23 = scalar_lea.sflag [#allocation3], 1
    %24 = vsyncpa %s23, 0
    %25 = vsyncpa [#allocation6], 0
    %s26 = scalar_lea.sflag [#allocation6], 1
    %27 = vsyncpa %s26, 0
    %28 = vsyncpa [#allocation9], 0
    %s29 = scalar_lea.sflag [#allocation9], 1
    %30 = vsyncpa %s29, 0
    %31 = vsyncpa [#allocation12], 0
    %s32 = scalar_lea.sflag [#allocation12], 1
    %33 = vsyncpa %s32, 0
    %34 = vsyncpa [#allocation15], 0
    %s35 = scalar_lea.sflag [#allocation15], 1
    %36 = vsyncpa %s35, 0
    %37 = vsyncpa [#allocation18], 0
    %38 = vsyncpa [#allocation21], 0
    %39 = vsyncpa [#allocation24], 0
    %40 = vsyncpa [#allocation4], 0
    %s41 = scalar_lea.sflag [#allocation4], 1
    %42 = vsyncpa %s41, 0
    %43 = vsyncpa [#allocation27], 0
    %s44 = scalar_lea.sflag [#allocation27], 1
    %45 = vsyncpa %s44, 0
    loop: start=0, step=1, limit=4
    $region2: #{dual_node_edge_block.4} parent=1 // loop_pre_header
      _
    $region3: #{dual_node_edge_block.4} parent=1 // loop_header
      %s47 = sphi 0, %s51
      %p48 = scmp.ge.s32.totalorder %s47, 4
      %s54 = sphi 0, %s66
      %s55 = sphi 0, %s62
      %s56 = sphi 0, %s54
      %s57 = sphi 0, %s55
      %s58 = sphi 0, %s56
      %s59 = sphi 0, %s57
      %s71 = sphi 0, %s73
      %s74 = sphi 0, %s71
      %s75 = sphi 0, %s74
      %s91 = sphi 0, %s75
      %s97 = sphi 0, %s99
      %s100 = sphi 0, %s97
      %s101 = sphi 0, %s100
      %s117 = sphi 0, %s101
      %s125 = sphi 0, %s127
      %s128 = sphi 0, %s125
      %s129 = sphi 0, %s128
      %s145 = sphi 0, %s129
      %s153 = sphi 0, %s155
      %s156 = sphi 0, %s153
      %s157 = sphi 0, %s156
      %s173 = sphi 0, %s157
      %s181 = sphi 0, %s183
      %s184 = sphi 0, %s181
      %s185 = sphi 0, %s184
      %s201 = sphi 0, %s185
      %s207 = sphi 0, %s209
      %s210 = sphi 0, %s207
      %s211 = sphi 0, %s210
      %s227 = sphi 0, %s211
      %s233 = sphi 0, %s235
      %s236 = sphi 0, %s233
      %s237 = sphi 0, %s236
      %s253 = sphi 0, %s237
      %s259 = sphi 0, %s261
      %s262 = sphi 0, %s259
      %s263 = sphi 0, %s262
      %s279 = sphi 0, %s263
      %s283 = sphi 0, %s283
      %s285 = sphi 0, %s283
      %s286 = sphi 0, %s285
      %s300 = sphi 0, %s286
      %s304 = sphi 0, %s304
      %s306 = sphi 0, %s304
      %s307 = sphi 0, %s306
      %s321 = sphi 0, %s307
      %s325 = sphi 0, %s325
      %s327 = sphi 0, %s325
      %s328 = sphi 0, %s327
      %s342 = sphi 0, %s328
      %s346 = sphi 0, %s346
      %s348 = sphi 0, %s346
      %s349 = sphi 0, %s348
      %s363 = sphi 0, %s349
      %s367 = sphi 0, %s367
      %s369 = sphi 0, %s367
      %s370 = sphi 0, %s369
      %s384 = sphi 0, %s370
      %s388 = sphi 0, %s388
      %s390 = sphi 0, %s388
      %s391 = sphi 0, %s390
      %s405 = sphi 0, %s391
      %s413 = sphi 0, %s415
      %s416 = sphi 0, %s413
      %s417 = sphi 0, %s416
      %s433 = sphi 0, %s417
      %s441 = sphi 0, %s443
      %s444 = sphi 0, %s441
      %s445 = sphi 0, %s444
      %s461 = sphi 0, %s445
      %s469 = sphi 0, %s471
      %s472 = sphi 0, %s469
      %s473 = sphi 0, %s472
      %s489 = sphi 0, %s473
    $region4: #{dual_node_edge_block.4} parent=1 // loop_header_branch
      %50 = sbr.rel (%p48) target = $region8
    $region5: #{dual_node_edge_block.4} parent=1 // loop_body
      %s52 = ssub.s32 %s47, 1
      %s53 = ssub.s32 %s47, 2
      %s60 = sadd.s32 1, %s55
      %p61 = scmp.ge.s32.totalorder %s60, 1
      %s62 = scalar_select %p61, 0, %s60
      %s63 = sadd.s32 1, %s54
      %s64 = scalar_select %p61, %s63, %s54
      %p65 = scmp.ge.s32.totalorder %s64, 2
      %s66 = scalar_select %p65, 0, %s64
      %s67 = ssub.s32 %s54, %s66
      %s68 = ssub.s32 %s55, %s62
      %s69 = sor.u32 %s67, %s68
      %p70 = scmp.eq.s32.totalorder %s69, 0
      %s72 = sadd.s32 %s71, 1
      %s73 = scalar_select %p70, %s71, %s72
      %p76 = pneg %p70
      %p77 = scmp.eq.s32.totalorder %s47, 1
      %p78 = por %p76, %p77
      %p79 = scmp.ne.s32.totalorder %s71, %s74
      %p80 = scmp.eq.s32.totalorder %s47, 0
      %p81 = por %p79, %p80
      %p82 = scmp.ne.s32.totalorder %s71, %s74
      %p83 = scmp.eq.s32.totalorder %s52, 1
      %p84 = por %p82, %p83
      %p85 = scmp.ne.s32.totalorder %s74, %s75
      %p86 = scmp.eq.s32.totalorder %s52, 0
      %p87 = por %p85, %p86
      %p88 = scmp.ne.s32.totalorder %s74, %s75
      %p89 = scmp.eq.s32.totalorder %s53, 1
      %p90 = por %p88, %p89
      %p92 = scmp.ne.s32.totalorder %s75, %s91
      %p93 = scmp.eq.s32.totalorder %s53, 0
      %p94 = por %p92, %p93
      %s95 = ssub.s32 %s54, %s66
      %p96 = scmp.eq.s32.totalorder %s95, 0
      %s98 = sadd.s32 %s97, 1
      %s99 = scalar_select %p96, %s97, %s98
      %p102 = pneg %p96
      %p103 = scmp.eq.s32.totalorder %s47, 1
      %p104 = por %p102, %p103
      %p105 = scmp.ne.s32.totalorder %s97, %s100
      %p106 = scmp.eq.s32.totalorder %s47, 0
      %p107 = por %p105, %p106
      %p108 = scmp.ne.s32.totalorder %s97, %s100
      %p109 = scmp.eq.s32.totalorder %s52, 1
      %p110 = por %p108, %p109
      %p111 = scmp.ne.s32.totalorder %s100, %s101
      %p112 = scmp.eq.s32.totalorder %s52, 0
      %p113 = por %p111, %p112
      %p114 = scmp.ne.s32.totalorder %s100, %s101
      %p115 = scmp.eq.s32.totalorder %s53, 1
      %p116 = por %p114, %p115
      %p118 = scmp.ne.s32.totalorder %s101, %s117
      %p119 = scmp.eq.s32.totalorder %s53, 0
      %p120 = por %p118, %p119
      %s121 = ssub.s32 %s54, %s66
      %s122 = ssub.s32 %s55, %s62
      %s123 = sor.u32 %s121, %s122
      %p124 = scmp.eq.s32.totalorder %s123, 0
      %s126 = sadd.s32 %s125, 1
      %s127 = scalar_select %p124, %s125, %s126
      %p130 = pneg %p124
      %p131 = scmp.eq.s32.totalorder %s47, 1
      %p132 = por %p130, %p131
      %p133 = scmp.ne.s32.totalorder %s125, %s128
      %p134 = scmp.eq.s32.totalorder %s47, 0
      %p135 = por %p133, %p134
      %p136 = scmp.ne.s32.totalorder %s125, %s128
      %p137 = scmp.eq.s32.totalorder %s52, 1
      %p138 = por %p136, %p137
      %p139 = scmp.ne.s32.totalorder %s128, %s129
      %p140 = scmp.eq.s32.totalorder %s52, 0
      %p141 = por %p139, %p140
      %p142 = scmp.ne.s32.totalorder %s128, %s129
      %p143 = scmp.eq.s32.totalorder %s53, 1
      %p144 = por %p142, %p143
      %p146 = scmp.ne.s32.totalorder %s129, %s145
      %p147 = scmp.eq.s32.totalorder %s53, 0
      %p148 = por %p146, %p147
      %s149 = ssub.s32 %s54, %s66
      %s150 = ssub.s32 %s55, %s62
      %s151 = sor.u32 %s149, %s150
      %p152 = scmp.eq.s32.totalorder %s151, 0
      %s154 = sadd.s32 %s153, 1
      %s155 = scalar_select %p152, %s153, %s154
      %p158 = pneg %p152
      %p159 = scmp.eq.s32.totalorder %s47, 1
      %p160 = por %p158, %p159
      %p161 = scmp.ne.s32.totalorder %s153, %s156
      %p162 = scmp.eq.s32.totalorder %s47, 0
      %p163 = por %p161, %p162
      %p164 = scmp.ne.s32.totalorder %s153, %s156
      %p165 = scmp.eq.s32.totalorder %s52, 1
      %p166 = por %p164, %p165
      %p167 = scmp.ne.s32.totalorder %s156, %s157
      %p168 = scmp.eq.s32.totalorder %s52, 0
      %p169 = por %p167, %p168
      %p170 = scmp.ne.s32.totalorder %s156, %s157
      %p171 = scmp.eq.s32.totalorder %s53, 1
      %p172 = por %p170, %p171
      %p174 = scmp.ne.s32.totalorder %s157, %s173
      %p175 = scmp.eq.s32.totalorder %s53, 0
      %p176 = por %p174, %p175
      %s177 = ssub.s32 %s54, %s66
      %s178 = ssub.s32 %s55, %s62
      %s179 = sor.u32 %s177, %s178
      %p180 = scmp.eq.s32.totalorder %s179, 0
      %s182 = sadd.s32 %s181, 1
      %s183 = scalar_select %p180, %s181, %s182
      %p186 = pneg %p180
      %p187 = scmp.eq.s32.totalorder %s47, 1
      %p188 = por %p186, %p187
      %p189 = scmp.ne.s32.totalorder %s181, %s184
      %p190 = scmp.eq.s32.totalorder %s47, 0
      %p191 = por %p189, %p190
      %p192 = scmp.ne.s32.totalorder %s181, %s184
      %p193 = scmp.eq.s32.totalorder %s52, 1
      %p194 = por %p192, %p193
      %p195 = scmp.ne.s32.totalorder %s184, %s185
      %p196 = scmp.eq.s32.totalorder %s52, 0
      %p197 = por %p195, %p196
      %p198 = scmp.ne.s32.totalorder %s184, %s185
      %p199 = scmp.eq.s32.totalorder %s53, 1
      %p200 = por %p198, %p199
      %p202 = scmp.ne.s32.totalorder %s185, %s201
      %p203 = scmp.eq.s32.totalorder %s53, 0
      %p204 = por %p202, %p203
      %s205 = ssub.s32 %s54, %s66
      %p206 = scmp.eq.s32.totalorder %s205, 0
      %s208 = sadd.s32 %s207, 1
      %s209 = scalar_select %p206, %s207, %s208
      %p212 = pneg %p206
      %p213 = scmp.eq.s32.totalorder %s47, 1
      %p214 = por %p212, %p213
      %p215 = scmp.ne.s32.totalorder %s207, %s210
      %p216 = scmp.eq.s32.totalorder %s47, 0
      %p217 = por %p215, %p216
      %p218 = scmp.ne.s32.totalorder %s207, %s210
      %p219 = scmp.eq.s32.totalorder %s52, 1
      %p220 = por %p218, %p219
      %p221 = scmp.ne.s32.totalorder %s210, %s211
      %p222 = scmp.eq.s32.totalorder %s52, 0
      %p223 = por %p221, %p222
      %p224 = scmp.ne.s32.totalorder %s210, %s211
      %p225 = scmp.eq.s32.totalorder %s53, 1
      %p226 = por %p224, %p225
      %p228 = scmp.ne.s32.totalorder %s211, %s227
      %p229 = scmp.eq.s32.totalorder %s53, 0
      %p230 = por %p228, %p229
      %s231 = ssub.s32 %s54, %s66
      %p232 = scmp.eq.s32.totalorder %s231, 0
      %s234 = sadd.s32 %s233, 1
      %s235 = scalar_select %p232, %s233, %s234
      %p238 = pneg %p232
      %p239 = scmp.eq.s32.totalorder %s47, 1
      %p240 = por %p238, %p239
      %p241 = scmp.ne.s32.totalorder %s233, %s236
      %p242 = scmp.eq.s32.totalorder %s47, 0
      %p243 = por %p241, %p242
      %p244 = scmp.ne.s32.totalorder %s233, %s236
      %p245 = scmp.eq.s32.totalorder %s52, 1
      %p246 = por %p244, %p245
      %p247 = scmp.ne.s32.totalorder %s236, %s237
      %p248 = scmp.eq.s32.totalorder %s52, 0
      %p249 = por %p247, %p248
      %p250 = scmp.ne.s32.totalorder %s236, %s237
      %p251 = scmp.eq.s32.totalorder %s53, 1
      %p252 = por %p250, %p251
      %p254 = scmp.ne.s32.totalorder %s237, %s253
      %p255 = scmp.eq.s32.totalorder %s53, 0
      %p256 = por %p254, %p255
      %s257 = ssub.s32 %s54, %s66
      %p258 = scmp.eq.s32.totalorder %s257, 0
      %s260 = sadd.s32 %s259, 1
      %s261 = scalar_select %p258, %s259, %s260
      %p264 = pneg %p258
      %p265 = scmp.eq.s32.totalorder %s47, 1
      %p266 = por %p264, %p265
      %p267 = scmp.ne.s32.totalorder %s259, %s262
      %p268 = scmp.eq.s32.totalorder %s47, 0
      %p269 = por %p267, %p268
      %p270 = scmp.ne.s32.totalorder %s259, %s262
      %p271 = scmp.eq.s32.totalorder %s52, 1
      %p272 = por %p270, %p271
      %p273 = scmp.ne.s32.totalorder %s262, %s263
      %p274 = scmp.eq.s32.totalorder %s52, 0
      %p275 = por %p273, %p274
      %p276 = scmp.ne.s32.totalorder %s262, %s263
      %p277 = scmp.eq.s32.totalorder %s53, 1
      %p278 = por %p276, %p277
      %p280 = scmp.ne.s32.totalorder %s263, %s279
      %p281 = scmp.eq.s32.totalorder %s53, 0
      %p282 = por %p280, %p281
      %s284 = sadd.s32 %s283, 1
      %p287 = scmp.eq.s32.totalorder %s47, 1
      %p288 = scmp.ne.s32.totalorder %s283, %s285
      %p289 = scmp.eq.s32.totalorder %s47, 0
      %p290 = por %p288, %p289
      %p291 = scmp.ne.s32.totalorder %s283, %s285
      %p292 = scmp.eq.s32.totalorder %s52, 1
      %p293 = por %p291, %p292
      %p294 = scmp.ne.s32.totalorder %s285, %s286
      %p295 = scmp.eq.s32.totalorder %s52, 0
      %p296 = por %p294, %p295
      %p297 = scmp.ne.s32.totalorder %s285, %s286
      %p298 = scmp.eq.s32.totalorder %s53, 1
      %p299 = por %p297, %p298
      %p301 = scmp.ne.s32.totalorder %s286, %s300
      %p302 = scmp.eq.s32.totalorder %s53, 0
      %p303 = por %p301, %p302
      %s305 = sadd.s32 %s304, 1
      %p308 = scmp.eq.s32.totalorder %s47, 1
      %p309 = scmp.ne.s32.totalorder %s304, %s306
      %p310 = scmp.eq.s32.totalorder %s47, 0
      %p311 = por %p309, %p310
      %p312 = scmp.ne.s32.totalorder %s304, %s306
      %p313 = scmp.eq.s32.totalorder %s52, 1
      %p314 = por %p312, %p313
      %p315 = scmp.ne.s32.totalorder %s306, %s307
      %p316 = scmp.eq.s32.totalorder %s52, 0
      %p317 = por %p315, %p316
      %p318 = scmp.ne.s32.totalorder %s306, %s307
      %p319 = scmp.eq.s32.totalorder %s53, 1
      %p320 = por %p318, %p319
      %p322 = scmp.ne.s32.totalorder %s307, %s321
      %p323 = scmp.eq.s32.totalorder %s53, 0
      %p324 = por %p322, %p323
      %s326 = sadd.s32 %s325, 1
      %p329 = scmp.eq.s32.totalorder %s47, 1
      %p330 = scmp.ne.s32.totalorder %s325, %s327
      %p331 = scmp.eq.s32.totalorder %s47, 0
      %p332 = por %p330, %p331
      %p333 = scmp.ne.s32.totalorder %s325, %s327
      %p334 = scmp.eq.s32.totalorder %s52, 1
      %p335 = por %p333, %p334
      %p336 = scmp.ne.s32.totalorder %s327, %s328
      %p337 = scmp.eq.s32.totalorder %s52, 0
      %p338 = por %p336, %p337
      %p339 = scmp.ne.s32.totalorder %s327, %s328
      %p340 = scmp.eq.s32.totalorder %s53, 1
      %p341 = por %p339, %p340
      %p343 = scmp.ne.s32.totalorder %s328, %s342
      %p344 = scmp.eq.s32.totalorder %s53, 0
      %p345 = por %p343, %p344
      %s347 = sadd.s32 %s346, 1
      %p350 = scmp.eq.s32.totalorder %s47, 1
      %p351 = scmp.ne.s32.totalorder %s346, %s348
      %p352 = scmp.eq.s32.totalorder %s47, 0
      %p353 = por %p351, %p352
      %p354 = scmp.ne.s32.totalorder %s346, %s348
      %p355 = scmp.eq.s32.totalorder %s52, 1
      %p356 = por %p354, %p355
      %p357 = scmp.ne.s32.totalorder %s348, %s349
      %p358 = scmp.eq.s32.totalorder %s52, 0
      %p359 = por %p357, %p358
      %p360 = scmp.ne.s32.totalorder %s348, %s349
      %p361 = scmp.eq.s32.totalorder %s53, 1
      %p362 = por %p360, %p361
      %p364 = scmp.ne.s32.totalorder %s349, %s363
      %p365 = scmp.eq.s32.totalorder %s53, 0
      %p366 = por %p364, %p365
      %s368 = sadd.s32 %s367, 1
      %p371 = scmp.eq.s32.totalorder %s47, 1
      %p372 = scmp.ne.s32.totalorder %s367, %s369
      %p373 = scmp.eq.s32.totalorder %s47, 0
      %p374 = por %p372, %p373
      %p375 = scmp.ne.s32.totalorder %s367, %s369
      %p376 = scmp.eq.s32.totalorder %s52, 1
      %p377 = por %p375, %p376
      %p378 = scmp.ne.s32.totalorder %s369, %s370
      %p379 = scmp.eq.s32.totalorder %s52, 0
      %p380 = por %p378, %p379
      %p381 = scmp.ne.s32.totalorder %s369, %s370
      %p382 = scmp.eq.s32.totalorder %s53, 1
      %p383 = por %p381, %p382
      %p385 = scmp.ne.s32.totalorder %s370, %s384
      %p386 = scmp.eq.s32.totalorder %s53, 0
      %p387 = por %p385, %p386
      %s389 = sadd.s32 %s388, 1
      %p392 = scmp.eq.s32.totalorder %s47, 1
      %p393 = scmp.ne.s32.totalorder %s388, %s390
      %p394 = scmp.eq.s32.totalorder %s47, 0
      %p395 = por %p393, %p394
      %p396 = scmp.ne.s32.totalorder %s388, %s390
      %p397 = scmp.eq.s32.totalorder %s52, 1
      %p398 = por %p396, %p397
      %p399 = scmp.ne.s32.totalorder %s390, %s391
      %p400 = scmp.eq.s32.totalorder %s52, 0
      %p401 = por %p399, %p400
      %p402 = scmp.ne.s32.totalorder %s390, %s391
      %p403 = scmp.eq.s32.totalorder %s53, 1
      %p404 = por %p402, %p403
      %p406 = scmp.ne.s32.totalorder %s391, %s405
      %p407 = scmp.eq.s32.totalorder %s53, 0
      %p408 = por %p406, %p407
      %s409 = ssub.s32 %s54, %s66
      %s410 = ssub.s32 %s55, %s62
      %s411 = sor.u32 %s409, %s410
      %p412 = scmp.eq.s32.totalorder %s411, 0
      %s414 = sadd.s32 %s413, 1
      %s415 = scalar_select %p412, %s413, %s414
      %p418 = pneg %p412
      %p419 = scmp.eq.s32.totalorder %s47, 1
      %p420 = por %p418, %p419
      %p421 = scmp.ne.s32.totalorder %s413, %s416
      %p422 = scmp.eq.s32.totalorder %s47, 0
      %p423 = por %p421, %p422
      %p424 = scmp.ne.s32.totalorder %s413, %s416
      %p425 = scmp.eq.s32.totalorder %s52, 1
      %p426 = por %p424, %p425
      %p427 = scmp.ne.s32.totalorder %s416, %s417
      %p428 = scmp.eq.s32.totalorder %s52, 0
      %p429 = por %p427, %p428
      %p430 = scmp.ne.s32.totalorder %s416, %s417
      %p431 = scmp.eq.s32.totalorder %s53, 1
      %p432 = por %p430, %p431
      %p434 = scmp.ne.s32.totalorder %s417, %s433
      %p435 = scmp.eq.s32.totalorder %s53, 0
      %p436 = por %p434, %p435
      %s437 = ssub.s32 %s54, %s66
      %s438 = ssub.s32 %s55, %s62
      %s439 = sor.u32 %s437, %s438
      %p440 = scmp.eq.s32.totalorder %s439, 0
      %s442 = sadd.s32 %s441, 1
      %s443 = scalar_select %p440, %s441, %s442
      %p446 = pneg %p440
      %p447 = scmp.eq.s32.totalorder %s47, 1
      %p448 = por %p446, %p447
      %p449 = scmp.ne.s32.totalorder %s441, %s444
      %p450 = scmp.eq.s32.totalorder %s47, 0
      %p451 = por %p449, %p450
      %p452 = scmp.ne.s32.totalorder %s441, %s444
      %p453 = scmp.eq.s32.totalorder %s52, 1
      %p454 = por %p452, %p453
      %p455 = scmp.ne.s32.totalorder %s444, %s445
      %p456 = scmp.eq.s32.totalorder %s52, 0
      %p457 = por %p455, %p456
      %p458 = scmp.ne.s32.totalorder %s444, %s445
      %p459 = scmp.eq.s32.totalorder %s53, 1
      %p460 = por %p458, %p459
      %p462 = scmp.ne.s32.totalorder %s445, %s461
      %p463 = scmp.eq.s32.totalorder %s53, 0
      %p464 = por %p462, %p463
      %s465 = ssub.s32 %s54, %s66
      %s466 = ssub.s32 %s55, %s62
      %s467 = sor.u32 %s465, %s466
      %p468 = scmp.eq.s32.totalorder %s467, 0
      %s470 = sadd.s32 %s469, 1
      %s471 = scalar_select %p468, %s469, %s470
      %p474 = pneg %p468
      %p475 = scmp.eq.s32.totalorder %s47, 1
      %p476 = por %p474, %p475
      %p477 = scmp.ne.s32.totalorder %s469, %s472
      %p478 = scmp.eq.s32.totalorder %s47, 0
      %p479 = por %p477, %p478
      %p480 = scmp.ne.s32.totalorder %s469, %s472
      %p481 = scmp.eq.s32.totalorder %s52, 1
      %p482 = por %p480, %p481
      %p483 = scmp.ne.s32.totalorder %s472, %s473
      %p484 = scmp.eq.s32.totalorder %s52, 0
      %p485 = por %p483, %p484
      %p486 = scmp.ne.s32.totalorder %s472, %s473
      %p487 = scmp.eq.s32.totalorder %s53, 1
      %p488 = por %p486, %p487
      %p490 = scmp.ne.s32.totalorder %s473, %s489
      %p491 = scmp.eq.s32.totalorder %s53, 0
      %p492 = por %p490, %p491
      %p493 = scmp.le.s32.totalorder 1, %s47
      %p494 = scmp.lt.s32.totalorder %s47, 3
      %p495 = pnand %p493, %p494
      %p496 = pneg %p495
      // Predicated region
      $region9: #{dual_node_edge_block.4} parent=5 // pred_check
        _
      $region10: #{dual_node_edge_block.4} parent=5 // pred_check_branch
        %498 = sbr.rel (%p495) target = $region12
      $region11: #{dual_node_edge_block.4} parent=5 // pred_region
        %s499 = ssub.s32 %s47, 1
        // Predicated region
        $region13: #{dual_node_edge_block.4} parent=11 // pred_check
          %p500 = pneg %p296
        $region14: #{dual_node_edge_block.4} parent=11 // pred_check_branch
          %502 = sbr.rel (%p500) target = $region16
        $region15: #{dual_node_edge_block.4} parent=11 // pred_region
          %s504 = ssub.s32 128, 128
          %505 = vsyncadd [#allocation15], %s504
          %s506 = sshll.u32 [#allocation16], 4
          %s507 = int_to_ptr.vmem [resolvable:$true] %s506
          %512 = dma.hbm_to_vmem [thread:$0]  %s8, 128, %s507, [#allocation15], 64, 64, 4
        $region16: #{dual_node_edge_block.4} parent=11 // pred_fallthru
          _
        // Predicated region
        $region17: #{dual_node_edge_block.4} parent=11 // pred_check
          %p513 = pneg %p317
        $region18: #{dual_node_edge_block.4} parent=11 // pred_check_branch
          %515 = sbr.rel (%p513) target = $region20
        $region19: #{dual_node_edge_block.4} parent=11 // pred_region
          %s517 = ssub.s32 16, 16
          %518 = vsyncadd [#allocation18], %s517
          %s520 = sshll.u32 [#allocation17], 4
          %s521 = int_to_ptr.vmem [resolvable:$true] %s520
          %523 = dma.hbm_to_vmem [thread:$0]  %s9, 16, %s521, [#allocation18]
        $region20: #{dual_node_edge_block.4} parent=11 // pred_fallthru
          _
        // Predicated region
        $region21: #{dual_node_edge_block.4} parent=11 // pred_check
          %p524 = pneg %p338
        $region22: #{dual_node_edge_block.4} parent=11 // pred_check_branch
          %526 = sbr.rel (%p524) target = $region24
        $region23: #{dual_node_edge_block.4} parent=11 // pred_region
          %s528 = ssub.s32 128, 128
          %529 = vsyncadd [#allocation18], %s528
          %s530 = sshll.u32 [#allocation19], 4
          %s531 = int_to_ptr.vmem [resolvable:$true] %s530
          %536 = dma.hbm_to_vmem [thread:$0]  %s10, 128, %s531, [#allocation18], 64, 64, 4
        $region24: #{dual_node_edge_block.4} parent=11 // pred_fallthru
          _
        // Predicated region
        $region25: #{dual_node_edge_block.4} parent=11 // pred_check
          %p537 = pneg %p359
        $region26: #{dual_node_edge_block.4} parent=11 // pred_check_branch
          %539 = sbr.rel (%p537) target = $region28
        $region27: #{dual_node_edge_block.4} parent=11 // pred_region
          %s541 = ssub.s32 16, 16
          %542 = vsyncadd [#allocation21], %s541
          %s544 = sshll.u32 [#allocation20], 4
          %s545 = int_to_ptr.vmem [resolvable:$true] %s544
          %547 = dma.hbm_to_vmem [thread:$0]  %s11, 16, %s545, [#allocation21]
        $region28: #{dual_node_edge_block.4} parent=11 // pred_fallthru
          _
        // Predicated region
        $region29: #{dual_node_edge_block.4} parent=11 // pred_check
          %p548 = pneg %p380
        $region30: #{dual_node_edge_block.4} parent=11 // pred_check_branch
          %550 = sbr.rel (%p548) target = $region32
        $region31: #{dual_node_edge_block.4} parent=11 // pred_region
          %s552 = ssub.s32 256, 256
          %553 = vsyncadd [#allocation21], %s552
          %s554 = sshll.u32 [#allocation22], 4
          %s555 = int_to_ptr.vmem [resolvable:$true] %s554
          %560 = dma.hbm_to_vmem [thread:$0]  %s12, 256, %s555, [#allocation21], 64, 64, 4
        $region32: #{dual_node_edge_block.4} parent=11 // pred_fallthru
          _
        // Predicated region
        $region33: #{dual_node_edge_block.4} parent=11 // pred_check
          %p561 = pneg %p401
        $region34: #{dual_node_edge_block.4} parent=11 // pred_check_branch
          %563 = sbr.rel (%p561) target = $region36
        $region35: #{dual_node_edge_block.4} parent=11 // pred_region
          %s565 = ssub.s32 16, 16
          %566 = vsyncadd [#allocation24], %s565
          %s568 = sshll.u32 [#allocation23], 4
          %s569 = int_to_ptr.vmem [resolvable:$true] %s568
          %571 = dma.hbm_to_vmem [thread:$0]  %s13, 16, %s569, [#allocation24]
        $region36: #{dual_node_edge_block.4} parent=11 // pred_fallthru
          _
      $region12: #{dual_node_edge_block.4} parent=5 // pred_fallthru
        _
      %p572 = scmp.lt.s32.totalorder %s47, 2
      // Predicated region
      $region37: #{dual_node_edge_block.4} parent=5 // pred_check
        %p573 = pneg %p572
      $region38: #{dual_node_edge_block.4} parent=5 // pred_check_branch
        %575 = sbr.rel (%p573) target = $region40
      $region39: #{dual_node_edge_block.4} parent=5 // pred_region
        // Predicated region
        $region41: #{dual_node_edge_block.4} parent=39 // pred_check
          %p576 = pneg %p81
        $region42: #{dual_node_edge_block.4} parent=39 // pred_check_branch
          %578 = sbr.rel (%p576) target = $region44
        $region43: #{dual_node_edge_block.4} parent=39 // pred_region
          %s579 = sand.u32 %s71, 1
          %s580 = scalar_lea.sflag [#allocation3], %s579
          %s581 = sand.u32 %s71, 1
          %s582 = smul.addr %s581, 16
          %s583 = scalar_lea.vmem [#allocation2], %s582
          %s585 = ssub.s32 256, 256
          %586 = vsyncadd %s580, %s585
          %s587 = smul.addr %s55, 2
          %s588 = smul.addr %s54, 2
          %s589 = sadd.s32 %s587, %s588
          %s590 = smul.addr %s589, 128
          %s591 = scalar_lea.hbm %s0, %s590
          %s593 = sshll.u32 %s583, 4
          %s594 = int_to_ptr.vmem [resolvable:$true] %s593
          %596 = dma.hbm_to_vmem [thread:$0]  %s591, 256, %s594, %s580
        $region44: #{dual_node_edge_block.4} parent=39 // pred_fallthru
          _
        // Predicated region
        $region45: #{dual_node_edge_block.4} parent=39 // pred_check
          %p597 = pneg %p107
        $region46: #{dual_node_edge_block.4} parent=39 // pred_check_branch
          %599 = sbr.rel (%p597) target = $region48
        $region47: #{dual_node_edge_block.4} parent=39 // pred_region
          %s600 = sand.u32 %s47, 1
          %s601 = scalar_lea.sflag [#allocation6], %s600
          %s602 = sand.u32 %s97, 1
          %s603 = smul.addr %s602, 16
          %s604 = scalar_lea.vmem [#allocation5], %s603
          %s606 = ssub.s32 256, 256
          %607 = vsyncadd %s601, %s606
          %s608 = smul.addr %s54, 2
          %s609 = smul.addr %s608, 128
          %s610 = scalar_lea.hbm %s1, %s609
          %s612 = sshll.u32 %s604, 4
          %s613 = int_to_ptr.vmem [resolvable:$true] %s612
          %615 = dma.hbm_to_vmem [thread:$0]  %s610, 256, %s613, %s601
        $region48: #{dual_node_edge_block.4} parent=39 // pred_fallthru
          _
        // Predicated region
        $region49: #{dual_node_edge_block.4} parent=39 // pred_check
          %p616 = pneg %p135
        $region50: #{dual_node_edge_block.4} parent=39 // pred_check_branch
          %618 = sbr.rel (%p616) target = $region52
        $region51: #{dual_node_edge_block.4} parent=39 // pred_region
          %s619 = sand.u32 %s47, 1
          %s620 = scalar_lea.sflag [#allocation6], %s619
          %s621 = sand.u32 %s125, 1
          %s622 = smul.addr %s621, 64
          %s623 = scalar_lea.vmem [#allocation7], %s622
          %s624 = smul.u32 8, %s55
          %s626 = ssub.s32 1024, 1024
          %627 = vsyncadd %s620, %s626
          %s628 = smul.addr %s54, 8
          %s629 = sadd.s32 %s624, %s628
          %s630 = smul.addr %s629, 128
          %s631 = scalar_lea.hbm %s2, %s630
          %s632 = sshll.u32 %s623, 4
          %s633 = int_to_ptr.vmem [resolvable:$true] %s632
          %638 = dma.hbm_to_vmem [thread:$0]  %s631, 1024, %s633, %s620, 128, 128, 8
        $region52: #{dual_node_edge_block.4} parent=39 // pred_fallthru
          _
        // Predicated region
        $region53: #{dual_node_edge_block.4} parent=39 // pred_check
          %p639 = pneg %p163
        $region54: #{dual_node_edge_block.4} parent=39 // pred_check_branch
          %641 = sbr.rel (%p639) target = $region56
        $region55: #{dual_node_edge_block.4} parent=39 // pred_region
          %s642 = sand.u32 %s47, 1
          %s643 = scalar_lea.sflag [#allocation9], %s642
          %s644 = sand.u32 %s153, 1
          %s645 = smul.addr %s644, 64
          %s646 = scalar_lea.vmem [#allocation8], %s645
          %s648 = ssub.s32 1024, 1024
          %649 = vsyncadd %s643, %s648
          %s650 = smul.addr %s54, 8
          %s651 = sadd.s32 %s55, %s650
          %s652 = smul.addr %s651, 128
          %s653 = scalar_lea.hbm %s3, %s652
          %s654 = sshll.u32 %s646, 4
          %s655 = int_to_ptr.vmem [resolvable:$true] %s654
          %660 = dma.hbm_to_vmem [thread:$0]  %s653, 1024, %s655, %s643, 128, 128, 8
        $region56: #{dual_node_edge_block.4} parent=39 // pred_fallthru
          _
        // Predicated region
        $region57: #{dual_node_edge_block.4} parent=39 // pred_check
          %p661 = pneg %p191
        $region58: #{dual_node_edge_block.4} parent=39 // pred_check_branch
          %663 = sbr.rel (%p661) target = $region60
        $region59: #{dual_node_edge_block.4} parent=39 // pred_region
          %s664 = sand.u32 %s47, 1
          %s665 = scalar_lea.sflag [#allocation9], %s664
          %s666 = sand.u32 %s181, 1
          %s667 = smul.addr %s666, 8
          %s668 = scalar_lea.vmem [#allocation10], %s667
          %s670 = ssub.s32 128, 128
          %671 = vsyncadd %s665, %s670
          %s672 = sadd.s32 %s55, %s54
          %s673 = smul.addr %s672, 128
          %s674 = scalar_lea.hbm %s4, %s673
          %s676 = sshll.u32 %s668, 4
          %s677 = int_to_ptr.vmem [resolvable:$true] %s676
          %679 = dma.hbm_to_vmem [thread:$0]  %s674, 128, %s677, %s665
        $region60: #{dual_node_edge_block.4} parent=39 // pred_fallthru
          _
        // Predicated region
        $region61: #{dual_node_edge_block.4} parent=39 // pred_check
          %p680 = pneg %p217
        $region62: #{dual_node_edge_block.4} parent=39 // pred_check_branch
          %682 = sbr.rel (%p680) target = $region64
        $region63: #{dual_node_edge_block.4} parent=39 // pred_region
          %s683 = sand.u32 %s47, 1
          %s684 = scalar_lea.sflag [#allocation12], %s683
          %s685 = sand.u32 %s207, 1
          %s686 = smul.addr %s685, 8
          %s687 = scalar_lea.vmem [#allocation11], %s686
          %s689 = ssub.s32 128, 128
          %690 = vsyncadd %s684, %s689
          %s691 = smul.addr %s54, 128
          %s692 = scalar_lea.hbm %s5, %s691
          %s694 = sshll.u32 %s687, 4
          %s695 = int_to_ptr.vmem [resolvable:$true] %s694
          %697 = dma.hbm_to_vmem [thread:$0]  %s692, 128, %s695, %s684
        $region64: #{dual_node_edge_block.4} parent=39 // pred_fallthru
          _
        // Predicated region
        $region65: #{dual_node_edge_block.4} parent=39 // pred_check
          %p698 = pneg %p243
        $region66: #{dual_node_edge_block.4} parent=39 // pred_check_branch
          %700 = sbr.rel (%p698) target = $region68
        $region67: #{dual_node_edge_block.4} parent=39 // pred_region
          %s701 = sand.u32 %s47, 1
          %s702 = scalar_lea.sflag [#allocation12], %s701
          %s703 = sand.u32 %s233, 1
          %s704 = scalar_lea.vmem [#allocation13], %s703
          %s706 = ssub.s32 16, 16
          %707 = vsyncadd %s702, %s706
          %s708 = smul.addr %s54, 16
          %s709 = scalar_lea.hbm %s6, %s708
          %s711 = sshll.u32 %s704, 4
          %s712 = int_to_ptr.vmem [resolvable:$true] %s711
          %714 = dma.hbm_to_vmem [thread:$0]  %s709, 16, %s712, %s702
        $region68: #{dual_node_edge_block.4} parent=39 // pred_fallthru
          _
        // Predicated region
        $region69: #{dual_node_edge_block.4} parent=39 // pred_check
          %p715 = pneg %p269
        $region70: #{dual_node_edge_block.4} parent=39 // pred_check_branch
          %717 = sbr.rel (%p715) target = $region72
        $region71: #{dual_node_edge_block.4} parent=39 // pred_region
          %s718 = sand.u32 %s47, 1
          %s719 = scalar_lea.sflag [#allocation15], %s718
          %s720 = sand.u32 %s259, 1
          %s721 = scalar_lea.vmem [#allocation14], %s720
          %s723 = ssub.s32 16, 16
          %724 = vsyncadd %s719, %s723
          %s725 = smul.addr %s54, 16
          %s726 = scalar_lea.hbm %s7, %s725
          %s728 = sshll.u32 %s721, 4
          %s729 = int_to_ptr.vmem [resolvable:$true] %s728
          %731 = dma.hbm_to_vmem [thread:$0]  %s726, 16, %s729, %s719
        $region72: #{dual_node_edge_block.4} parent=39 // pred_fallthru
          _
      $region40: #{dual_node_edge_block.4} parent=5 // pred_fallthru
        _
      %p732 = scmp.le.s32.totalorder 1, %s47
      %p733 = scmp.lt.s32.totalorder %s47, 3
      %p734 = pnand %p732, %p733
      %p735 = pneg %p734
      // Predicated region
      $region73: #{dual_node_edge_block.4} parent=5 // pred_check
        _
      $region74: #{dual_node_edge_block.4} parent=5 // pred_check_branch
        %737 = sbr.rel (%p734) target = $region76
      $region75: #{dual_node_edge_block.4} parent=5 // pred_region
        %s738 = ssub.s32 %s47, 1
        %s739 = sand.u32 %s74, 1
        %s740 = scalar_lea.sflag [#allocation3], %s739
        %s741 = sand.u32 %s74, 1
        %s742 = smul.addr %s741, 16
        %s743 = scalar_lea.vmem [#allocation2], %s742
        // Predicated region
        $region77: #{dual_node_edge_block.4} parent=75 // pred_check
          %p744 = pneg %p87
        $region78: #{dual_node_edge_block.4} parent=75 // pred_check_branch
          %746 = sbr.rel (%p744) target = $region80
        $region79: #{dual_node_edge_block.4} parent=75 // pred_region
          %747 = dma.done %s740, 256
        $region80: #{dual_node_edge_block.4} parent=75 // pred_fallthru
          _
        %s748 = sand.u32 %s52, 1
        %s749 = scalar_lea.sflag [#allocation6], %s748
        %s750 = sand.u32 %s100, 1
        %s751 = smul.addr %s750, 16
        %s752 = scalar_lea.vmem [#allocation5], %s751
        // Predicated region
        $region81: #{dual_node_edge_block.4} parent=75 // pred_check
          %p753 = pneg %p113
        $region82: #{dual_node_edge_block.4} parent=75 // pred_check_branch
          %755 = sbr.rel (%p753) target = $region84
        $region83: #{dual_node_edge_block.4} parent=75 // pred_region
          %756 = dma.done %s749, 256
        $region84: #{dual_node_edge_block.4} parent=75 // pred_fallthru
          _
        %s757 = sand.u32 %s52, 1
        %s758 = scalar_lea.sflag [#allocation6], %s757
        %s759 = sand.u32 %s128, 1
        %s760 = smul.addr %s759, 64
        %s761 = scalar_lea.vmem [#allocation7], %s760
        // Predicated region
        $region85: #{dual_node_edge_block.4} parent=75 // pred_check
          %p762 = pneg %p141
        $region86: #{dual_node_edge_block.4} parent=75 // pred_check_branch
          %764 = sbr.rel (%p762) target = $region88
        $region87: #{dual_node_edge_block.4} parent=75 // pred_region
          %765 = dma.done %s758, 1024
        $region88: #{dual_node_edge_block.4} parent=75 // pred_fallthru
          _
        %s766 = sand.u32 %s52, 1
        %s767 = scalar_lea.sflag [#allocation9], %s766
        %s768 = sand.u32 %s156, 1
        %s769 = smul.addr %s768, 64
        %s770 = scalar_lea.vmem [#allocation8], %s769
        // Predicated region
        $region89: #{dual_node_edge_block.4} parent=75 // pred_check
          %p771 = pneg %p169
        $region90: #{dual_node_edge_block.4} parent=75 // pred_check_branch
          %773 = sbr.rel (%p771) target = $region92
        $region91: #{dual_node_edge_block.4} parent=75 // pred_region
          %774 = dma.done %s767, 1024
        $region92: #{dual_node_edge_block.4} parent=75 // pred_fallthru
          _
        %s775 = sand.u32 %s52, 1
        %s776 = scalar_lea.sflag [#allocation9], %s775
        %s777 = sand.u32 %s184, 1
        %s778 = smul.addr %s777, 8
        %s779 = scalar_lea.vmem [#allocation10], %s778
        // Predicated region
        $region93: #{dual_node_edge_block.4} parent=75 // pred_check
          %p780 = pneg %p197
        $region94: #{dual_node_edge_block.4} parent=75 // pred_check_branch
          %782 = sbr.rel (%p780) target = $region96
        $region95: #{dual_node_edge_block.4} parent=75 // pred_region
          %783 = dma.done %s776, 128
        $region96: #{dual_node_edge_block.4} parent=75 // pred_fallthru
          _
        %s784 = sand.u32 %s52, 1
        %s785 = scalar_lea.sflag [#allocation12], %s784
        %s786 = sand.u32 %s210, 1
        %s787 = smul.addr %s786, 8
        %s788 = scalar_lea.vmem [#allocation11], %s787
        // Predicated region
        $region97: #{dual_node_edge_block.4} parent=75 // pred_check
          %p789 = pneg %p223
        $region98: #{dual_node_edge_block.4} parent=75 // pred_check_branch
          %791 = sbr.rel (%p789) target = $region100
        $region99: #{dual_node_edge_block.4} parent=75 // pred_region
          %792 = dma.done %s785, 128
        $region100: #{dual_node_edge_block.4} parent=75 // pred_fallthru
          _
        %s793 = sand.u32 %s52, 1
        %s794 = scalar_lea.sflag [#allocation12], %s793
        %s795 = sand.u32 %s236, 1
        %s796 = scalar_lea.vmem [#allocation13], %s795
        // Predicated region
        $region101: #{dual_node_edge_block.4} parent=75 // pred_check
          %p797 = pneg %p249
        $region102: #{dual_node_edge_block.4} parent=75 // pred_check_branch
          %799 = sbr.rel (%p797) target = $region104
        $region103: #{dual_node_edge_block.4} parent=75 // pred_region
          %800 = dma.done %s794, 16
        $region104: #{dual_node_edge_block.4} parent=75 // pred_fallthru
          _
        %s801 = sand.u32 %s52, 1
        %s802 = scalar_lea.sflag [#allocation15], %s801
        %s803 = sand.u32 %s262, 1
        %s804 = scalar_lea.vmem [#allocation14], %s803
        // Predicated region
        $region105: #{dual_node_edge_block.4} parent=75 // pred_check
          %p805 = pneg %p275
        $region106: #{dual_node_edge_block.4} parent=75 // pred_check_branch
          %807 = sbr.rel (%p805) target = $region108
        $region107: #{dual_node_edge_block.4} parent=75 // pred_region
          %808 = dma.done %s802, 16
        $region108: #{dual_node_edge_block.4} parent=75 // pred_fallthru
          _
        // Predicated region
        $region109: #{dual_node_edge_block.4} parent=75 // pred_check
          %p809 = pneg %p296
        $region110: #{dual_node_edge_block.4} parent=75 // pred_check_branch
          %811 = sbr.rel (%p809) target = $region112
        $region111: #{dual_node_edge_block.4} parent=75 // pred_region
          %812 = dma.done [#allocation15], 128
        $region112: #{dual_node_edge_block.4} parent=75 // pred_fallthru
          _
        // Predicated region
        $region113: #{dual_node_edge_block.4} parent=75 // pred_check
          %p813 = pneg %p317
        $region114: #{dual_node_edge_block.4} parent=75 // pred_check_branch
          %815 = sbr.rel (%p813) target = $region116
        $region115: #{dual_node_edge_block.4} parent=75 // pred_region
          %816 = dma.done [#allocation18], 16
        $region116: #{dual_node_edge_block.4} parent=75 // pred_fallthru
          _
        // Predicated region
        $region117: #{dual_node_edge_block.4} parent=75 // pred_check
          %p817 = pneg %p338
        $region118: #{dual_node_edge_block.4} parent=75 // pred_check_branch
          %819 = sbr.rel (%p817) target = $region120
        $region119: #{dual_node_edge_block.4} parent=75 // pred_region
          %820 = dma.done [#allocation18], 128
        $region120: #{dual_node_edge_block.4} parent=75 // pred_fallthru
          _
        // Predicated region
        $region121: #{dual_node_edge_block.4} parent=75 // pred_check
          %p821 = pneg %p359
        $region122: #{dual_node_edge_block.4} parent=75 // pred_check_branch
          %823 = sbr.rel (%p821) target = $region124
        $region123: #{dual_node_edge_block.4} parent=75 // pred_region
          %824 = dma.done [#allocation21], 16
        $region124: #{dual_node_edge_block.4} parent=75 // pred_fallthru
          _
        // Predicated region
        $region125: #{dual_node_edge_block.4} parent=75 // pred_check
          %p825 = pneg %p380
        $region126: #{dual_node_edge_block.4} parent=75 // pred_check_branch
          %827 = sbr.rel (%p825) target = $region128
        $region127: #{dual_node_edge_block.4} parent=75 // pred_region
          %828 = dma.done [#allocation21], 256
        $region128: #{dual_node_edge_block.4} parent=75 // pred_fallthru
          _
        // Predicated region
        $region129: #{dual_node_edge_block.4} parent=75 // pred_check
          %p829 = pneg %p401
        $region130: #{dual_node_edge_block.4} parent=75 // pred_check_branch
          %831 = sbr.rel (%p829) target = $region132
        $region131: #{dual_node_edge_block.4} parent=75 // pred_region
          %832 = dma.done [#allocation24], 16
        $region132: #{dual_node_edge_block.4} parent=75 // pred_fallthru
          _
        %s833 = sand.u32 %s74, 1
        %s834 = scalar_lea.sflag [#allocation3], %s833
        %s835 = sand.u32 %s74, 1
        %s836 = smul.addr %s835, 16
        %s837 = scalar_lea.vmem [#allocation2], %s836
        %p838 = pneg %p87
        %p839 = pneg %p84
        %s840 = sand.u32 %s52, 1
        %s841 = scalar_lea.sflag [#allocation6], %s840
        %s842 = sand.u32 %s100, 1
        %s843 = smul.addr %s842, 16
        %s844 = scalar_lea.vmem [#allocation5], %s843
        %p845 = pneg %p113
        %p846 = pneg %p110
        %s847 = sand.u32 %s52, 1
        %s848 = scalar_lea.sflag [#allocation6], %s847
        %s849 = sand.u32 %s128, 1
        %s850 = smul.addr %s849, 64
        %s851 = scalar_lea.vmem [#allocation7], %s850
        %p852 = pneg %p141
        %p853 = pneg %p138
        %s854 = sand.u32 %s52, 1
        %s855 = scalar_lea.sflag [#allocation9], %s854
        %s856 = sand.u32 %s156, 1
        %s857 = smul.addr %s856, 64
        %s858 = scalar_lea.vmem [#allocation8], %s857
        %p859 = pneg %p169
        %p860 = pneg %p166
        %s861 = sand.u32 %s52, 1
        %s862 = scalar_lea.sflag [#allocation9], %s861
        %s863 = sand.u32 %s184, 1
        %s864 = smul.addr %s863, 8
        %s865 = scalar_lea.vmem [#allocation10], %s864
        %p866 = pneg %p197
        %p867 = pneg %p194
        %s868 = sand.u32 %s52, 1
        %s869 = scalar_lea.sflag [#allocation12], %s868
        %s870 = sand.u32 %s210, 1
        %s871 = smul.addr %s870, 8
        %s872 = scalar_lea.vmem [#allocation11], %s871
        %p873 = pneg %p223
        %p874 = pneg %p220
        %s875 = sand.u32 %s52, 1
        %s876 = scalar_lea.sflag [#allocation12], %s875
        %s877 = sand.u32 %s236, 1
        %s878 = scalar_lea.vmem [#allocation13], %s877
        %p879 = pneg %p249
        %p880 = pneg %p246
        %s881 = sand.u32 %s52, 1
        %s882 = scalar_lea.sflag [#allocation15], %s881
        %s883 = sand.u32 %s262, 1
        %s884 = scalar_lea.vmem [#allocation14], %s883
        %p885 = pneg %p275
        %p886 = pneg %p272
        %p887 = pneg %p296
        %p888 = pneg %p293
        %p889 = pneg %p317
        %p890 = pneg %p314
        %p891 = pneg %p338
        %p892 = pneg %p335
        %p893 = pneg %p359
        %p894 = pneg %p356
        %p895 = pneg %p380
        %p896 = pneg %p377
        %p897 = pneg %p401
        %p898 = pneg %p398
        %p899 = pneg %p429
        %p900 = pneg %p426
        %s901 = sand.u32 %s416, 1
        %s902 = scalar_lea.sflag [#allocation4], %s901
        %s903 = sand.u32 %s416, 1
        %s904 = smul.addr %s903, 64
        %s905 = scalar_lea.vmem [#allocation25], %s904
        %p906 = pneg %p457
        %p907 = pneg %p454
        %s908 = sand.u32 %s52, 1
        %s909 = scalar_lea.sflag [#allocation27], %s908
        %s910 = sand.u32 %s444, 1
        %s911 = smul.addr %s910, 8
        %s912 = scalar_lea.vmem [#allocation26], %s911
        %p913 = pneg %p485
        %p914 = pneg %p482
        %s915 = sand.u32 %s52, 1
        %s916 = scalar_lea.sflag [#allocation27], %s915
        %s917 = sand.u32 %s472, 1
        %s918 = smul.addr %s917, 8
        %s919 = scalar_lea.vmem [#allocation28], %s918
        %s920 = smul.u32 8, %s57
        %s921 = smul.u32 8, %s57
        %v923 = vld [vmem:[%s761] sm:$0xff]
        %v924 = vld [vmem:[%s761 + $0x8] sm:$0xff]
        %v925 = vld [vmem:[%s761 + $0x10] sm:$0xff]
        %v926 = vld [vmem:[%s761 + $0x18] sm:$0xff]
        %v927 = vld [vmem:[%s761 + $0x20] sm:$0xff]
        %v928 = vld [vmem:[%s761 + $0x28] sm:$0xff]
        %v929 = vld [vmem:[%s761 + $0x30] sm:$0xff]
        %v930 = vld [vmem:[%s761 + $0x38] sm:$0xff]
        %v931 = vld [vmem:[%s779] sm:$0xff]
        %v932 = vld [vmem:[%s788] sm:$0xff]
        %vm933 = vcmask 130048
        %v934 = vsel %vm933, %v923, 0.0
        %v935 = vrot.slane %v934, 4
        %v936 = vadd.f32 %v934, %v935
        %v937 = vrot.slane %v936, 2
        %v938 = vadd.f32 %v936, %v937
        %v939 = vrot.slane %v938, 1
        %v940 = vadd.f32 %v938, %v939
        %v941 = vsel %vm933, %v924, 0.0
        %v942 = vrot.slane %v941, 4
        %v943 = vadd.f32 %v941, %v942
        %v944 = vrot.slane %v943, 2
        %v945 = vadd.f32 %v943, %v944
        %v946 = vrot.slane %v945, 1
        %v947 = vadd.f32 %v945, %v946
        %v948 = vsel %vm933, %v925, 0.0
        %v949 = vrot.slane %v948, 4
        %v950 = vadd.f32 %v948, %v949
        %v951 = vrot.slane %v950, 2
        %v952 = vadd.f32 %v950, %v951
        %v953 = vrot.slane %v952, 1
        %v954 = vadd.f32 %v952, %v953
        %v955 = vsel %vm933, %v926, 0.0
        %v956 = vrot.slane %v955, 4
        %v957 = vadd.f32 %v955, %v956
        %v958 = vrot.slane %v957, 2
        %v959 = vadd.f32 %v957, %v958
        %v960 = vrot.slane %v959, 1
        %v961 = vadd.f32 %v959, %v960
        %v962 = vsel %vm933, %v927, 0.0
        %v963 = vrot.slane %v962, 4
        %v964 = vadd.f32 %v962, %v963
        %v965 = vrot.slane %v964, 2
        %v966 = vadd.f32 %v964, %v965
        %v967 = vrot.slane %v966, 1
        %v968 = vadd.f32 %v966, %v967
        %v969 = vsel %vm933, %v928, 0.0
        %v970 = vrot.slane %v969, 4
        %v971 = vadd.f32 %v969, %v970
        %v972 = vrot.slane %v971, 2
        %v973 = vadd.f32 %v971, %v972
        %v974 = vrot.slane %v973, 1
        %v975 = vadd.f32 %v973, %v974
        %v976 = vsel %vm933, %v929, 0.0
        %v977 = vrot.slane %v976, 4
        %v978 = vadd.f32 %v976, %v977
        %v979 = vrot.slane %v978, 2
        %v980 = vadd.f32 %v978, %v979
        %v981 = vrot.slane %v980, 1
        %v982 = vadd.f32 %v980, %v981
        %v983 = vsel %vm933, %v930, 0.0
        %v984 = vrot.slane %v983, 4
        %v985 = vadd.f32 %v983, %v984
        %v986 = vrot.slane %v985, 2
        %v987 = vadd.f32 %v985, %v986
        %v988 = vrot.slane %v987, 1
        %v989 = vadd.f32 %v987, %v988
        %vm998 = vcmask 1041409
        %v999 = vsel %vm998, %v947, %v940
        %vm1000 = vcmask 1042434
        %v1001 = vsel %vm1000, %v954, %v999
        %vm1002 = vcmask 1043459
        %v1003 = vsel %vm1002, %v961, %v1001
        %vm1004 = vcmask 1044484
        %v1005 = vsel %vm1004, %v968, %v1003
        %vm1006 = vcmask 1045509
        %v1007 = vsel %vm1006, %v975, %v1005
        %vm1008 = vcmask 1046534
        %v1009 = vsel %vm1008, %v982, %v1007
        %vm1010 = vcmask 1047559
        %v1011 = vsel %vm1010, %v989, %v1009
        %1013 = vst.msk [vmem:[%s919] sm:$0xff] %vm933, %v1011
        %v1014 = vsel %vm933, %v923, inf
        %v1015 = vrot.slane %v1014, 4
        %v1016 = vmin.f32 %v1014, %v1015
        %v1017 = vrot.slane %v1016, 2
        %v1018 = vmin.f32 %v1016, %v1017
        %v1019 = vrot.slane %v1018, 1
        %v1020 = vmin.f32 %v1018, %v1019
        %v1021 = vsel %vm933, %v924, inf
        %v1022 = vrot.slane %v1021, 4
        %v1023 = vmin.f32 %v1021, %v1022
        %v1024 = vrot.slane %v1023, 2
        %v1025 = vmin.f32 %v1023, %v1024
        %v1026 = vrot.slane %v1025, 1
        %v1027 = vmin.f32 %v1025, %v1026
        %v1028 = vsel %vm933, %v925, inf
        %v1029 = vrot.slane %v1028, 4
        %v1030 = vmin.f32 %v1028, %v1029
        %v1031 = vrot.slane %v1030, 2
        %v1032 = vmin.f32 %v1030, %v1031
        %v1033 = vrot.slane %v1032, 1
        %v1034 = vmin.f32 %v1032, %v1033
        %v1035 = vsel %vm933, %v926, inf
        %v1036 = vrot.slane %v1035, 4
        %v1037 = vmin.f32 %v1035, %v1036
        %v1038 = vrot.slane %v1037, 2
        %v1039 = vmin.f32 %v1037, %v1038
        %v1040 = vrot.slane %v1039, 1
        %v1041 = vmin.f32 %v1039, %v1040
        %v1042 = vsel %vm933, %v927, inf
        %v1043 = vrot.slane %v1042, 4
        %v1044 = vmin.f32 %v1042, %v1043
        %v1045 = vrot.slane %v1044, 2
        %v1046 = vmin.f32 %v1044, %v1045
        %v1047 = vrot.slane %v1046, 1
        %v1048 = vmin.f32 %v1046, %v1047
        %v1049 = vsel %vm933, %v928, inf
        %v1050 = vrot.slane %v1049, 4
        %v1051 = vmin.f32 %v1049, %v1050
        %v1052 = vrot.slane %v1051, 2
        %v1053 = vmin.f32 %v1051, %v1052
        %v1054 = vrot.slane %v1053, 1
        %v1055 = vmin.f32 %v1053, %v1054
        %v1056 = vsel %vm933, %v929, inf
        %v1057 = vrot.slane %v1056, 4
        %v1058 = vmin.f32 %v1056, %v1057
        %v1059 = vrot.slane %v1058, 2
        %v1060 = vmin.f32 %v1058, %v1059
        %v1061 = vrot.slane %v1060, 1
        %v1062 = vmin.f32 %v1060, %v1061
        %v1063 = vsel %vm933, %v930, inf
        %v1064 = vrot.slane %v1063, 4
        %v1065 = vmin.f32 %v1063, %v1064
        %v1066 = vrot.slane %v1065, 2
        %v1067 = vmin.f32 %v1065, %v1066
        %v1068 = vrot.slane %v1067, 1
        %v1069 = vmin.f32 %v1067, %v1068
        %v1078 = vsel %vm998, %v1027, %v1020
        %v1079 = vsel %vm1000, %v1034, %v1078
        %v1080 = vsel %vm1002, %v1041, %v1079
        %v1081 = vsel %vm1004, %v1048, %v1080
        %v1082 = vsel %vm1006, %v1055, %v1081
        %v1083 = vsel %vm1008, %v1062, %v1082
        %v1084 = vsel %vm1010, %v1069, %v1083
        %1085 = vrot.lane.b32.xlu0 %v1084, 16
        %v1086 = vpop.permute.xlu0 %1085
        %vm1088 = vcmask 261248
        %1089 = vst.msk [vmem:[%s919] sm:$0xff] %vm1088, %v1086
        %v1090 = vsel %vm933, %v923, -inf
        %v1091 = vrot.slane %v1090, 4
        %v1092 = vmax.f32 %v1090, %v1091
        %v1093 = vrot.slane %v1092, 2
        %v1094 = vmax.f32 %v1092, %v1093
        %v1095 = vrot.slane %v1094, 1
        %v1096 = vmax.f32 %v1094, %v1095
        %v1097 = vsel %vm933, %v924, -inf
        %v1098 = vrot.slane %v1097, 4
        %v1099 = vmax.f32 %v1097, %v1098
        %v1100 = vrot.slane %v1099, 2
        %v1101 = vmax.f32 %v1099, %v1100
        %v1102 = vrot.slane %v1101, 1
        %v1103 = vmax.f32 %v1101, %v1102
        %v1104 = vsel %vm933, %v925, -inf
        %v1105 = vrot.slane %v1104, 4
        %v1106 = vmax.f32 %v1104, %v1105
        %v1107 = vrot.slane %v1106, 2
        %v1108 = vmax.f32 %v1106, %v1107
        %v1109 = vrot.slane %v1108, 1
        %v1110 = vmax.f32 %v1108, %v1109
        %v1111 = vsel %vm933, %v926, -inf
        %v1112 = vrot.slane %v1111, 4
        %v1113 = vmax.f32 %v1111, %v1112
        %v1114 = vrot.slane %v1113, 2
        %v1115 = vmax.f32 %v1113, %v1114
        %v1116 = vrot.slane %v1115, 1
        %v1117 = vmax.f32 %v1115, %v1116
        %v1118 = vsel %vm933, %v927, -inf
        %v1119 = vrot.slane %v1118, 4
        %v1120 = vmax.f32 %v1118, %v1119
        %v1121 = vrot.slane %v1120, 2
        %v1122 = vmax.f32 %v1120, %v1121
        %v1123 = vrot.slane %v1122, 1
        %v1124 = vmax.f32 %v1122, %v1123
        %v1125 = vsel %vm933, %v928, -inf
        %v1126 = vrot.slane %v1125, 4
        %v1127 = vmax.f32 %v1125, %v1126
        %v1128 = vrot.slane %v1127, 2
        %v1129 = vmax.f32 %v1127, %v1128
        %v1130 = vrot.slane %v1129, 1
        %v1131 = vmax.f32 %v1129, %v1130
        %v1132 = vsel %vm933, %v929, -inf
        %v1133 = vrot.slane %v1132, 4
        %v1134 = vmax.f32 %v1132, %v1133
        %v1135 = vrot.slane %v1134, 2
        %v1136 = vmax.f32 %v1134, %v1135
        %v1137 = vrot.slane %v1136, 1
        %v1138 = vmax.f32 %v1136, %v1137
        %v1139 = vsel %vm933, %v930, -inf
        %v1140 = vrot.slane %v1139, 4
        %v1141 = vmax.f32 %v1139, %v1140
        %v1142 = vrot.slane %v1141, 2
        %v1143 = vmax.f32 %v1141, %v1142
        %v1144 = vrot.slane %v1143, 1
        %v1145 = vmax.f32 %v1143, %v1144
        %v1154 = vsel %vm998, %v1103, %v1096
        %v1155 = vsel %vm1000, %v1110, %v1154
        %v1156 = vsel %vm1002, %v1117, %v1155
        %v1157 = vsel %vm1004, %v1124, %v1156
        %v1158 = vsel %vm1006, %v1131, %v1157
        %v1159 = vsel %vm1008, %v1138, %v1158
        %v1160 = vsel %vm1010, %v1145, %v1159
        %1161 = vrot.lane.b32.xlu0 %v1160, 32
        %v1162 = vpop.permute.xlu0 %1161
        %vm1164 = vcmask 392448
        %1165 = vst.msk [vmem:[%s919] sm:$0xff] %vm1164, %v1162
        %v1166 = vmul.f32 %v923, %v923
        %v1167 = vmul.f32 %v924, %v924
        %v1168 = vmul.f32 %v925, %v925
        %v1169 = vmul.f32 %v926, %v926
        %v1170 = vmul.f32 %v927, %v927
        %v1171 = vmul.f32 %v928, %v928
        %v1172 = vmul.f32 %v929, %v929
        %v1173 = vmul.f32 %v930, %v930
        %v1174 = vsel %vm933, %v1166, 0.0
        %v1175 = vrot.slane %v1174, 4
        %v1176 = vadd.f32 %v1174, %v1175
        %v1177 = vrot.slane %v1176, 2
        %v1178 = vadd.f32 %v1176, %v1177
        %v1179 = vrot.slane %v1178, 1
        %v1180 = vadd.f32 %v1178, %v1179
        %v1181 = vsel %vm933, %v1167, 0.0
        %v1182 = vrot.slane %v1181, 4
        %v1183 = vadd.f32 %v1181, %v1182
        %v1184 = vrot.slane %v1183, 2
        %v1185 = vadd.f32 %v1183, %v1184
        %v1186 = vrot.slane %v1185, 1
        %v1187 = vadd.f32 %v1185, %v1186
        %v1188 = vsel %vm933, %v1168, 0.0
        %v1189 = vrot.slane %v1188, 4
        %v1190 = vadd.f32 %v1188, %v1189
        %v1191 = vrot.slane %v1190, 2
        %v1192 = vadd.f32 %v1190, %v1191
        %v1193 = vrot.slane %v1192, 1
        %v1194 = vadd.f32 %v1192, %v1193
        %v1195 = vsel %vm933, %v1169, 0.0
        %v1196 = vrot.slane %v1195, 4
        %v1197 = vadd.f32 %v1195, %v1196
        %v1198 = vrot.slane %v1197, 2
        %v1199 = vadd.f32 %v1197, %v1198
        %v1200 = vrot.slane %v1199, 1
        %v1201 = vadd.f32 %v1199, %v1200
        %v1202 = vsel %vm933, %v1170, 0.0
        %v1203 = vrot.slane %v1202, 4
        %v1204 = vadd.f32 %v1202, %v1203
        %v1205 = vrot.slane %v1204, 2
        %v1206 = vadd.f32 %v1204, %v1205
        %v1207 = vrot.slane %v1206, 1
        %v1208 = vadd.f32 %v1206, %v1207
        %v1209 = vsel %vm933, %v1171, 0.0
        %v1210 = vrot.slane %v1209, 4
        %v1211 = vadd.f32 %v1209, %v1210
        %v1212 = vrot.slane %v1211, 2
        %v1213 = vadd.f32 %v1211, %v1212
        %v1214 = vrot.slane %v1213, 1
        %v1215 = vadd.f32 %v1213, %v1214
        %v1216 = vsel %vm933, %v1172, 0.0
        %v1217 = vrot.slane %v1216, 4
        %v1218 = vadd.f32 %v1216, %v1217
        %v1219 = vrot.slane %v1218, 2
        %v1220 = vadd.f32 %v1218, %v1219
        %v1221 = vrot.slane %v1220, 1
        %v1222 = vadd.f32 %v1220, %v1221
        %v1223 = vsel %vm933, %v1173, 0.0
        %v1224 = vrot.slane %v1223, 4
        %v1225 = vadd.f32 %v1223, %v1224
        %v1226 = vrot.slane %v1225, 2
        %v1227 = vadd.f32 %v1225, %v1226
        %v1228 = vrot.slane %v1227, 1
        %v1229 = vadd.f32 %v1227, %v1228
        %v1238 = vsel %vm998, %v1187, %v1180
        %v1239 = vsel %vm1000, %v1194, %v1238
        %v1240 = vsel %vm1002, %v1201, %v1239
        %v1241 = vsel %vm1004, %v1208, %v1240
        %v1242 = vsel %vm1006, %v1215, %v1241
        %v1243 = vsel %vm1008, %v1222, %v1242
        %v1244 = vsel %vm1010, %v1229, %v1243
        %1245 = vrot.lane.b32.xlu0 %v1244, 48
        %v1246 = vpop.permute.xlu0 %1245
        %vm1248 = vcmask 523648
        %1249 = vst.msk [vmem:[%s919] sm:$0xff] %vm1248, %v1246
        %v1250 = vld [vmem:[%s743] sm:$0xff]
        %v1251 = vld [vmem:[%s752] sm:$0xff]
        %v1252 = vld [vmem:[%s752 + $0x8] sm:$0xff]
        %v1254 = vcombine.high %v931, %v931
        %v1256 = vunpack.c.l.s4 1966171168
        %v1257 = vunpack.c.0.s8 %v1256
        %v1258 = vlaneseq
        %v1259 = vshrl.u32 %v1258, 7
        %v1260 = vsub.s32 %v1257, %v1259
        %v1261 = vrot.slane %v931, %v1260
        %v1263 = vunpack.c.l.s4 1966171168
        %v1264 = vunpack.c.0.s8 %v1263
        %v1265 = vlaneseq
        %v1266 = vshrl.u32 %v1265, 7
        %v1267 = vsub.s32 %v1264, %v1266
        %v1268 = vrot.slane %v1254, %v1267
        %v1269 = vcombine.high %v1261, %v1261
        %v1270 = vcombine.high %v1268, %v1268
        %v1272 = vunpack.c.l.s4 1966171168
        %v1273 = vunpack.c.0.s8 %v1272
        %v1274 = vlaneseq
        %v1275 = vshrl.u32 %v1274, 7
        %v1276 = vsub.s32 %v1273, %v1275
        %v1277 = vrot.slane %v1261, %v1276
        %v1279 = vunpack.c.l.s4 1966171168
        %v1280 = vunpack.c.0.s8 %v1279
        %v1281 = vlaneseq
        %v1282 = vshrl.u32 %v1281, 7
        %v1283 = vsub.s32 %v1280, %v1282
        %v1284 = vrot.slane %v1268, %v1283
        %v1286 = vunpack.c.l.s4 1966171168
        %v1287 = vunpack.c.0.s8 %v1286
        %v1288 = vlaneseq
        %v1289 = vshrl.u32 %v1288, 7
        %v1290 = vsub.s32 %v1287, %v1289
        %v1291 = vrot.slane %v1269, %v1290
        %v1293 = vunpack.c.l.s4 1966171168
        %v1294 = vunpack.c.0.s8 %v1293
        %v1295 = vlaneseq
        %v1296 = vshrl.u32 %v1295, 7
        %v1297 = vsub.s32 %v1294, %v1296
        %v1298 = vrot.slane %v1270, %v1297
        %v1299 = vcombine.high %v1277, %v1277
        %v1300 = vcombine.high %v1284, %v1284
        %v1301 = vcombine.high %v1291, %v1291
        %v1302 = vcombine.high %v1298, %v1298
        %v1303 = vlaneseq
        %v1304 = vshrl.u32 %v1303, 7
        %v1305 = vsub.s32 0, %v1304
        %v1306 = vrot.slane %v1277, %v1305
        %v1307 = vlaneseq
        %v1308 = vshrl.u32 %v1307, 7
        %v1309 = vsub.s32 0, %v1308
        %v1310 = vrot.slane %v1291, %v1309
        %v1311 = vlaneseq
        %v1312 = vshrl.u32 %v1311, 7
        %v1313 = vsub.s32 0, %v1312
        %v1314 = vrot.slane %v1299, %v1313
        %v1315 = vlaneseq
        %v1316 = vshrl.u32 %v1315, 7
        %v1317 = vsub.s32 0, %v1316
        %v1318 = vrot.slane %v1301, %v1317
        %v1319 = vlaneseq
        %v1320 = vshrl.u32 %v1319, 7
        %v1321 = vsub.s32 0, %v1320
        %v1322 = vrot.slane %v1284, %v1321
        %v1323 = vlaneseq
        %v1324 = vshrl.u32 %v1323, 7
        %v1325 = vsub.s32 0, %v1324
        %v1326 = vrot.slane %v1298, %v1325
        %v1327 = vlaneseq
        %v1328 = vshrl.u32 %v1327, 7
        %v1329 = vsub.s32 0, %v1328
        %v1330 = vrot.slane %v1300, %v1329
        %v1331 = vlaneseq
        %v1332 = vshrl.u32 %v1331, 7
        %v1333 = vsub.s32 0, %v1332
        %v1334 = vrot.slane %v1302, %v1333
        %v1343 = vmul.f32 %v1306, %v932
        %v1344 = vmul.f32 %v1310, %v932
        %v1345 = vmul.f32 %v1314, %v932
        %v1346 = vmul.f32 %v1318, %v932
        %v1347 = vmul.f32 %v1322, %v932
        %v1348 = vmul.f32 %v1326, %v932
        %v1349 = vmul.f32 %v1330, %v932
        %v1350 = vmul.f32 %v1334, %v932
        %v1351 = vpack.c.bf16 %v924, %v923
        %v1352 = vpack.c.bf16 %v926, %v925
        %v1353 = vpack.c.bf16 %v928, %v927
        %v1354 = vpack.c.bf16 %v930, %v929
        %v1355 = vld [vmem:[#allocation16] sm:$0xf]
        %v1356 = vld [vmem:[#allocation16 + $0x4] sm:$0xf]
        %v1357 = vld [vmem:[#allocation17] sm:$0x1]
        %v1359 = vlaneseq
        %v1360 = vshrl.u32 %v1359, 7
        %v1361 = vsub.s32 0, %v1360
        %v1362 = vrot.slane %v1357, %v1361
        %v1366 = vunpack.c.l.b16 %v1355
        %v1367 = vunpack.c.l.b16 %v1356
        %v1368 = vpack.c.b16 %v1367, %v1366
        %v1371 = vsel %vm933, %v1351, 0
        %v1374 = vsel %vm933, %v1352, 0
        %v1377 = vsel %vm933, %v1353, 0
        %v1380 = vsel %vm933, %v1354, 0
        %1382 = vmatprep.subr.bf16.mxu0 0
        %1383 = vmatpush1.bf16.msra.mxu0 %v1368
        %1384 = vmatprep.subr.bf16.mxu0 0
        %1385 = vmatpush1.bf16.msra.mxu0 0
        %1386 = vmatprep.subr.bf16.mxu0 0
        %1387 = vmatpush1.bf16.msra.mxu0 0
        %1388 = vmatprep.subr.bf16.mxu0 0
        %1389 = vmatpush1.bf16.msra.mxu0 0
        %1390 = vmatprep.subr.bf16.mxu0 0
        %1391 = vmatpush1.bf16.msra.mxu0 0
        %1392 = vmatprep.subr.bf16.mxu0 0
        %1393 = vmatpush1.bf16.msra.mxu0 0
        %1394 = vmatprep.subr.bf16.mxu0 0
        %1395 = vmatpush1.bf16.msra.mxu0 0
        %1396 = vmatprep.subr.bf16.mxu0 0
        %1397 = vmatpush1.bf16.msra.mxu0 0
        %1398 = vmatprep.subr.bf16.mxu0 0
        %1399 = vmatpush1.bf16.msra.mxu0 0
        %1400 = vmatprep.subr.bf16.mxu0 0
        %1401 = vmatpush1.bf16.msra.mxu0 0
        %1402 = vmatprep.subr.bf16.mxu0 0
        %1403 = vmatpush1.bf16.msra.mxu0 0
        %1404 = vmatprep.subr.bf16.mxu0 0
        %1405 = vmatpush1.bf16.msra.mxu0 0
        %1406 = vmatprep.subr.bf16.mxu0 0
        %1407 = vmatpush1.bf16.msra.mxu0 0
        %1408 = vmatprep.subr.bf16.mxu0 0
        %1409 = vmatpush1.bf16.msra.mxu0 0
        %1410 = vmatprep.subr.bf16.mxu0 0
        %1411 = vmatpush1.bf16.msra.mxu0 0
        %1412 = vmatprep.subr.bf16.mxu0 0
        %1413 = vmatpush1.bf16.msra.mxu0 0
        %1414 = vmatprep.mubr.bf16.mxu0 0
        %1415 = vmatmul.mubr.bf16.gmra.mrb[0].mxu0 %v1371
        %v1416 = vpop.f32.mrb[0].mxu0
        %v1417 = vadd.f32 %v1362, %v1416
        %v1418 = vpop.f32.mrb[0].mxu0
        %v1419 = vpop.f32.mrb[0].mxu0
        %v1420 = vadd.f32 %v1362, %v1419
        %v1421 = vpop.f32.mrb[0].mxu0
        %1422 = vmatprep.mubr.bf16.mxu0 0
        %1423 = vmatmul.mubr.bf16.gmra.mrb[0].mxu0 %v1374
        %v1424 = vpop.f32.mrb[0].mxu0
        %v1425 = vadd.f32 %v1362, %v1424
        %v1426 = vpop.f32.mrb[0].mxu0
        %v1427 = vpop.f32.mrb[0].mxu0
        %v1428 = vadd.f32 %v1362, %v1427
        %v1429 = vpop.f32.mrb[0].mxu0
        %1430 = vmatprep.mubr.bf16.mxu0 0
        %1431 = vmatmul.mubr.bf16.gmra.mrb[0].mxu0 %v1377
        %v1432 = vpop.f32.mrb[0].mxu0
        %v1433 = vadd.f32 %v1362, %v1432
        %v1434 = vpop.f32.mrb[0].mxu0
        %v1435 = vpop.f32.mrb[0].mxu0
        %v1436 = vadd.f32 %v1362, %v1435
        %v1437 = vpop.f32.mrb[0].mxu0
        %1438 = vmatprep.mubr.bf16.mxu0 0
        %1439 = vmatmul.mubr.bf16.gmra.mrb[0].mxu0 %v1380
        %v1440 = vpop.f32.mrb[0].mxu0
        %v1441 = vadd.f32 %v1362, %v1440
        %v1442 = vpop.f32.mrb[0].mxu0
        %v1443 = vpop.f32.mrb[0].mxu0
        %v1444 = vadd.f32 %v1362, %v1443
        %v1445 = vpop.f32.mrb[0].mxu0
        %1446 = vdwg.mxu0
        %1448 = vset.pattern.permute.xlu0 0
        %1449 = vperm.xlu0 %1448, %v1343
        %v1450 = vpop.permute.xlu0 %1449
        %1453 = vset.pattern.permute.xlu0 0
        %1454 = vperm.xlu0 %1453, %v1344
        %v1455 = vpop.permute.xlu0 %1454
        %1458 = vset.pattern.permute.xlu0 0
        %1459 = vperm.xlu0 %1458, %v1345
        %v1460 = vpop.permute.xlu0 %1459
        %1463 = vset.pattern.permute.xlu0 0
        %1464 = vperm.xlu0 %1463, %v1346
        %v1465 = vpop.permute.xlu0 %1464
        %1468 = vset.pattern.permute.xlu0 0
        %1469 = vperm.xlu0 %1468, %v1347
        %v1470 = vpop.permute.xlu0 %1469
        %1473 = vset.pattern.permute.xlu0 0
        %1474 = vperm.xlu0 %1473, %v1348
        %v1475 = vpop.permute.xlu0 %1474
        %1478 = vset.pattern.permute.xlu0 0
        %1479 = vperm.xlu0 %1478, %v1349
        %v1480 = vpop.permute.xlu0 %1479
        %1483 = vset.pattern.permute.xlu0 0
        %1484 = vperm.xlu0 %1483, %v1350
        %v1485 = vpop.permute.xlu0 %1484
        %v1487 = vmul.f32 %v1417, %v1450
        %v1488 = vmul.f32 %v1420, %v1455
        %v1489 = vmul.f32 %v1425, %v1460
        %v1490 = vmul.f32 %v1428, %v1465
        %v1491 = vmul.f32 %v1433, %v1470
        %v1492 = vmul.f32 %v1436, %v1475
        %v1493 = vmul.f32 %v1441, %v1480
        %v1494 = vmul.f32 %v1444, %v1485
        %v1495 = vadd.f32 %v1487, 1.0
        %v1496 = vadd.f32 %v1488, 1.0
        %v1497 = vadd.f32 %v1489, 1.0
        %v1498 = vadd.f32 %v1490, 1.0
        %v1499 = vadd.f32 %v1491, 1.0
        %v1500 = vadd.f32 %v1492, 1.0
        %v1501 = vadd.f32 %v1493, 1.0
        %v1502 = vadd.f32 %v1494, 1.0
        %v1503 = vxor.u32 %v1417, 2147483648
        %v1504 = vxor.u32 %v1420, 2147483648
        %v1505 = vxor.u32 %v1425, 2147483648
        %v1506 = vxor.u32 %v1428, 2147483648
        %v1507 = vxor.u32 %v1433, 2147483648
        %v1508 = vxor.u32 %v1436, 2147483648
        %v1509 = vxor.u32 %v1441, 2147483648
        %v1510 = vxor.u32 %v1444, 2147483648
        %v1511 = vmul.f32 %v1503, 1.442695
        %v1512 = vpow.pop %v1511
        %v1513 = vmul.f32 %v1504, 1.442695
        %v1514 = vpow.pop %v1513
        %v1515 = vmul.f32 %v1505, 1.442695
        %v1516 = vpow.pop %v1515
        %v1517 = vmul.f32 %v1506, 1.442695
        %v1518 = vpow.pop %v1517
        %v1519 = vmul.f32 %v1507, 1.442695
        %v1520 = vpow.pop %v1519
        %v1521 = vmul.f32 %v1508, 1.442695
        %v1522 = vpow.pop %v1521
        %v1523 = vmul.f32 %v1509, 1.442695
        %v1524 = vpow.pop %v1523
        %v1525 = vmul.f32 %v1510, 1.442695
        %v1526 = vpow.pop %v1525
        %v1527 = vadd.f32 %v1512, 1.0
        %v1528 = vadd.f32 %v1514, 1.0
        %v1529 = vadd.f32 %v1516, 1.0
        %v1530 = vadd.f32 %v1518, 1.0
        %v1531 = vadd.f32 %v1520, 1.0
        %v1532 = vadd.f32 %v1522, 1.0
        %v1533 = vadd.f32 %v1524, 1.0
        %v1534 = vadd.f32 %v1526, 1.0
        %v1535 = vrcp.pop %v1527
        %v1536 = vmul.f32 1.0, %v1535
        %v1537 = vrcp.pop %v1528
        %v1538 = vmul.f32 1.0, %v1537
        %v1539 = vrcp.pop %v1529
        %v1540 = vmul.f32 1.0, %v1539
        %v1541 = vrcp.pop %v1530
        %v1542 = vmul.f32 1.0, %v1541
        %v1543 = vrcp.pop %v1531
        %v1544 = vmul.f32 1.0, %v1543
        %v1545 = vrcp.pop %v1532
        %v1546 = vmul.f32 1.0, %v1545
        %v1547 = vrcp.pop %v1533
        %v1548 = vmul.f32 1.0, %v1547
        %v1549 = vrcp.pop %v1534
        %v1550 = vmul.f32 1.0, %v1549
        %v1552 = vcombine.high %v1250, %v1250
        %v1554 = vunpack.c.l.s4 1966171168
        %v1555 = vunpack.c.0.s8 %v1554
        %v1556 = vlaneseq
        %v1557 = vshrl.u32 %v1556, 7
        %v1558 = vsub.s32 %v1555, %v1557
        %v1559 = vrot.slane %v1250, %v1558
        %v1561 = vunpack.c.l.s4 1966171168
        %v1562 = vunpack.c.0.s8 %v1561
        %v1563 = vlaneseq
        %v1564 = vshrl.u32 %v1563, 7
        %v1565 = vsub.s32 %v1562, %v1564
        %v1566 = vrot.slane %v1552, %v1565
        %v1567 = vcombine.high %v1559, %v1559
        %v1568 = vcombine.high %v1566, %v1566
        %v1570 = vunpack.c.l.s4 1966171168
        %v1571 = vunpack.c.0.s8 %v1570
        %v1572 = vlaneseq
        %v1573 = vshrl.u32 %v1572, 7
        %v1574 = vsub.s32 %v1571, %v1573
        %v1575 = vrot.slane %v1559, %v1574
        %v1577 = vunpack.c.l.s4 1966171168
        %v1578 = vunpack.c.0.s8 %v1577
        %v1579 = vlaneseq
        %v1580 = vshrl.u32 %v1579, 7
        %v1581 = vsub.s32 %v1578, %v1580
        %v1582 = vrot.slane %v1566, %v1581
        %v1584 = vunpack.c.l.s4 1966171168
        %v1585 = vunpack.c.0.s8 %v1584
        %v1586 = vlaneseq
        %v1587 = vshrl.u32 %v1586, 7
        %v1588 = vsub.s32 %v1585, %v1587
        %v1589 = vrot.slane %v1567, %v1588
        %v1591 = vunpack.c.l.s4 1966171168
        %v1592 = vunpack.c.0.s8 %v1591
        %v1593 = vlaneseq
        %v1594 = vshrl.u32 %v1593, 7
        %v1595 = vsub.s32 %v1592, %v1594
        %v1596 = vrot.slane %v1568, %v1595
        %v1597 = vcombine.high %v1575, %v1575
        %v1598 = vcombine.high %v1582, %v1582
        %v1599 = vcombine.high %v1589, %v1589
        %v1600 = vcombine.high %v1596, %v1596
        %v1601 = vlaneseq
        %v1602 = vshrl.u32 %v1601, 7
        %v1603 = vsub.s32 0, %v1602
        %v1604 = vrot.slane %v1575, %v1603
        %v1605 = vlaneseq
        %v1606 = vshrl.u32 %v1605, 7
        %v1607 = vsub.s32 0, %v1606
        %v1608 = vrot.slane %v1589, %v1607
        %v1609 = vlaneseq
        %v1610 = vshrl.u32 %v1609, 7
        %v1611 = vsub.s32 0, %v1610
        %v1612 = vrot.slane %v1597, %v1611
        %v1613 = vlaneseq
        %v1614 = vshrl.u32 %v1613, 7
        %v1615 = vsub.s32 0, %v1614
        %v1616 = vrot.slane %v1599, %v1615
        %v1617 = vlaneseq
        %v1618 = vshrl.u32 %v1617, 7
        %v1619 = vsub.s32 0, %v1618
        %v1620 = vrot.slane %v1582, %v1619
        %v1621 = vlaneseq
        %v1622 = vshrl.u32 %v1621, 7
        %v1623 = vsub.s32 0, %v1622
        %v1624 = vrot.slane %v1596, %v1623
        %v1625 = vlaneseq
        %v1626 = vshrl.u32 %v1625, 7
        %v1627 = vsub.s32 0, %v1626
        %v1628 = vrot.slane %v1598, %v1627
        %v1629 = vlaneseq
        %v1630 = vshrl.u32 %v1629, 7
        %v1631 = vsub.s32 0, %v1630
        %v1632 = vrot.slane %v1600, %v1631
        %v1641 = vmul.f32 %v1604, %v1252
        %v1642 = vmul.f32 %v1608, %v1252
        %v1643 = vmul.f32 %v1612, %v1252
        %v1644 = vmul.f32 %v1616, %v1252
        %v1645 = vmul.f32 %v1620, %v1252
        %v1646 = vmul.f32 %v1624, %v1252
        %v1647 = vmul.f32 %v1628, %v1252
        %v1648 = vmul.f32 %v1632, %v1252
        %v1649 = vmul.f32 %v1641, 0.35355338
        %v1650 = vmul.f32 %v1642, 0.35355338
        %v1651 = vmul.f32 %v1643, 0.35355338
        %v1652 = vmul.f32 %v1644, 0.35355338
        %v1653 = vmul.f32 %v1645, 0.35355338
        %v1654 = vmul.f32 %v1646, 0.35355338
        %v1655 = vmul.f32 %v1647, 0.35355338
        %v1656 = vmul.f32 %v1648, 0.35355338
        %v1657 = vmul.f32 %v1649, %v1495
        %v1658 = vmul.f32 %v1650, %v1496
        %v1659 = vmul.f32 %v1651, %v1497
        %v1660 = vmul.f32 %v1652, %v1498
        %v1661 = vmul.f32 %v1653, %v1499
        %v1662 = vmul.f32 %v1654, %v1500
        %v1663 = vmul.f32 %v1655, %v1501
        %v1664 = vmul.f32 %v1656, %v1502
        %1673 = vrot.lane.b32.xlu0 %v1487, 96
        %v1674 = vpop.permute.xlu0 %1673
        %1675 = vrot.lane.b32.xlu0 %v1488, 96
        %v1676 = vpop.permute.xlu0 %1675
        %1677 = vrot.lane.b32.xlu0 %v1489, 96
        %v1678 = vpop.permute.xlu0 %1677
        %1679 = vrot.lane.b32.xlu0 %v1490, 96
        %v1680 = vpop.permute.xlu0 %1679
        %1681 = vrot.lane.b32.xlu0 %v1491, 96
        %v1682 = vpop.permute.xlu0 %1681
        %1683 = vrot.lane.b32.xlu0 %v1492, 96
        %v1684 = vpop.permute.xlu0 %1683
        %1685 = vrot.lane.b32.xlu0 %v1493, 96
        %v1686 = vpop.permute.xlu0 %1685
        %1687 = vrot.lane.b32.xlu0 %v1494, 96
        %v1688 = vpop.permute.xlu0 %1687
        %v1697 = vadd.f32 %v1657, %v1674
        %v1698 = vadd.f32 %v1658, %v1676
        %v1699 = vadd.f32 %v1659, %v1678
        %v1700 = vadd.f32 %v1660, %v1680
        %v1701 = vadd.f32 %v1661, %v1682
        %v1702 = vadd.f32 %v1662, %v1684
        %v1703 = vadd.f32 %v1663, %v1686
        %v1704 = vadd.f32 %v1664, %v1688
        %1713 = vrot.lane.b32.xlu0 %v1495, 64
        %v1714 = vpop.permute.xlu0 %1713
        %1715 = vrot.lane.b32.xlu0 %v1496, 64
        %v1716 = vpop.permute.xlu0 %1715
        %1717 = vrot.lane.b32.xlu0 %v1497, 64
        %v1718 = vpop.permute.xlu0 %1717
        %1719 = vrot.lane.b32.xlu0 %v1498, 64
        %v1720 = vpop.permute.xlu0 %1719
        %1721 = vrot.lane.b32.xlu0 %v1499, 64
        %v1722 = vpop.permute.xlu0 %1721
        %1723 = vrot.lane.b32.xlu0 %v1500, 64
        %v1724 = vpop.permute.xlu0 %1723
        %1725 = vrot.lane.b32.xlu0 %v1501, 64
        %v1726 = vpop.permute.xlu0 %1725
        %1727 = vrot.lane.b32.xlu0 %v1502, 64
        %v1728 = vpop.permute.xlu0 %1727
        %v1737 = vmul.f32 %v1536, %v1714
        %v1738 = vmul.f32 %v1538, %v1716
        %v1739 = vmul.f32 %v1540, %v1718
        %v1740 = vmul.f32 %v1542, %v1720
        %v1741 = vmul.f32 %v1544, %v1722
        %v1742 = vmul.f32 %v1546, %v1724
        %v1743 = vmul.f32 %v1548, %v1726
        %v1744 = vmul.f32 %v1550, %v1728
        %1753 = vrot.lane.b32.xlu0 %v1737, 64
        %v1754 = vpop.permute.xlu0 %1753
        %1755 = vrot.lane.b32.xlu0 %v1738, 64
        %v1756 = vpop.permute.xlu0 %1755
        %1757 = vrot.lane.b32.xlu0 %v1739, 64
        %v1758 = vpop.permute.xlu0 %1757
        %1759 = vrot.lane.b32.xlu0 %v1740, 64
        %v1760 = vpop.permute.xlu0 %1759
        %1761 = vrot.lane.b32.xlu0 %v1741, 64
        %v1762 = vpop.permute.xlu0 %1761
        %1763 = vrot.lane.b32.xlu0 %v1742, 64
        %v1764 = vpop.permute.xlu0 %1763
        %1765 = vrot.lane.b32.xlu0 %v1743, 64
        %v1766 = vpop.permute.xlu0 %1765
        %1767 = vrot.lane.b32.xlu0 %v1744, 64
        %v1768 = vpop.permute.xlu0 %1767
        %v1777 = vmul.f32 %v1697, %v1754
        %v1778 = vmul.f32 %v1698, %v1756
        %v1779 = vmul.f32 %v1699, %v1758
        %v1780 = vmul.f32 %v1700, %v1760
        %v1781 = vmul.f32 %v1701, %v1762
        %v1782 = vmul.f32 %v1702, %v1764
        %v1783 = vmul.f32 %v1703, %v1766
        %v1784 = vmul.f32 %v1704, %v1768
        %v1785 = vadd.f32 %v1777, %v1674
        %v1786 = vadd.f32 %v1778, %v1676
        %v1787 = vadd.f32 %v1779, %v1678
        %v1788 = vadd.f32 %v1780, %v1680
        %v1789 = vadd.f32 %v1781, %v1682
        %v1790 = vadd.f32 %v1782, %v1684
        %v1791 = vadd.f32 %v1783, %v1686
        %v1792 = vadd.f32 %v1784, %v1688
        %v1793 = vld [vmem:[%s796] sm:$0x1]
        %v1794 = vld [vmem:[%s804] sm:$0x1]
        %v1795 = vadd.f32 %v1794, 1.0
        %v1797 = vlaneseq
        %v1798 = vshrl.u32 %v1797, 7
        %v1799 = vsub.s32 0, %v1798
        %v1800 = vrot.slane %v1795, %v1799
        %v1802 = vmul.f32 %v1800, %v1785
        %v1803 = vmul.f32 %v1800, %v1786
        %v1804 = vmul.f32 %v1800, %v1787
        %v1805 = vmul.f32 %v1800, %v1788
        %v1806 = vmul.f32 %v1800, %v1789
        %v1807 = vmul.f32 %v1800, %v1790
        %v1808 = vmul.f32 %v1800, %v1791
        %v1809 = vmul.f32 %v1800, %v1792
        %v1811 = vlaneseq
        %v1812 = vshrl.u32 %v1811, 7
        %v1813 = vsub.s32 0, %v1812
        %v1814 = vrot.slane %v1793, %v1813
        %v1816 = vadd.f32 %v1814, %v1802
        %v1817 = vadd.f32 %v1814, %v1803
        %v1818 = vadd.f32 %v1814, %v1804
        %v1819 = vadd.f32 %v1814, %v1805
        %v1820 = vadd.f32 %v1814, %v1806
        %v1821 = vadd.f32 %v1814, %v1807
        %v1822 = vadd.f32 %v1814, %v1808
        %v1823 = vadd.f32 %v1814, %v1809
        %v1824 = vpack.c.bf16 %v1817, %v1816
        %v1825 = vpack.c.bf16 %v1819, %v1818
        %v1826 = vpack.c.bf16 %v1821, %v1820
        %v1827 = vpack.c.bf16 %v1823, %v1822
        %v1828 = vld [vmem:[#allocation22] sm:$0xf]
        %v1829 = vld [vmem:[#allocation22 + $0x4] sm:$0xf]
        %v1830 = vld [vmem:[#allocation22 + $0x8] sm:$0xf]
        %v1831 = vld [vmem:[#allocation22 + $0xc] sm:$0xf]
        %v1832 = vld [vmem:[#allocation23] sm:$0x1]
        %v1834 = vlaneseq
        %v1835 = vshrl.u32 %v1834, 7
        %v1836 = vsub.s32 0, %v1835
        %v1837 = vrot.slane %v1832, %v1836
        %v1843 = vunpack.c.l.b16 %v1828
        %v1844 = vunpack.c.l.b16 %v1829
        %v1845 = vunpack.c.l.b16 %v1830
        %v1846 = vunpack.c.l.b16 %v1831
        %v1847 = vpack.c.b16 %v1844, %v1843
        %v1848 = vpack.c.b16 %v1846, %v1845
        %vm1851 = vcmask 261120
        %v1853 = vsel %vm1851, %v1824, 0
        %v1856 = vsel %vm1851, %v1825, 0
        %v1859 = vsel %vm1851, %v1826, 0
        %v1862 = vsel %vm1851, %v1827, 0
        %1864 = vmatprep.subr.bf16.mxu0 0
        %1865 = vmatpush1.bf16.msra.mxu0 %v1847
        %1866 = vmatprep.subr.bf16.mxu0 0
        %1867 = vmatpush1.bf16.msra.mxu0 %v1848
        %1868 = vmatprep.subr.bf16.mxu0 0
        %1869 = vmatpush1.bf16.msra.mxu0 0
        %1870 = vmatprep.subr.bf16.mxu0 0
        %1871 = vmatpush1.bf16.msra.mxu0 0
        %1872 = vmatprep.subr.bf16.mxu0 0
        %1873 = vmatpush1.bf16.msra.mxu0 0
        %1874 = vmatprep.subr.bf16.mxu0 0
        %1875 = vmatpush1.bf16.msra.mxu0 0
        %1876 = vmatprep.subr.bf16.mxu0 0
        %1877 = vmatpush1.bf16.msra.mxu0 0
        %1878 = vmatprep.subr.bf16.mxu0 0
        %1879 = vmatpush1.bf16.msra.mxu0 0
        %1880 = vmatprep.subr.bf16.mxu0 0
        %1881 = vmatpush1.bf16.msra.mxu0 0
        %1882 = vmatprep.subr.bf16.mxu0 0
        %1883 = vmatpush1.bf16.msra.mxu0 0
        %1884 = vmatprep.subr.bf16.mxu0 0
        %1885 = vmatpush1.bf16.msra.mxu0 0
        %1886 = vmatprep.subr.bf16.mxu0 0
        %1887 = vmatpush1.bf16.msra.mxu0 0
        %1888 = vmatprep.subr.bf16.mxu0 0
        %1889 = vmatpush1.bf16.msra.mxu0 0
        %1890 = vmatprep.subr.bf16.mxu0 0
        %1891 = vmatpush1.bf16.msra.mxu0 0
        %1892 = vmatprep.subr.bf16.mxu0 0
        %1893 = vmatpush1.bf16.msra.mxu0 0
        %1894 = vmatprep.subr.bf16.mxu0 0
        %1895 = vmatpush1.bf16.msra.mxu0 0
        %1896 = vmatprep.mubr.bf16.mxu0 0
        %1897 = vmatmul.mubr.bf16.gmra.mrb[0].mxu0 %v1853
        %v1898 = vpop.f32.mrb[0].mxu0
        %v1899 = vadd.f32 %v1837, %v1898
        %v1900 = vpop.f32.mrb[0].mxu0
        %v1901 = vpop.f32.mrb[0].mxu0
        %v1902 = vadd.f32 %v1837, %v1901
        %v1903 = vpop.f32.mrb[0].mxu0
        %1904 = vmatprep.mubr.bf16.mxu0 0
        %1905 = vmatmul.mubr.bf16.gmra.mrb[0].mxu0 %v1856
        %v1906 = vpop.f32.mrb[0].mxu0
        %v1907 = vadd.f32 %v1837, %v1906
        %v1908 = vpop.f32.mrb[0].mxu0
        %v1909 = vpop.f32.mrb[0].mxu0
        %v1910 = vadd.f32 %v1837, %v1909
        %v1911 = vpop.f32.mrb[0].mxu0
        %1912 = vmatprep.mubr.bf16.mxu0 0
        %1913 = vmatmul.mubr.bf16.gmra.mrb[0].mxu0 %v1859
        %v1914 = vpop.f32.mrb[0].mxu0
        %v1915 = vadd.f32 %v1837, %v1914
        %v1916 = vpop.f32.mrb[0].mxu0
        %v1917 = vpop.f32.mrb[0].mxu0
        %v1918 = vadd.f32 %v1837, %v1917
        %v1919 = vpop.f32.mrb[0].mxu0
        %1920 = vmatprep.mubr.bf16.mxu0 0
        %1921 = vmatmul.mubr.bf16.gmra.mrb[0].mxu0 %v1862
        %v1922 = vpop.f32.mrb[0].mxu0
        %v1923 = vadd.f32 %v1837, %v1922
        %v1924 = vpop.f32.mrb[0].mxu0
        %v1925 = vpop.f32.mrb[0].mxu0
        %v1926 = vadd.f32 %v1837, %v1925
        %v1927 = vpop.f32.mrb[0].mxu0
        %1928 = vdwg.mxu0
        %v1929 = vadd.f32 %v923, %v1899
        %v1930 = vadd.f32 %v924, %v1902
        %v1931 = vadd.f32 %v925, %v1907
        %v1932 = vadd.f32 %v926, %v1910
        %v1933 = vadd.f32 %v927, %v1915
        %v1934 = vadd.f32 %v928, %v1918
        %v1935 = vadd.f32 %v929, %v1923
        %v1936 = vadd.f32 %v930, %v1926
        %v1937 = vmul.f32 %v1929, %v1450
        %v1938 = vmul.f32 %v1930, %v1455
        %v1939 = vmul.f32 %v1931, %v1460
        %v1940 = vmul.f32 %v1932, %v1465
        %v1941 = vmul.f32 %v1933, %v1470
        %v1942 = vmul.f32 %v1934, %v1475
        %v1943 = vmul.f32 %v1935, %v1480
        %v1944 = vmul.f32 %v1936, %v1485
        %1945 = vst.msk [vmem:[%s905] sm:$0xff] %vm933, %v1937
        %1946 = vst.msk [vmem:[%s905 + $0x8] sm:$0xff] %vm933, %v1938
        %1947 = vst.msk [vmem:[%s905 + $0x10] sm:$0xff] %vm933, %v1939
        %1948 = vst.msk [vmem:[%s905 + $0x18] sm:$0xff] %vm933, %v1940
        %1949 = vst.msk [vmem:[%s905 + $0x20] sm:$0xff] %vm933, %v1941
        %1950 = vst.msk [vmem:[%s905 + $0x28] sm:$0xff] %vm933, %v1942
        %1951 = vst.msk [vmem:[%s905 + $0x30] sm:$0xff] %vm933, %v1943
        %1952 = vst.msk [vmem:[%s905 + $0x38] sm:$0xff] %vm933, %v1944
        %v1953 = vld [vmem:[%s770] sm:$0xff]
        %v1954 = vld [vmem:[%s770 + $0x8] sm:$0xff]
        %v1955 = vld [vmem:[%s770 + $0x10] sm:$0xff]
        %v1956 = vld [vmem:[%s770 + $0x18] sm:$0xff]
        %v1957 = vld [vmem:[%s770 + $0x20] sm:$0xff]
        %v1958 = vld [vmem:[%s770 + $0x28] sm:$0xff]
        %v1959 = vld [vmem:[%s770 + $0x30] sm:$0xff]
        %v1960 = vld [vmem:[%s770 + $0x38] sm:$0xff]
        %v1962 = vcombine.high %v932, %v932
        %v1964 = vunpack.c.l.s4 1966171168
        %v1965 = vunpack.c.0.s8 %v1964
        %v1966 = vlaneseq
        %v1967 = vshrl.u32 %v1966, 7
        %v1968 = vsub.s32 %v1965, %v1967
        %v1969 = vrot.slane %v932, %v1968
        %v1971 = vunpack.c.l.s4 1966171168
        %v1972 = vunpack.c.0.s8 %v1971
        %v1973 = vlaneseq
        %v1974 = vshrl.u32 %v1973, 7
        %v1975 = vsub.s32 %v1972, %v1974
        %v1976 = vrot.slane %v1962, %v1975
        %v1977 = vcombine.high %v1969, %v1969
        %v1978 = vcombine.high %v1976, %v1976
        %v1980 = vunpack.c.l.s4 1966171168
        %v1981 = vunpack.c.0.s8 %v1980
        %v1982 = vlaneseq
        %v1983 = vshrl.u32 %v1982, 7
        %v1984 = vsub.s32 %v1981, %v1983
        %v1985 = vrot.slane %v1969, %v1984
        %v1987 = vunpack.c.l.s4 1966171168
        %v1988 = vunpack.c.0.s8 %v1987
        %v1989 = vlaneseq
        %v1990 = vshrl.u32 %v1989, 7
        %v1991 = vsub.s32 %v1988, %v1990
        %v1992 = vrot.slane %v1976, %v1991
        %v1994 = vunpack.c.l.s4 1966171168
        %v1995 = vunpack.c.0.s8 %v1994
        %v1996 = vlaneseq
        %v1997 = vshrl.u32 %v1996, 7
        %v1998 = vsub.s32 %v1995, %v1997
        %v1999 = vrot.slane %v1977, %v1998
        %v2001 = vunpack.c.l.s4 1966171168
        %v2002 = vunpack.c.0.s8 %v2001
        %v2003 = vlaneseq
        %v2004 = vshrl.u32 %v2003, 7
        %v2005 = vsub.s32 %v2002, %v2004
        %v2006 = vrot.slane %v1978, %v2005
        %v2007 = vcombine.high %v1985, %v1985
        %v2008 = vcombine.high %v1992, %v1992
        %v2009 = vcombine.high %v1999, %v1999
        %v2010 = vcombine.high %v2006, %v2006
        %v2019 = vlaneseq
        %v2020 = vshrl.u32 %v2019, 7
        %v2021 = vsub.s32 0, %v2020
        %v2022 = vrot.slane %v1985, %v2021
        %v2023 = vlaneseq
        %v2024 = vshrl.u32 %v2023, 7
        %v2025 = vsub.s32 0, %v2024
        %v2026 = vrot.slane %v1999, %v2025
        %v2027 = vlaneseq
        %v2028 = vshrl.u32 %v2027, 7
        %v2029 = vsub.s32 0, %v2028
        %v2030 = vrot.slane %v2007, %v2029
        %v2031 = vlaneseq
        %v2032 = vshrl.u32 %v2031, 7
        %v2033 = vsub.s32 0, %v2032
        %v2034 = vrot.slane %v2009, %v2033
        %v2035 = vlaneseq
        %v2036 = vshrl.u32 %v2035, 7
        %v2037 = vsub.s32 0, %v2036
        %v2038 = vrot.slane %v1992, %v2037
        %v2039 = vlaneseq
        %v2040 = vshrl.u32 %v2039, 7
        %v2041 = vsub.s32 0, %v2040
        %v2042 = vrot.slane %v2006, %v2041
        %v2043 = vlaneseq
        %v2044 = vshrl.u32 %v2043, 7
        %v2045 = vsub.s32 0, %v2044
        %v2046 = vrot.slane %v2008, %v2045
        %v2047 = vlaneseq
        %v2048 = vshrl.u32 %v2047, 7
        %v2049 = vsub.s32 0, %v2048
        %v2050 = vrot.slane %v2010, %v2049
        %v2059 = vmul.f32 %v2022, %v931
        %v2060 = vmul.f32 %v2026, %v931
        %v2061 = vmul.f32 %v2030, %v931
        %v2062 = vmul.f32 %v2034, %v931
        %v2063 = vmul.f32 %v2038, %v931
        %v2064 = vmul.f32 %v2042, %v931
        %v2065 = vmul.f32 %v2046, %v931
        %v2066 = vmul.f32 %v2050, %v931
        %v2067 = vpack.c.bf16 %v1954, %v1953
        %v2068 = vpack.c.bf16 %v1956, %v1955
        %v2069 = vpack.c.bf16 %v1958, %v1957
        %v2070 = vpack.c.bf16 %v1960, %v1959
        %v2071 = vld [vmem:[#allocation19] sm:$0xf]
        %v2072 = vld [vmem:[#allocation19 + $0x4] sm:$0xf]
        %v2073 = vld [vmem:[#allocation20] sm:$0x1]
        %v2075 = vlaneseq
        %v2076 = vshrl.u32 %v2075, 7
        %v2077 = vsub.s32 0, %v2076
        %v2078 = vrot.slane %v2073, %v2077
        %v2082 = vunpack.c.l.b16 %v2071
        %v2083 = vunpack.c.l.b16 %v2072
        %v2084 = vpack.c.b16 %v2083, %v2082
        %v2087 = vsel %vm933, %v2067, 0
        %v2090 = vsel %vm933, %v2068, 0
        %v2093 = vsel %vm933, %v2069, 0
        %v2096 = vsel %vm933, %v2070, 0
        %2098 = vmatprep.subr.bf16.mxu0 0
        %2099 = vmatpush1.bf16.msra.mxu0 %v2084
        %2100 = vmatprep.subr.bf16.mxu0 0
        %2101 = vmatpush1.bf16.msra.mxu0 0
        %2102 = vmatprep.subr.bf16.mxu0 0
        %2103 = vmatpush1.bf16.msra.mxu0 0
        %2104 = vmatprep.subr.bf16.mxu0 0
        %2105 = vmatpush1.bf16.msra.mxu0 0
        %2106 = vmatprep.subr.bf16.mxu0 0
        %2107 = vmatpush1.bf16.msra.mxu0 0
        %2108 = vmatprep.subr.bf16.mxu0 0
        %2109 = vmatpush1.bf16.msra.mxu0 0
        %2110 = vmatprep.subr.bf16.mxu0 0
        %2111 = vmatpush1.bf16.msra.mxu0 0
        %2112 = vmatprep.subr.bf16.mxu0 0
        %2113 = vmatpush1.bf16.msra.mxu0 0
        %2114 = vmatprep.subr.bf16.mxu0 0
        %2115 = vmatpush1.bf16.msra.mxu0 0
        %2116 = vmatprep.subr.bf16.mxu0 0
        %2117 = vmatpush1.bf16.msra.mxu0 0
        %2118 = vmatprep.subr.bf16.mxu0 0
        %2119 = vmatpush1.bf16.msra.mxu0 0
        %2120 = vmatprep.subr.bf16.mxu0 0
        %2121 = vmatpush1.bf16.msra.mxu0 0
        %2122 = vmatprep.subr.bf16.mxu0 0
        %2123 = vmatpush1.bf16.msra.mxu0 0
        %2124 = vmatprep.subr.bf16.mxu0 0
        %2125 = vmatpush1.bf16.msra.mxu0 0
        %2126 = vmatprep.subr.bf16.mxu0 0
        %2127 = vmatpush1.bf16.msra.mxu0 0
        %2128 = vmatprep.subr.bf16.mxu0 0
        %2129 = vmatpush1.bf16.msra.mxu0 0
        %2130 = vmatprep.mubr.bf16.mxu0 0
        %2131 = vmatmul.mubr.bf16.gmra.mrb[0].mxu0 %v2087
        %v2132 = vpop.f32.mrb[0].mxu0
        %v2133 = vadd.f32 %v2078, %v2132
        %v2134 = vpop.f32.mrb[0].mxu0
        %v2135 = vpop.f32.mrb[0].mxu0
        %v2136 = vadd.f32 %v2078, %v2135
        %v2137 = vpop.f32.mrb[0].mxu0
        %2138 = vmatprep.mubr.bf16.mxu0 0
        %2139 = vmatmul.mubr.bf16.gmra.mrb[0].mxu0 %v2090
        %v2140 = vpop.f32.mrb[0].mxu0
        %v2141 = vadd.f32 %v2078, %v2140
        %v2142 = vpop.f32.mrb[0].mxu0
        %v2143 = vpop.f32.mrb[0].mxu0
        %v2144 = vadd.f32 %v2078, %v2143
        %v2145 = vpop.f32.mrb[0].mxu0
        %2146 = vmatprep.mubr.bf16.mxu0 0
        %2147 = vmatmul.mubr.bf16.gmra.mrb[0].mxu0 %v2093
        %v2148 = vpop.f32.mrb[0].mxu0
        %v2149 = vadd.f32 %v2078, %v2148
        %v2150 = vpop.f32.mrb[0].mxu0
        %v2151 = vpop.f32.mrb[0].mxu0
        %v2152 = vadd.f32 %v2078, %v2151
        %v2153 = vpop.f32.mrb[0].mxu0
        %2154 = vmatprep.mubr.bf16.mxu0 0
        %2155 = vmatmul.mubr.bf16.gmra.mrb[0].mxu0 %v2096
        %v2156 = vpop.f32.mrb[0].mxu0
        %v2157 = vadd.f32 %v2078, %v2156
        %v2158 = vpop.f32.mrb[0].mxu0
        %v2159 = vpop.f32.mrb[0].mxu0
        %v2160 = vadd.f32 %v2078, %v2159
        %v2161 = vpop.f32.mrb[0].mxu0
        %2162 = vdwg.mxu0
        %2164 = vset.pattern.permute.xlu0 0
        %2165 = vperm.xlu0 %2164, %v2059
        %v2166 = vpop.permute.xlu0 %2165
        %2169 = vset.pattern.permute.xlu0 0
        %2170 = vperm.xlu0 %2169, %v2060
        %v2171 = vpop.permute.xlu0 %2170
        %2174 = vset.pattern.permute.xlu0 0
        %2175 = vperm.xlu0 %2174, %v2061
        %v2176 = vpop.permute.xlu0 %2175
        %2179 = vset.pattern.permute.xlu0 0
        %2180 = vperm.xlu0 %2179, %v2062
        %v2181 = vpop.permute.xlu0 %2180
        %2184 = vset.pattern.permute.xlu0 0
        %2185 = vperm.xlu0 %2184, %v2063
        %v2186 = vpop.permute.xlu0 %2185
        %2189 = vset.pattern.permute.xlu0 0
        %2190 = vperm.xlu0 %2189, %v2064
        %v2191 = vpop.permute.xlu0 %2190
        %2194 = vset.pattern.permute.xlu0 0
        %2195 = vperm.xlu0 %2194, %v2065
        %v2196 = vpop.permute.xlu0 %2195
        %2199 = vset.pattern.permute.xlu0 0
        %2200 = vperm.xlu0 %2199, %v2066
        %v2201 = vpop.permute.xlu0 %2200
        %v2203 = vmul.f32 %v2133, %v2166
        %v2204 = vmul.f32 %v2136, %v2171
        %v2205 = vmul.f32 %v2141, %v2176
        %v2206 = vmul.f32 %v2144, %v2181
        %v2207 = vmul.f32 %v2149, %v2186
        %v2208 = vmul.f32 %v2152, %v2191
        %v2209 = vmul.f32 %v2157, %v2196
        %v2210 = vmul.f32 %v2160, %v2201
        %v2211 = vadd.f32 %v2203, 1.0
        %v2212 = vadd.f32 %v2204, 1.0
        %v2213 = vadd.f32 %v2205, 1.0
        %v2214 = vadd.f32 %v2206, 1.0
        %v2215 = vadd.f32 %v2207, 1.0
        %v2216 = vadd.f32 %v2208, 1.0
        %v2217 = vadd.f32 %v2209, 1.0
        %v2218 = vadd.f32 %v2210, 1.0
        %v2219 = vxor.u32 %v2133, 2147483648
        %v2220 = vxor.u32 %v2136, 2147483648
        %v2221 = vxor.u32 %v2141, 2147483648
        %v2222 = vxor.u32 %v2144, 2147483648
        %v2223 = vxor.u32 %v2149, 2147483648
        %v2224 = vxor.u32 %v2152, 2147483648
        %v2225 = vxor.u32 %v2157, 2147483648
        %v2226 = vxor.u32 %v2160, 2147483648
        %v2227 = vmul.f32 %v2219, 1.442695
        %v2228 = vpow.pop %v2227
        %v2229 = vmul.f32 %v2220, 1.442695
        %v2230 = vpow.pop %v2229
        %v2231 = vmul.f32 %v2221, 1.442695
        %v2232 = vpow.pop %v2231
        %v2233 = vmul.f32 %v2222, 1.442695
        %v2234 = vpow.pop %v2233
        %v2235 = vmul.f32 %v2223, 1.442695
        %v2236 = vpow.pop %v2235
        %v2237 = vmul.f32 %v2224, 1.442695
        %v2238 = vpow.pop %v2237
        %v2239 = vmul.f32 %v2225, 1.442695
        %v2240 = vpow.pop %v2239
        %v2241 = vmul.f32 %v2226, 1.442695
        %v2242 = vpow.pop %v2241
        %v2243 = vadd.f32 %v2228, 1.0
        %v2244 = vadd.f32 %v2230, 1.0
        %v2245 = vadd.f32 %v2232, 1.0
        %v2246 = vadd.f32 %v2234, 1.0
        %v2247 = vadd.f32 %v2236, 1.0
        %v2248 = vadd.f32 %v2238, 1.0
        %v2249 = vadd.f32 %v2240, 1.0
        %v2250 = vadd.f32 %v2242, 1.0
        %v2251 = vrcp.pop %v2243
        %v2252 = vmul.f32 1.0, %v2251
        %v2253 = vrcp.pop %v2244
        %v2254 = vmul.f32 1.0, %v2253
        %v2255 = vrcp.pop %v2245
        %v2256 = vmul.f32 1.0, %v2255
        %v2257 = vrcp.pop %v2246
        %v2258 = vmul.f32 1.0, %v2257
        %v2259 = vrcp.pop %v2247
        %v2260 = vmul.f32 1.0, %v2259
        %v2261 = vrcp.pop %v2248
        %v2262 = vmul.f32 1.0, %v2261
        %v2263 = vrcp.pop %v2249
        %v2264 = vmul.f32 1.0, %v2263
        %v2265 = vrcp.pop %v2250
        %v2266 = vmul.f32 1.0, %v2265
        %v2268 = vcombine.high %v1251, %v1251
        %v2270 = vunpack.c.l.s4 1966171168
        %v2271 = vunpack.c.0.s8 %v2270
        %v2272 = vlaneseq
        %v2273 = vshrl.u32 %v2272, 7
        %v2274 = vsub.s32 %v2271, %v2273
        %v2275 = vrot.slane %v1251, %v2274
        %v2277 = vunpack.c.l.s4 1966171168
        %v2278 = vunpack.c.0.s8 %v2277
        %v2279 = vlaneseq
        %v2280 = vshrl.u32 %v2279, 7
        %v2281 = vsub.s32 %v2278, %v2280
        %v2282 = vrot.slane %v2268, %v2281
        %v2283 = vcombine.high %v2275, %v2275
        %v2284 = vcombine.high %v2282, %v2282
        %v2286 = vunpack.c.l.s4 1966171168
        %v2287 = vunpack.c.0.s8 %v2286
        %v2288 = vlaneseq
        %v2289 = vshrl.u32 %v2288, 7
        %v2290 = vsub.s32 %v2287, %v2289
        %v2291 = vrot.slane %v2275, %v2290
        %v2293 = vunpack.c.l.s4 1966171168
        %v2294 = vunpack.c.0.s8 %v2293
        %v2295 = vlaneseq
        %v2296 = vshrl.u32 %v2295, 7
        %v2297 = vsub.s32 %v2294, %v2296
        %v2298 = vrot.slane %v2282, %v2297
        %v2300 = vunpack.c.l.s4 1966171168
        %v2301 = vunpack.c.0.s8 %v2300
        %v2302 = vlaneseq
        %v2303 = vshrl.u32 %v2302, 7
        %v2304 = vsub.s32 %v2301, %v2303
        %v2305 = vrot.slane %v2283, %v2304
        %v2307 = vunpack.c.l.s4 1966171168
        %v2308 = vunpack.c.0.s8 %v2307
        %v2309 = vlaneseq
        %v2310 = vshrl.u32 %v2309, 7
        %v2311 = vsub.s32 %v2308, %v2310
        %v2312 = vrot.slane %v2284, %v2311
        %v2313 = vcombine.high %v2291, %v2291
        %v2314 = vcombine.high %v2298, %v2298
        %v2315 = vcombine.high %v2305, %v2305
        %v2316 = vcombine.high %v2312, %v2312
        %v2317 = vlaneseq
        %v2318 = vshrl.u32 %v2317, 7
        %v2319 = vsub.s32 0, %v2318
        %v2320 = vrot.slane %v2291, %v2319
        %v2321 = vlaneseq
        %v2322 = vshrl.u32 %v2321, 7
        %v2323 = vsub.s32 0, %v2322
        %v2324 = vrot.slane %v2305, %v2323
        %v2325 = vlaneseq
        %v2326 = vshrl.u32 %v2325, 7
        %v2327 = vsub.s32 0, %v2326
        %v2328 = vrot.slane %v2313, %v2327
        %v2329 = vlaneseq
        %v2330 = vshrl.u32 %v2329, 7
        %v2331 = vsub.s32 0, %v2330
        %v2332 = vrot.slane %v2315, %v2331
        %v2333 = vlaneseq
        %v2334 = vshrl.u32 %v2333, 7
        %v2335 = vsub.s32 0, %v2334
        %v2336 = vrot.slane %v2298, %v2335
        %v2337 = vlaneseq
        %v2338 = vshrl.u32 %v2337, 7
        %v2339 = vsub.s32 0, %v2338
        %v2340 = vrot.slane %v2312, %v2339
        %v2341 = vlaneseq
        %v2342 = vshrl.u32 %v2341, 7
        %v2343 = vsub.s32 0, %v2342
        %v2344 = vrot.slane %v2314, %v2343
        %v2345 = vlaneseq
        %v2346 = vshrl.u32 %v2345, 7
        %v2347 = vsub.s32 0, %v2346
        %v2348 = vrot.slane %v2316, %v2347
        %2357 = vrot.lane.b32.xlu0 %v1250, 64
        %v2358 = vpop.permute.xlu0 %2357
        %v2360 = vmul.f32 %v2320, %v2358
        %v2361 = vmul.f32 %v2324, %v2358
        %v2362 = vmul.f32 %v2328, %v2358
        %v2363 = vmul.f32 %v2332, %v2358
        %v2364 = vmul.f32 %v2336, %v2358
        %v2365 = vmul.f32 %v2340, %v2358
        %v2366 = vmul.f32 %v2344, %v2358
        %v2367 = vmul.f32 %v2348, %v2358
        %v2368 = vmul.f32 %v2360, 0.35355338
        %v2369 = vmul.f32 %v2361, 0.35355338
        %v2370 = vmul.f32 %v2362, 0.35355338
        %v2371 = vmul.f32 %v2363, 0.35355338
        %v2372 = vmul.f32 %v2364, 0.35355338
        %v2373 = vmul.f32 %v2365, 0.35355338
        %v2374 = vmul.f32 %v2366, 0.35355338
        %v2375 = vmul.f32 %v2367, 0.35355338
        %2384 = vrot.lane.b32.xlu0 %v2211, 32
        %v2385 = vpop.permute.xlu0 %2384
        %2386 = vrot.lane.b32.xlu0 %v2212, 32
        %v2387 = vpop.permute.xlu0 %2386
        %2388 = vrot.lane.b32.xlu0 %v2213, 32
        %v2389 = vpop.permute.xlu0 %2388
        %2390 = vrot.lane.b32.xlu0 %v2214, 32
        %v2391 = vpop.permute.xlu0 %2390
        %2392 = vrot.lane.b32.xlu0 %v2215, 32
        %v2393 = vpop.permute.xlu0 %2392
        %2394 = vrot.lane.b32.xlu0 %v2216, 32
        %v2395 = vpop.permute.xlu0 %2394
        %2396 = vrot.lane.b32.xlu0 %v2217, 32
        %v2397 = vpop.permute.xlu0 %2396
        %2398 = vrot.lane.b32.xlu0 %v2218, 32
        %v2399 = vpop.permute.xlu0 %2398
        %v2408 = vmul.f32 %v2368, %v2385
        %v2409 = vmul.f32 %v2369, %v2387
        %v2410 = vmul.f32 %v2370, %v2389
        %v2411 = vmul.f32 %v2371, %v2391
        %v2412 = vmul.f32 %v2372, %v2393
        %v2413 = vmul.f32 %v2373, %v2395
        %v2414 = vmul.f32 %v2374, %v2397
        %v2415 = vmul.f32 %v2375, %v2399
        %v2416 = vadd.f32 %v2408, %v2203
        %v2417 = vadd.f32 %v2409, %v2204
        %v2418 = vadd.f32 %v2410, %v2205
        %v2419 = vadd.f32 %v2411, %v2206
        %v2420 = vadd.f32 %v2412, %v2207
        %v2421 = vadd.f32 %v2413, %v2208
        %v2422 = vadd.f32 %v2414, %v2209
        %v2423 = vadd.f32 %v2415, %v2210
        %2424 = vrot.lane.b32.xlu0 %v2211, 64
        %v2425 = vpop.permute.xlu0 %2424
        %2426 = vrot.lane.b32.xlu0 %v2212, 64
        %v2427 = vpop.permute.xlu0 %2426
        %2428 = vrot.lane.b32.xlu0 %v2213, 64
        %v2429 = vpop.permute.xlu0 %2428
        %2430 = vrot.lane.b32.xlu0 %v2214, 64
        %v2431 = vpop.permute.xlu0 %2430
        %2432 = vrot.lane.b32.xlu0 %v2215, 64
        %v2433 = vpop.permute.xlu0 %2432
        %2434 = vrot.lane.b32.xlu0 %v2216, 64
        %v2435 = vpop.permute.xlu0 %2434
        %2436 = vrot.lane.b32.xlu0 %v2217, 64
        %v2437 = vpop.permute.xlu0 %2436
        %2438 = vrot.lane.b32.xlu0 %v2218, 64
        %v2439 = vpop.permute.xlu0 %2438
        %v2448 = vmul.f32 %v2252, %v2425
        %v2449 = vmul.f32 %v2254, %v2427
        %v2450 = vmul.f32 %v2256, %v2429
        %v2451 = vmul.f32 %v2258, %v2431
        %v2452 = vmul.f32 %v2260, %v2433
        %v2453 = vmul.f32 %v2262, %v2435
        %v2454 = vmul.f32 %v2264, %v2437
        %v2455 = vmul.f32 %v2266, %v2439
        %2464 = vrot.lane.b32.xlu0 %v2448, 96
        %v2465 = vpop.permute.xlu0 %2464
        %2466 = vrot.lane.b32.xlu0 %v2449, 96
        %v2467 = vpop.permute.xlu0 %2466
        %2468 = vrot.lane.b32.xlu0 %v2450, 96
        %v2469 = vpop.permute.xlu0 %2468
        %2470 = vrot.lane.b32.xlu0 %v2451, 96
        %v2471 = vpop.permute.xlu0 %2470
        %2472 = vrot.lane.b32.xlu0 %v2452, 96
        %v2473 = vpop.permute.xlu0 %2472
        %2474 = vrot.lane.b32.xlu0 %v2453, 96
        %v2475 = vpop.permute.xlu0 %2474
        %2476 = vrot.lane.b32.xlu0 %v2454, 96
        %v2477 = vpop.permute.xlu0 %2476
        %2478 = vrot.lane.b32.xlu0 %v2455, 96
        %v2479 = vpop.permute.xlu0 %2478
        %v2488 = vmul.f32 %v2416, %v2465
        %v2489 = vmul.f32 %v2417, %v2467
        %v2490 = vmul.f32 %v2418, %v2469
        %v2491 = vmul.f32 %v2419, %v2471
        %v2492 = vmul.f32 %v2420, %v2473
        %v2493 = vmul.f32 %v2421, %v2475
        %v2494 = vmul.f32 %v2422, %v2477
        %v2495 = vmul.f32 %v2423, %v2479
        %v2496 = vadd.f32 %v2488, %v2203
        %v2497 = vadd.f32 %v2489, %v2204
        %v2498 = vadd.f32 %v2490, %v2205
        %v2499 = vadd.f32 %v2491, %v2206
        %v2500 = vadd.f32 %v2492, %v2207
        %v2501 = vadd.f32 %v2493, %v2208
        %v2502 = vadd.f32 %v2494, %v2209
        %v2503 = vadd.f32 %v2495, %v2210
        %vm2504 = vcmp.gt.f32.partialorder %v932, 0.0
        %v2505 = vsel %vm2504, 1, 0
        %2506 = vset.pattern.permute.xlu0 0
        %2507 = vperm.xlu0 %2506, %v2505
        %v2508 = vpop.permute.xlu0 %2507
        %vm2509 = vcmp.eq.s32.totalorder %v2508, 1
        %v2510 = vsel %vm2509, %v1785, -1e+30
        %v2511 = vsel %vm2509, %v1786, -1e+30
        %v2512 = vsel %vm2509, %v1787, -1e+30
        %v2513 = vsel %vm2509, %v1788, -1e+30
        %v2514 = vsel %vm2509, %v1789, -1e+30
        %v2515 = vsel %vm2509, %v1790, -1e+30
        %v2516 = vsel %vm2509, %v1791, -1e+30
        %v2517 = vsel %vm2509, %v1792, -1e+30
        %vm2518 = vcmp.gt.f32.partialorder %v1985, 0.0
        %vm2519 = vcmp.gt.f32.partialorder %v1999, 0.0
        %vm2520 = vcmp.gt.f32.partialorder %v2007, 0.0
        %vm2521 = vcmp.gt.f32.partialorder %v2009, 0.0
        %vm2522 = vcmp.gt.f32.partialorder %v1992, 0.0
        %vm2523 = vcmp.gt.f32.partialorder %v2006, 0.0
        %vm2524 = vcmp.gt.f32.partialorder %v2008, 0.0
        %vm2525 = vcmp.gt.f32.partialorder %v2010, 0.0
        %v2526 = vsel %vm2518, 1, 0
        %v2527 = vsel %vm2519, 1, 0
        %v2528 = vsel %vm2520, 1, 0
        %v2529 = vsel %vm2521, 1, 0
        %v2530 = vsel %vm2522, 1, 0
        %v2531 = vsel %vm2523, 1, 0
        %v2532 = vsel %vm2524, 1, 0
        %v2533 = vsel %vm2525, 1, 0
        %v2534 = vlaneseq
        %v2535 = vshrl.u32 %v2534, 7
        %v2536 = vsub.s32 0, %v2535
        %v2537 = vrot.slane %v2526, %v2536
        %v2538 = vlaneseq
        %v2539 = vshrl.u32 %v2538, 7
        %v2540 = vsub.s32 0, %v2539
        %v2541 = vrot.slane %v2527, %v2540
        %v2542 = vlaneseq
        %v2543 = vshrl.u32 %v2542, 7
        %v2544 = vsub.s32 0, %v2543
        %v2545 = vrot.slane %v2528, %v2544
        %v2546 = vlaneseq
        %v2547 = vshrl.u32 %v2546, 7
        %v2548 = vsub.s32 0, %v2547
        %v2549 = vrot.slane %v2529, %v2548
        %v2550 = vlaneseq
        %v2551 = vshrl.u32 %v2550, 7
        %v2552 = vsub.s32 0, %v2551
        %v2553 = vrot.slane %v2530, %v2552
        %v2554 = vlaneseq
        %v2555 = vshrl.u32 %v2554, 7
        %v2556 = vsub.s32 0, %v2555
        %v2557 = vrot.slane %v2531, %v2556
        %v2558 = vlaneseq
        %v2559 = vshrl.u32 %v2558, 7
        %v2560 = vsub.s32 0, %v2559
        %v2561 = vrot.slane %v2532, %v2560
        %v2562 = vlaneseq
        %v2563 = vshrl.u32 %v2562, 7
        %v2564 = vsub.s32 0, %v2563
        %v2565 = vrot.slane %v2533, %v2564
        %2566 = vset.pattern.permute.xlu0 0
        %2567 = vperm.xlu0 %2566, %v2537
        %v2568 = vpop.permute.xlu0 %2567
        %2569 = vset.pattern.permute.xlu0 0
        %2570 = vperm.xlu0 %2569, %v2541
        %v2571 = vpop.permute.xlu0 %2570
        %2572 = vset.pattern.permute.xlu0 0
        %2573 = vperm.xlu0 %2572, %v2545
        %v2574 = vpop.permute.xlu0 %2573
        %2575 = vset.pattern.permute.xlu0 0
        %2576 = vperm.xlu0 %2575, %v2549
        %v2577 = vpop.permute.xlu0 %2576
        %2578 = vset.pattern.permute.xlu0 0
        %2579 = vperm.xlu0 %2578, %v2553
        %v2580 = vpop.permute.xlu0 %2579
        %2581 = vset.pattern.permute.xlu0 0
        %2582 = vperm.xlu0 %2581, %v2557
        %v2583 = vpop.permute.xlu0 %2582
        %2584 = vset.pattern.permute.xlu0 0
        %2585 = vperm.xlu0 %2584, %v2561
        %v2586 = vpop.permute.xlu0 %2585
        %2587 = vset.pattern.permute.xlu0 0
        %2588 = vperm.xlu0 %2587, %v2565
        %v2589 = vpop.permute.xlu0 %2588
        %vm2590 = vcmp.eq.s32.totalorder %v2568, 1
        %vm2591 = vcmp.eq.s32.totalorder %v2571, 1
        %vm2592 = vcmp.eq.s32.totalorder %v2574, 1
        %vm2593 = vcmp.eq.s32.totalorder %v2577, 1
        %vm2594 = vcmp.eq.s32.totalorder %v2580, 1
        %vm2595 = vcmp.eq.s32.totalorder %v2583, 1
        %vm2596 = vcmp.eq.s32.totalorder %v2586, 1
        %vm2597 = vcmp.eq.s32.totalorder %v2589, 1
        %v2598 = vsel %vm2590, %v2496, -1e+30
        %v2599 = vsel %vm2591, %v2497, -1e+30
        %v2600 = vsel %vm2592, %v2498, -1e+30
        %v2601 = vsel %vm2593, %v2499, -1e+30
        %v2602 = vsel %vm2594, %v2500, -1e+30
        %v2603 = vsel %vm2595, %v2501, -1e+30
        %v2604 = vsel %vm2596, %v2502, -1e+30
        %v2605 = vsel %vm2597, %v2503, -1e+30
        %v2606 = vsel %vm1851, %v2510, -inf
        %v2607 = vrot.slane %v2606, 4
        %v2608 = vmax.f32 %v2606, %v2607
        %v2609 = vrot.slane %v2608, 2
        %v2610 = vmax.f32 %v2608, %v2609
        %v2611 = vrot.slane %v2610, 1
        %v2612 = vmax.f32 %v2610, %v2611
        %v2613 = vsel %vm1851, %v2511, -inf
        %v2614 = vrot.slane %v2613, 4
        %v2615 = vmax.f32 %v2613, %v2614
        %v2616 = vrot.slane %v2615, 2
        %v2617 = vmax.f32 %v2615, %v2616
        %v2618 = vrot.slane %v2617, 1
        %v2619 = vmax.f32 %v2617, %v2618
        %v2620 = vsel %vm1851, %v2512, -inf
        %v2621 = vrot.slane %v2620, 4
        %v2622 = vmax.f32 %v2620, %v2621
        %v2623 = vrot.slane %v2622, 2
        %v2624 = vmax.f32 %v2622, %v2623
        %v2625 = vrot.slane %v2624, 1
        %v2626 = vmax.f32 %v2624, %v2625
        %v2627 = vsel %vm1851, %v2513, -inf
        %v2628 = vrot.slane %v2627, 4
        %v2629 = vmax.f32 %v2627, %v2628
        %v2630 = vrot.slane %v2629, 2
        %v2631 = vmax.f32 %v2629, %v2630
        %v2632 = vrot.slane %v2631, 1
        %v2633 = vmax.f32 %v2631, %v2632
        %v2634 = vsel %vm1851, %v2514, -inf
        %v2635 = vrot.slane %v2634, 4
        %v2636 = vmax.f32 %v2634, %v2635
        %v2637 = vrot.slane %v2636, 2
        %v2638 = vmax.f32 %v2636, %v2637
        %v2639 = vrot.slane %v2638, 1
        %v2640 = vmax.f32 %v2638, %v2639
        %v2641 = vsel %vm1851, %v2515, -inf
        %v2642 = vrot.slane %v2641, 4
        %v2643 = vmax.f32 %v2641, %v2642
        %v2644 = vrot.slane %v2643, 2
        %v2645 = vmax.f32 %v2643, %v2644
        %v2646 = vrot.slane %v2645, 1
        %v2647 = vmax.f32 %v2645, %v2646
        %v2648 = vsel %vm1851, %v2516, -inf
        %v2649 = vrot.slane %v2648, 4
        %v2650 = vmax.f32 %v2648, %v2649
        %v2651 = vrot.slane %v2650, 2
        %v2652 = vmax.f32 %v2650, %v2651
        %v2653 = vrot.slane %v2652, 1
        %v2654 = vmax.f32 %v2652, %v2653
        %v2655 = vsel %vm1851, %v2517, -inf
        %v2656 = vrot.slane %v2655, 4
        %v2657 = vmax.f32 %v2655, %v2656
        %v2658 = vrot.slane %v2657, 2
        %v2659 = vmax.f32 %v2657, %v2658
        %v2660 = vrot.slane %v2659, 1
        %v2661 = vmax.f32 %v2659, %v2660
        %vm2662 = vcmask 523520
        %v2663 = vsel %vm2662, %v2598, -inf
        %v2664 = vsel %vm2662, %v2599, -inf
        %v2665 = vsel %vm2662, %v2600, -inf
        %v2666 = vsel %vm2662, %v2601, -inf
        %v2667 = vsel %vm2662, %v2602, -inf
        %v2668 = vmax.f32 %v2663, %v2667
        %v2669 = vsel %vm2662, %v2603, -inf
        %v2670 = vmax.f32 %v2664, %v2669
        %v2671 = vsel %vm2662, %v2604, -inf
        %v2672 = vmax.f32 %v2665, %v2671
        %v2673 = vsel %vm2662, %v2605, -inf
        %v2674 = vmax.f32 %v2666, %v2673
        %v2675 = vmax.f32 %v2668, %v2670
        %v2676 = vmax.f32 %v2672, %v2674
        %v2677 = vmax.f32 %v2675, %v2676
        %v2679 = vrot.slane %v2677, 1
        %v2680 = vrot.slane %v2677, 2
        %v2681 = vrot.slane %v2677, 3
        %v2682 = vrot.slane %v2677, 4
        %v2683 = vrot.slane %v2677, 5
        %v2684 = vrot.slane %v2677, 6
        %v2685 = vrot.slane %v2677, 7
        %2686 = vrot.lane.b32.xlu0 %v2677, 96
        %v2687 = vpop.permute.xlu0 %2686
        %2688 = vrot.lane.b32.xlu0 %v2679, 96
        %v2689 = vpop.permute.xlu0 %2688
        %2690 = vrot.lane.b32.xlu0 %v2680, 96
        %v2691 = vpop.permute.xlu0 %2690
        %2692 = vrot.lane.b32.xlu0 %v2681, 96
        %v2693 = vpop.permute.xlu0 %2692
        %2694 = vrot.lane.b32.xlu0 %v2682, 96
        %v2695 = vpop.permute.xlu0 %2694
        %2696 = vrot.lane.b32.xlu0 %v2683, 96
        %v2697 = vpop.permute.xlu0 %2696
        %2698 = vrot.lane.b32.xlu0 %v2684, 96
        %v2699 = vpop.permute.xlu0 %2698
        %2700 = vrot.lane.b32.xlu0 %v2685, 96
        %v2701 = vpop.permute.xlu0 %2700
        %v2710 = vmax.f32 %v2612, %v2687
        %v2711 = vmax.f32 %v2619, %v2689
        %v2712 = vmax.f32 %v2626, %v2691
        %v2713 = vmax.f32 %v2633, %v2693
        %v2714 = vmax.f32 %v2640, %v2695
        %v2715 = vmax.f32 %v2647, %v2697
        %v2716 = vmax.f32 %v2654, %v2699
        %v2717 = vmax.f32 %v2661, %v2701
        %v2718 = vlaneseq
        %v2719 = vshrl.u32 %v2718, 7
        %v2720 = vsub.s32 0, %v2719
        %v2721 = vrot.slane %v2710, %v2720
        %v2722 = vlaneseq
        %v2723 = vshrl.u32 %v2722, 7
        %v2724 = vsub.s32 0, %v2723
        %v2725 = vrot.slane %v2711, %v2724
        %v2726 = vlaneseq
        %v2727 = vshrl.u32 %v2726, 7
        %v2728 = vsub.s32 0, %v2727
        %v2729 = vrot.slane %v2712, %v2728
        %v2730 = vlaneseq
        %v2731 = vshrl.u32 %v2730, 7
        %v2732 = vsub.s32 0, %v2731
        %v2733 = vrot.slane %v2713, %v2732
        %v2734 = vlaneseq
        %v2735 = vshrl.u32 %v2734, 7
        %v2736 = vsub.s32 0, %v2735
        %v2737 = vrot.slane %v2714, %v2736
        %v2738 = vlaneseq
        %v2739 = vshrl.u32 %v2738, 7
        %v2740 = vsub.s32 0, %v2739
        %v2741 = vrot.slane %v2715, %v2740
        %v2742 = vlaneseq
        %v2743 = vshrl.u32 %v2742, 7
        %v2744 = vsub.s32 0, %v2743
        %v2745 = vrot.slane %v2716, %v2744
        %v2746 = vlaneseq
        %v2747 = vshrl.u32 %v2746, 7
        %v2748 = vsub.s32 0, %v2747
        %v2749 = vrot.slane %v2717, %v2748
        %v2750 = vsub.f32 %v2510, %v2721
        %v2751 = vsub.f32 %v2511, %v2725
        %v2752 = vsub.f32 %v2512, %v2729
        %v2753 = vsub.f32 %v2513, %v2733
        %v2754 = vsub.f32 %v2514, %v2737
        %v2755 = vsub.f32 %v2515, %v2741
        %v2756 = vsub.f32 %v2516, %v2745
        %v2757 = vsub.f32 %v2517, %v2749
        %v2758 = vmul.f32 %v2750, 1.442695
        %v2759 = vpow.pop %v2758
        %v2760 = vmul.f32 %v2751, 1.442695
        %v2761 = vpow.pop %v2760
        %v2762 = vmul.f32 %v2752, 1.442695
        %v2763 = vpow.pop %v2762
        %v2764 = vmul.f32 %v2753, 1.442695
        %v2765 = vpow.pop %v2764
        %v2766 = vmul.f32 %v2754, 1.442695
        %v2767 = vpow.pop %v2766
        %v2768 = vmul.f32 %v2755, 1.442695
        %v2769 = vpow.pop %v2768
        %v2770 = vmul.f32 %v2756, 1.442695
        %v2771 = vpow.pop %v2770
        %v2772 = vmul.f32 %v2757, 1.442695
        %v2773 = vpow.pop %v2772
        %v2782 = vrot.slane %v2711, 7
        %v2783 = vsel %vm998, %v2782, %v2710
        %v2784 = vrot.slane %v2712, 6
        %v2785 = vsel %vm1000, %v2784, %v2783
        %v2786 = vrot.slane %v2713, 5
        %v2787 = vsel %vm1002, %v2786, %v2785
        %v2788 = vrot.slane %v2714, 4
        %v2789 = vsel %vm1004, %v2788, %v2787
        %v2790 = vrot.slane %v2715, 3
        %v2791 = vsel %vm1006, %v2790, %v2789
        %v2792 = vrot.slane %v2716, 2
        %v2793 = vsel %vm1008, %v2792, %v2791
        %v2794 = vrot.slane %v2717, 1
        %v2795 = vsel %vm1010, %v2794, %v2793
        %2796 = vrot.lane.b32.xlu0 %v2795, 32
        %v2797 = vpop.permute.xlu0 %2796
        %v2799 = vsub.f32 %v2598, %v2797
        %v2800 = vsub.f32 %v2599, %v2797
        %v2801 = vsub.f32 %v2600, %v2797
        %v2802 = vsub.f32 %v2601, %v2797
        %v2803 = vsub.f32 %v2602, %v2797
        %v2804 = vsub.f32 %v2603, %v2797
        %v2805 = vsub.f32 %v2604, %v2797
        %v2806 = vsub.f32 %v2605, %v2797
        %v2807 = vmul.f32 %v2799, 1.442695
        %v2808 = vpow.pop %v2807
        %v2809 = vmul.f32 %v2800, 1.442695
        %v2810 = vpow.pop %v2809
        %v2811 = vmul.f32 %v2801, 1.442695
        %v2812 = vpow.pop %v2811
        %v2813 = vmul.f32 %v2802, 1.442695
        %v2814 = vpow.pop %v2813
        %v2815 = vmul.f32 %v2803, 1.442695
        %v2816 = vpow.pop %v2815
        %v2817 = vmul.f32 %v2804, 1.442695
        %v2818 = vpow.pop %v2817
        %v2819 = vmul.f32 %v2805, 1.442695
        %v2820 = vpow.pop %v2819
        %v2821 = vmul.f32 %v2806, 1.442695
        %v2822 = vpow.pop %v2821
        %v2823 = vsel %vm1851, %v2759, 0.0
        %v2824 = vrot.slane %v2823, 4
        %v2825 = vadd.f32 %v2823, %v2824
        %v2826 = vrot.slane %v2825, 2
        %v2827 = vadd.f32 %v2825, %v2826
        %v2828 = vrot.slane %v2827, 1
        %v2829 = vadd.f32 %v2827, %v2828
        %v2830 = vsel %vm1851, %v2761, 0.0
        %v2831 = vrot.slane %v2830, 4
        %v2832 = vadd.f32 %v2830, %v2831
        %v2833 = vrot.slane %v2832, 2
        %v2834 = vadd.f32 %v2832, %v2833
        %v2835 = vrot.slane %v2834, 1
        %v2836 = vadd.f32 %v2834, %v2835
        %v2837 = vsel %vm1851, %v2763, 0.0
        %v2838 = vrot.slane %v2837, 4
        %v2839 = vadd.f32 %v2837, %v2838
        %v2840 = vrot.slane %v2839, 2
        %v2841 = vadd.f32 %v2839, %v2840
        %v2842 = vrot.slane %v2841, 1
        %v2843 = vadd.f32 %v2841, %v2842
        %v2844 = vsel %vm1851, %v2765, 0.0
        %v2845 = vrot.slane %v2844, 4
        %v2846 = vadd.f32 %v2844, %v2845
        %v2847 = vrot.slane %v2846, 2
        %v2848 = vadd.f32 %v2846, %v2847
        %v2849 = vrot.slane %v2848, 1
        %v2850 = vadd.f32 %v2848, %v2849
        %v2851 = vsel %vm1851, %v2767, 0.0
        %v2852 = vrot.slane %v2851, 4
        %v2853 = vadd.f32 %v2851, %v2852
        %v2854 = vrot.slane %v2853, 2
        %v2855 = vadd.f32 %v2853, %v2854
        %v2856 = vrot.slane %v2855, 1
        %v2857 = vadd.f32 %v2855, %v2856
        %v2858 = vsel %vm1851, %v2769, 0.0
        %v2859 = vrot.slane %v2858, 4
        %v2860 = vadd.f32 %v2858, %v2859
        %v2861 = vrot.slane %v2860, 2
        %v2862 = vadd.f32 %v2860, %v2861
        %v2863 = vrot.slane %v2862, 1
        %v2864 = vadd.f32 %v2862, %v2863
        %v2865 = vsel %vm1851, %v2771, 0.0
        %v2866 = vrot.slane %v2865, 4
        %v2867 = vadd.f32 %v2865, %v2866
        %v2868 = vrot.slane %v2867, 2
        %v2869 = vadd.f32 %v2867, %v2868
        %v2870 = vrot.slane %v2869, 1
        %v2871 = vadd.f32 %v2869, %v2870
        %v2872 = vsel %vm1851, %v2773, 0.0
        %v2873 = vrot.slane %v2872, 4
        %v2874 = vadd.f32 %v2872, %v2873
        %v2875 = vrot.slane %v2874, 2
        %v2876 = vadd.f32 %v2874, %v2875
        %v2877 = vrot.slane %v2876, 1
        %v2878 = vadd.f32 %v2876, %v2877
        %v2879 = vsel %vm2662, %v2808, 0.0
        %v2880 = vsel %vm2662, %v2810, 0.0
        %v2881 = vadd.f32 %v2879, %v2880
        %v2882 = vsel %vm2662, %v2812, 0.0
        %v2883 = vadd.f32 %v2881, %v2882
        %v2884 = vsel %vm2662, %v2814, 0.0
        %v2885 = vadd.f32 %v2883, %v2884
        %v2886 = vsel %vm2662, %v2816, 0.0
        %v2887 = vadd.f32 %v2885, %v2886
        %v2888 = vsel %vm2662, %v2818, 0.0
        %v2889 = vadd.f32 %v2887, %v2888
        %v2890 = vsel %vm2662, %v2820, 0.0
        %v2891 = vadd.f32 %v2889, %v2890
        %v2892 = vsel %vm2662, %v2822, 0.0
        %v2893 = vadd.f32 %v2891, %v2892
        %v2895 = vrot.slane %v2893, 1
        %v2896 = vrot.slane %v2893, 2
        %v2897 = vrot.slane %v2893, 3
        %v2898 = vrot.slane %v2893, 4
        %v2899 = vrot.slane %v2893, 5
        %v2900 = vrot.slane %v2893, 6
        %v2901 = vrot.slane %v2893, 7
        %2902 = vrot.lane.b32.xlu0 %v2893, 96
        %v2903 = vpop.permute.xlu0 %2902
        %2904 = vrot.lane.b32.xlu0 %v2895, 96
        %v2905 = vpop.permute.xlu0 %2904
        %2906 = vrot.lane.b32.xlu0 %v2896, 96
        %v2907 = vpop.permute.xlu0 %2906
        %2908 = vrot.lane.b32.xlu0 %v2897, 96
        %v2909 = vpop.permute.xlu0 %2908
        %2910 = vrot.lane.b32.xlu0 %v2898, 96
        %v2911 = vpop.permute.xlu0 %2910
        %2912 = vrot.lane.b32.xlu0 %v2899, 96
        %v2913 = vpop.permute.xlu0 %2912
        %2914 = vrot.lane.b32.xlu0 %v2900, 96
        %v2915 = vpop.permute.xlu0 %2914
        %2916 = vrot.lane.b32.xlu0 %v2901, 96
        %v2917 = vpop.permute.xlu0 %2916
        %v2926 = vadd.f32 %v2829, %v2903
        %v2927 = vadd.f32 %v2836, %v2905
        %v2928 = vadd.f32 %v2843, %v2907
        %v2929 = vadd.f32 %v2850, %v2909
        %v2930 = vadd.f32 %v2857, %v2911
        %v2931 = vadd.f32 %v2864, %v2913
        %v2932 = vadd.f32 %v2871, %v2915
        %v2933 = vadd.f32 %v2878, %v2917
        %2935 = vrot.lane.b32.xlu0 %v1252, 96
        %v2936 = vpop.permute.xlu0 %2935
        %v2938 = vmul.f32 %v2759, %v2936
        %v2939 = vmul.f32 %v2761, %v2936
        %v2940 = vmul.f32 %v2763, %v2936
        %v2941 = vmul.f32 %v2765, %v2936
        %v2942 = vmul.f32 %v2767, %v2936
        %v2943 = vmul.f32 %v2769, %v2936
        %v2944 = vmul.f32 %v2771, %v2936
        %v2945 = vmul.f32 %v2773, %v2936
        %v2946 = vsel %vm1851, %v2938, 0.0
        %v2947 = vrot.slane %v2946, 4
        %v2948 = vadd.f32 %v2946, %v2947
        %v2949 = vrot.slane %v2948, 2
        %v2950 = vadd.f32 %v2948, %v2949
        %v2951 = vrot.slane %v2950, 1
        %v2952 = vadd.f32 %v2950, %v2951
        %v2953 = vsel %vm1851, %v2939, 0.0
        %v2954 = vrot.slane %v2953, 4
        %v2955 = vadd.f32 %v2953, %v2954
        %v2956 = vrot.slane %v2955, 2
        %v2957 = vadd.f32 %v2955, %v2956
        %v2958 = vrot.slane %v2957, 1
        %v2959 = vadd.f32 %v2957, %v2958
        %v2960 = vsel %vm1851, %v2940, 0.0
        %v2961 = vrot.slane %v2960, 4
        %v2962 = vadd.f32 %v2960, %v2961
        %v2963 = vrot.slane %v2962, 2
        %v2964 = vadd.f32 %v2962, %v2963
        %v2965 = vrot.slane %v2964, 1
        %v2966 = vadd.f32 %v2964, %v2965
        %v2967 = vsel %vm1851, %v2941, 0.0
        %v2968 = vrot.slane %v2967, 4
        %v2969 = vadd.f32 %v2967, %v2968
        %v2970 = vrot.slane %v2969, 2
        %v2971 = vadd.f32 %v2969, %v2970
        %v2972 = vrot.slane %v2971, 1
        %v2973 = vadd.f32 %v2971, %v2972
        %v2974 = vsel %vm1851, %v2942, 0.0
        %v2975 = vrot.slane %v2974, 4
        %v2976 = vadd.f32 %v2974, %v2975
        %v2977 = vrot.slane %v2976, 2
        %v2978 = vadd.f32 %v2976, %v2977
        %v2979 = vrot.slane %v2978, 1
        %v2980 = vadd.f32 %v2978, %v2979
        %v2981 = vsel %vm1851, %v2943, 0.0
        %v2982 = vrot.slane %v2981, 4
        %v2983 = vadd.f32 %v2981, %v2982
        %v2984 = vrot.slane %v2983, 2
        %v2985 = vadd.f32 %v2983, %v2984
        %v2986 = vrot.slane %v2985, 1
        %v2987 = vadd.f32 %v2985, %v2986
        %v2988 = vsel %vm1851, %v2944, 0.0
        %v2989 = vrot.slane %v2988, 4
        %v2990 = vadd.f32 %v2988, %v2989
        %v2991 = vrot.slane %v2990, 2
        %v2992 = vadd.f32 %v2990, %v2991
        %v2993 = vrot.slane %v2992, 1
        %v2994 = vadd.f32 %v2992, %v2993
        %v2995 = vsel %vm1851, %v2945, 0.0
        %v2996 = vrot.slane %v2995, 4
        %v2997 = vadd.f32 %v2995, %v2996
        %v2998 = vrot.slane %v2997, 2
        %v2999 = vadd.f32 %v2997, %v2998
        %v3000 = vrot.slane %v2999, 1
        %v3001 = vadd.f32 %v2999, %v3000
        %3002 = vrot.lane.b32.xlu0 %v2320, 96
        %v3003 = vpop.permute.xlu0 %3002
        %3004 = vrot.lane.b32.xlu0 %v2324, 96
        %v3005 = vpop.permute.xlu0 %3004
        %3006 = vrot.lane.b32.xlu0 %v2328, 96
        %v3007 = vpop.permute.xlu0 %3006
        %3008 = vrot.lane.b32.xlu0 %v2332, 96
        %v3009 = vpop.permute.xlu0 %3008
        %3010 = vrot.lane.b32.xlu0 %v2336, 96
        %v3011 = vpop.permute.xlu0 %3010
        %3012 = vrot.lane.b32.xlu0 %v2340, 96
        %v3013 = vpop.permute.xlu0 %3012
        %3014 = vrot.lane.b32.xlu0 %v2344, 96
        %v3015 = vpop.permute.xlu0 %3014
        %3016 = vrot.lane.b32.xlu0 %v2348, 96
        %v3017 = vpop.permute.xlu0 %3016
        %v3026 = vmul.f32 %v2808, %v3003
        %v3027 = vmul.f32 %v2810, %v3005
        %v3028 = vmul.f32 %v2812, %v3007
        %v3029 = vmul.f32 %v2814, %v3009
        %v3030 = vmul.f32 %v2816, %v3011
        %v3031 = vmul.f32 %v2818, %v3013
        %v3032 = vmul.f32 %v2820, %v3015
        %v3033 = vmul.f32 %v2822, %v3017
        %v3034 = vsel %vm2662, %v3026, 0.0
        %v3035 = vsel %vm2662, %v3027, 0.0
        %v3036 = vadd.f32 %v3034, %v3035
        %v3037 = vsel %vm2662, %v3028, 0.0
        %v3038 = vadd.f32 %v3036, %v3037
        %v3039 = vsel %vm2662, %v3029, 0.0
        %v3040 = vadd.f32 %v3038, %v3039
        %v3041 = vsel %vm2662, %v3030, 0.0
        %v3042 = vadd.f32 %v3040, %v3041
        %v3043 = vsel %vm2662, %v3031, 0.0
        %v3044 = vadd.f32 %v3042, %v3043
        %v3045 = vsel %vm2662, %v3032, 0.0
        %v3046 = vadd.f32 %v3044, %v3045
        %v3047 = vsel %vm2662, %v3033, 0.0
        %v3048 = vadd.f32 %v3046, %v3047
        %v3050 = vrot.slane %v3048, 1
        %v3051 = vrot.slane %v3048, 2
        %v3052 = vrot.slane %v3048, 3
        %v3053 = vrot.slane %v3048, 4
        %v3054 = vrot.slane %v3048, 5
        %v3055 = vrot.slane %v3048, 6
        %v3056 = vrot.slane %v3048, 7
        %3057 = vrot.lane.b32.xlu0 %v3048, 96
        %v3058 = vpop.permute.xlu0 %3057
        %3059 = vrot.lane.b32.xlu0 %v3050, 96
        %v3060 = vpop.permute.xlu0 %3059
        %3061 = vrot.lane.b32.xlu0 %v3051, 96
        %v3062 = vpop.permute.xlu0 %3061
        %3063 = vrot.lane.b32.xlu0 %v3052, 96
        %v3064 = vpop.permute.xlu0 %3063
        %3065 = vrot.lane.b32.xlu0 %v3053, 96
        %v3066 = vpop.permute.xlu0 %3065
        %3067 = vrot.lane.b32.xlu0 %v3054, 96
        %v3068 = vpop.permute.xlu0 %3067
        %3069 = vrot.lane.b32.xlu0 %v3055, 96
        %v3070 = vpop.permute.xlu0 %3069
        %3071 = vrot.lane.b32.xlu0 %v3056, 96
        %v3072 = vpop.permute.xlu0 %3071
        %v3081 = vadd.f32 %v2952, %v3058
        %v3082 = vadd.f32 %v2959, %v3060
        %v3083 = vadd.f32 %v2966, %v3062
        %v3084 = vadd.f32 %v2973, %v3064
        %v3085 = vadd.f32 %v2980, %v3066
        %v3086 = vadd.f32 %v2987, %v3068
        %v3087 = vadd.f32 %v2994, %v3070
        %v3088 = vadd.f32 %v3001, %v3072
        %v3089 = vrcp.pop %v2926
        %v3090 = vmul.f32 %v3081, %v3089
        %v3091 = vrcp.pop %v2927
        %v3092 = vmul.f32 %v3082, %v3091
        %v3093 = vrcp.pop %v2928
        %v3094 = vmul.f32 %v3083, %v3093
        %v3095 = vrcp.pop %v2929
        %v3096 = vmul.f32 %v3084, %v3095
        %v3097 = vrcp.pop %v2930
        %v3098 = vmul.f32 %v3085, %v3097
        %v3099 = vrcp.pop %v2931
        %v3100 = vmul.f32 %v3086, %v3099
        %v3101 = vrcp.pop %v2932
        %v3102 = vmul.f32 %v3087, %v3101
        %v3103 = vrcp.pop %v2933
        %v3104 = vmul.f32 %v3088, %v3103
        %v3113 = vrot.slane %v3092, 7
        %v3114 = vsel %vm998, %v3113, %v3090
        %v3115 = vrot.slane %v3094, 6
        %v3116 = vsel %vm1000, %v3115, %v3114
        %v3117 = vrot.slane %v3096, 5
        %v3118 = vsel %vm1002, %v3117, %v3116
        %v3119 = vrot.slane %v3098, 4
        %v3120 = vsel %vm1004, %v3119, %v3118
        %v3121 = vrot.slane %v3100, 3
        %v3122 = vsel %vm1006, %v3121, %v3120
        %v3123 = vrot.slane %v3102, 2
        %v3124 = vsel %vm1008, %v3123, %v3122
        %v3125 = vrot.slane %v3104, 1
        %v3126 = vsel %vm1010, %v3125, %v3124
        %3128 = vst.msk [vmem:[%s912] sm:$0xff] %vm1851, %v3126
        %s3129 = sand.u32 %s416, 1
        %s3130 = scalar_lea.sflag [#allocation4], %s3129
        %s3131 = sand.u32 %s416, 1
        %s3132 = smul.addr %s3131, 64
        %s3133 = scalar_lea.vmem [#allocation25], %s3132
        %s3134 = sand.u32 %s52, 1
        %s3135 = scalar_lea.sflag [#allocation27], %s3134
        %s3136 = sand.u32 %s444, 1
        %s3137 = smul.addr %s3136, 8
        %s3138 = scalar_lea.vmem [#allocation26], %s3137
        %s3139 = sand.u32 %s52, 1
        %s3140 = scalar_lea.sflag [#allocation27], %s3139
        %s3141 = sand.u32 %s472, 1
        %s3142 = smul.addr %s3141, 8
        %s3143 = scalar_lea.vmem [#allocation28], %s3142
        // Predicated region
        $region133: #{dual_node_edge_block.4} parent=75 // pred_check
          %p3144 = pneg %p426
        $region134: #{dual_node_edge_block.4} parent=75 // pred_check_branch
          %3146 = sbr.rel (%p3144) target = $region136
        $region135: #{dual_node_edge_block.4} parent=75 // pred_region
          %s3147 = smul.u32 8, %s57
          %s3149 = ssub.s32 1024, 1024
          %3150 = vsyncadd %s3130, %s3149
          %s3151 = smul.addr %s56, 8
          %s3152 = sadd.s32 %s3147, %s3151
          %s3153 = smul.addr %s3152, 128
          %s3154 = scalar_lea.hbm %s14, %s3153
          %s3155 = sshll.u32 %s3133, 4
          %s3156 = int_to_ptr.vmem [resolvable:$true] %s3155
          %3161 = dma.vmem_to_hbm [thread:$0]  %s3156, 1024, %s3154, %s3130, 128, 128, 8
        $region136: #{dual_node_edge_block.4} parent=75 // pred_fallthru
          _
        // Predicated region
        $region137: #{dual_node_edge_block.4} parent=75 // pred_check
          %p3162 = pneg %p454
        $region138: #{dual_node_edge_block.4} parent=75 // pred_check_branch
          %3164 = sbr.rel (%p3162) target = $region140
        $region139: #{dual_node_edge_block.4} parent=75 // pred_region
          %s3166 = ssub.s32 128, 128
          %3167 = vsyncadd %s3135, %s3166
          %s3168 = sadd.s32 %s57, %s56
          %s3169 = smul.addr %s3168, 128
          %s3170 = scalar_lea.hbm %s15, %s3169
          %s3172 = sshll.u32 %s3138, 4
          %s3173 = int_to_ptr.vmem [resolvable:$true] %s3172
          %3175 = dma.vmem_to_hbm [thread:$0]  %s3173, 128, %s3170, %s3135
        $region140: #{dual_node_edge_block.4} parent=75 // pred_fallthru
          _
        // Predicated region
        $region141: #{dual_node_edge_block.4} parent=75 // pred_check
          %p3176 = pneg %p482
        $region142: #{dual_node_edge_block.4} parent=75 // pred_check_branch
          %3178 = sbr.rel (%p3176) target = $region144
        $region143: #{dual_node_edge_block.4} parent=75 // pred_region
          %s3180 = ssub.s32 128, 128
          %3181 = vsyncadd %s3140, %s3180
          %s3182 = sadd.s32 %s57, %s56
          %s3183 = smul.addr %s3182, 128
          %s3184 = scalar_lea.hbm %s16, %s3183
          %s3186 = sshll.u32 %s3143, 4
          %s3187 = int_to_ptr.vmem [resolvable:$true] %s3186
          %3189 = dma.vmem_to_hbm [thread:$0]  %s3187, 128, %s3184, %s3140
        $region144: #{dual_node_edge_block.4} parent=75 // pred_fallthru
          _
      $region76: #{dual_node_edge_block.4} parent=5 // pred_fallthru
        _
      %p3190 = scmp.le.s32.totalorder 2, %s47
      // Predicated region
      $region145: #{dual_node_edge_block.4} parent=5 // pred_check
        %p3191 = pneg %p3190
      $region146: #{dual_node_edge_block.4} parent=5 // pred_check_branch
        %3193 = sbr.rel (%p3191) target = $region148
      $region147: #{dual_node_edge_block.4} parent=5 // pred_region
        %s3194 = ssub.s32 %s47, 2
        // Predicated region
        $region149: #{dual_node_edge_block.4} parent=147 // pred_check
          %p3195 = pneg %p432
        $region150: #{dual_node_edge_block.4} parent=147 // pred_check_branch
          %3197 = sbr.rel (%p3195) target = $region152
        $region151: #{dual_node_edge_block.4} parent=147 // pred_region
          %s3198 = sand.u32 %s417, 1
          %s3199 = scalar_lea.sflag [#allocation4], %s3198
          %s3200 = sand.u32 %s417, 1
          %s3201 = smul.addr %s3200, 64
          %s3202 = scalar_lea.vmem [#allocation25], %s3201
          %3203 = dma.done %s3199, 1024
        $region152: #{dual_node_edge_block.4} parent=147 // pred_fallthru
          _
        // Predicated region
        $region153: #{dual_node_edge_block.4} parent=147 // pred_check
          %p3204 = pneg %p460
        $region154: #{dual_node_edge_block.4} parent=147 // pred_check_branch
          %3206 = sbr.rel (%p3204) target = $region156
        $region155: #{dual_node_edge_block.4} parent=147 // pred_region
          %s3207 = sand.u32 %s53, 1
          %s3208 = scalar_lea.sflag [#allocation27], %s3207
          %s3209 = sand.u32 %s445, 1
          %s3210 = smul.addr %s3209, 8
          %s3211 = scalar_lea.vmem [#allocation26], %s3210
          %3212 = dma.done %s3208, 128
        $region156: #{dual_node_edge_block.4} parent=147 // pred_fallthru
          _
        // Predicated region
        $region157: #{dual_node_edge_block.4} parent=147 // pred_check
          %p3213 = pneg %p488
        $region158: #{dual_node_edge_block.4} parent=147 // pred_check_branch
          %3215 = sbr.rel (%p3213) target = $region160
        $region159: #{dual_node_edge_block.4} parent=147 // pred_region
          %s3216 = sand.u32 %s53, 1
          %s3217 = scalar_lea.sflag [#allocation27], %s3216
          %s3218 = sand.u32 %s473, 1
          %s3219 = smul.addr %s3218, 8
          %s3220 = scalar_lea.vmem [#allocation28], %s3219
          %3221 = dma.done %s3217, 128
        $region160: #{dual_node_edge_block.4} parent=147 // pred_fallthru
          _
      $region148: #{dual_node_edge_block.4} parent=5 // pred_fallthru
        _
    $region6: #{dual_node_edge_block.4} parent=1 // loop_footer
      %s51 = sadd.s32 1, %s47
    $region7: #{dual_node_edge_block.4} parent=1 // loop_footer_branch
      %46 = sbr.rel target = $region3
    $region8: #{dual_node_edge_block.4} parent=1 // loop_exit
      _
    %3222 = vsyncpa [#allocation3], 1
    %s3223 = scalar_lea.sflag [#allocation3], 1
    %3224 = vsyncpa %s3223, 1
    %3225 = vsyncpa [#allocation6], 1
    %s3226 = scalar_lea.sflag [#allocation6], 1
    %3227 = vsyncpa %s3226, 1
    %3228 = vsyncpa [#allocation9], 1
    %s3229 = scalar_lea.sflag [#allocation9], 1
    %3230 = vsyncpa %s3229, 1
    %3231 = vsyncpa [#allocation12], 1
    %s3232 = scalar_lea.sflag [#allocation12], 1
    %3233 = vsyncpa %s3232, 1
    %3234 = vsyncpa [#allocation15], 1
    %s3235 = scalar_lea.sflag [#allocation15], 1
    %3236 = vsyncpa %s3235, 1
    %3237 = vsyncpa [#allocation18], 1
    %3238 = vsyncpa [#allocation21], 1
    %3239 = vsyncpa [#allocation24], 1
    %3240 = vsyncpa [#allocation4], 1
    %s3241 = scalar_lea.sflag [#allocation4], 1
    %3242 = vsyncpa %s3241, 1
    %3243 = vsyncpa [#allocation27], 1
    %s3244 = scalar_lea.sflag [#allocation27], 1
    %3245 = vsyncpa %s3244, 1

</llo_original>
